<compile_context>
chip_gen: v7x
topology: tpu7x:2x2x1
jax: 0.10.0
libtpu: 0.0.40
codegen_flags: <defaults>
</compile_context>

<pallas_src>
import numpy as np
import jax
import jax.numpy as jnp
from jax.experimental import pallas as pl
from jax.experimental.pallas import tpu as pltpu

K = 5
STRIDE = 2
PAD = 2


def _ceil_to(v, m):
    return ((v + m - 1) // m) * m


# ----------------------------------------------------------------------------
# Offline weight repacking (numpy, done once).
# ----------------------------------------------------------------------------
def _band_matrix(tap_mats, w_in, w_out, c_in, c_out, cin_pad, cout_pad,
                 transposed):
    """tap_mats[kw]: (c_in, c_out) weight slice for a fixed kh.
    Returns the (cin_pad, cout_pad) banded matrix that maps a flattened input
    row (lane = col*c_in + ci) to a flattened output row (lane = col*c_out+co),
    with horizontal stride / padding folded in."""
    W = np.zeros((cin_pad, cout_pad), np.float32)
    for kw in range(K):
        for j in range(w_out):
            if transposed:
                num = j + PAD - kw
                if num % STRIDE:
                    continue
                v = num // STRIDE
            else:
                v = STRIDE * j + kw - PAD
            if 0 <= v < w_in:
                W[v * c_in:(v + 1) * c_in,
                  j * c_out:(j + 1) * c_out] += tap_mats[kw]
    return W


def _layer_bands(w, b, w_in, transposed):
    """Per-kh banded matrices + lane-padded bias row for one layer."""
    w = np.asarray(w, np.float32)
    b = np.asarray(b, np.float32)
    if transposed:                                   # ConvTranspose2d weights
        c_in, c_out = w.shape[0], w.shape[1]
        w_out = (w_in - 1) * STRIDE - 2 * PAD + K
        taps = [[w[:, :, kh, kw] for kw in range(K)] for kh in range(K)]
    else:                                            # Conv2d weights
        c_out, c_in = w.shape[0], w.shape[1]
        w_out = (w_in + 2 * PAD - K) // STRIDE + 1
        taps = [[w[:, :, kh, kw].T for kw in range(K)] for kh in range(K)]
    cin_pad = _ceil_to(w_in * c_in, 128)
    cout_pad = _ceil_to(w_out * c_out, 128)
    bands = [_band_matrix(taps[kh], w_in, w_out, c_in, c_out,
                          cin_pad, cout_pad, transposed) for kh in range(K)]
    bias = np.zeros((1, cout_pad), np.float32)
    bias[0, :w_out * c_out] = np.tile(b, w_out)
    return bands, bias


def prepare_operands(params):
    bf16 = jnp.bfloat16
    b1, bias1 = _layer_bands(params["w1"], params["b1"], 32, False)
    b2, bias2 = _layer_bands(params["w2"], params["b2"], 16, False)
    b3, bias3 = _layer_bands(params["w3"], params["b3"], 8, True)
    b4, bias4 = _layer_bands(params["w4"], params["b4"], 15, True)
    w1s = np.concatenate(b1, axis=0)                          # (640, 256)
    w2s = np.concatenate(b2, axis=0)                          # (1280, 128)
    w3e = np.concatenate([b3[0], b3[2], b3[4]], axis=0)       # (384, 256)
    w3o = np.concatenate([b3[1], b3[3]], axis=0)              # (256, 256)
    w4e = np.concatenate([b4[0], b4[2], b4[4]], axis=0)       # (768, 128)
    w4o = np.concatenate([b4[1], b4[3]], axis=0)              # (512, 128)
    return (jnp.asarray(w1s, bf16), jnp.asarray(bias1),
            jnp.asarray(w2s, bf16), jnp.asarray(bias2),
            jnp.asarray(w3e, bf16), jnp.asarray(w3o, bf16), jnp.asarray(bias3),
            jnp.asarray(w4e, bf16), jnp.asarray(w4o, bf16), jnp.asarray(bias4))


# ----------------------------------------------------------------------------
# Fused 4-layer kernel (per batch element).
# ----------------------------------------------------------------------------
def _fused_kernel(x_ref,
                  w1_ref, b1_ref,
                  w2_ref, b2_ref,
                  w3e_ref, w3o_ref, b3_ref,
                  w4e_ref, w4o_ref, b4_ref,
                  o_ref,
                  s1, s2, s3):
    f32 = jnp.float32
    bf16 = jnp.bfloat16

    def mm(pieces, w_ref):
        t = jnp.concatenate(pieces, axis=1)
        return jnp.dot(t.astype(bf16), w_ref[...], preferred_element_type=f32)

    def sl(ref, start, size):
        return ref[pl.ds(start, size), :]

    # Zero the padded scratches every step (cheap; keeps the pad rows valid on
    # every core even when the "parallel" batch axis is split across cores).
    s1[...] = jnp.zeros_like(s1)
    s2[...] = jnp.zeros_like(s2)
    s3[...] = jnp.zeros_like(s3)

    x = x_ref  # (40, 128): 4 row-phase blocks of the padded input, 1 zero row
               # above and below each block.

    # ---- layer 1: Conv2d(3->10) s2 p2 ; -0.5 ; relu -------------------------
    # even output rows 0,2,...,14   (taps kh = 0..4)
    e1 = mm([sl(x, 20, 8), sl(x, 30, 8), sl(x, 1, 8), sl(x, 11, 8),
             sl(x, 21, 8)], w1_ref)
    # odd output rows 1,3,...,15
    o1 = mm([sl(x, 1, 8), sl(x, 11, 8), sl(x, 21, 8), sl(x, 31, 8),
             sl(x, 2, 8)], w1_ref)
    e1 = jnp.maximum(e1 + b1_ref[...] - 0.5, 0.0)
    o1 = jnp.maximum(o1 + b1_ref[...] - 0.5, 0.0)
    s1[pl.ds(1, 8), :] = e1          # parity-split layout: even rows ...
    s1[pl.ds(11, 8), :] = o1         # ... then odd rows

    # ---- layer 2: Conv2d(10->16) s2 p2 ; -1.7 ; relu ------------------------
    a2 = mm([sl(s1, 0, 8), sl(s1, 10, 8), sl(s1, 1, 8), sl(s1, 11, 8),
             sl(s1, 2, 8)], w2_ref)
    a2 = jnp.maximum(a2 + b2_ref[...] - 1.7, 0.0)
    s2[pl.ds(1, 8), :] = a2          # natural row order, 1 zero row each side

    # ---- layer 3: ConvTranspose2d(16->10) s2 p2 ; -2.2 ; relu ; tanh --------
    e3 = mm([sl(s2, 2, 8), sl(s2, 1, 8), sl(s2, 0, 8)], w3e_ref)  # rows 0,2,..14
    o3 = mm([sl(s2, 2, 7), sl(s2, 1, 7)], w3o_ref)                # rows 1,3,..13
    e3 = jnp.tanh(jnp.maximum(e3 + b3_ref[...] - 2.2, 0.0))
    o3 = jnp.tanh(jnp.maximum(o3 + b3_ref[...] - 2.2, 0.0))
    s3[pl.ds(0, 8), :] = e3          # parity-split layout again
    s3[pl.ds(9, 7), :] = o3

    # ---- layer 4: ConvTranspose2d(10->3) s2 p2 ; -0.4 ; relu ----------------
    y0 = mm([sl(s3, 9, 8), sl(s3, 0, 8), sl(s3, 8, 8)], w4e_ref)  # rows 0,4,..28
    y1 = mm([sl(s3, 9, 7), sl(s3, 0, 7)], w4o_ref)                # rows 1,5,..25
    y2 = mm([sl(s3, 1, 7), sl(s3, 9, 7), sl(s3, 0, 7)], w4e_ref)  # rows 2,6,..26
    y3 = mm([sl(s3, 1, 7), sl(s3, 9, 7)], w4o_ref)                # rows 3,7,..27
    bias4 = b4_ref[...]
    o_ref[pl.ds(0, 8), :] = jnp.maximum(y0 + bias4 - 0.4, 0.0)
    o_ref[pl.ds(8, 7), :] = jnp.maximum(y1 + bias4 - 0.4, 0.0)
    o_ref[pl.ds(15, 7), :] = jnp.maximum(y2 + bias4 - 0.4, 0.0)
    o_ref[pl.ds(22, 7), :] = jnp.maximum(y3 + bias4 - 0.4, 0.0)


# Kernel emits output rows in phase order [0,4,..28 | 1,5,..25 | 2,..26 | 3..27]
_ROW_PERM = np.array([i // 4 + (0, 8, 15, 22)[i % 4] for i in range(29)],
                     np.int32)


def _preprocess(x_nchw):
    """(N,3,32,32) -> (N,40,128): mod-4 row-phase blocks of the (H, W*C)-flat
    image, each block wrapped with one zero row above and below, lanes->128."""
    n = x_nchw.shape[0]
    xh = jnp.transpose(x_nchw, (0, 2, 3, 1)).reshape(n, 32, 96)
    xh = jnp.pad(xh, ((0, 0), (0, 0), (0, 32)))
    blocks = [jnp.pad(xh[:, ph::4, :], ((0, 0), (1, 1), (0, 0)))
              for ph in range(4)]
    return jnp.concatenate(blocks, axis=1).astype(jnp.float32)


def model_forward(x_nchw, operands):
    n = x_nchw.shape[0]
    xk = _preprocess(x_nchw)

    in_specs = [pl.BlockSpec((None, 40, 128), lambda i: (i, 0, 0))]
    # Weights/biases: constant index_map -> fetched once, VMEM-resident.
    in_specs += [pl.BlockSpec(a.shape, lambda i: (0, 0)) for a in operands]

    out = pl.pallas_call(
        _fused_kernel,
        out_shape=jax.ShapeDtypeStruct((n, 29, 128), jnp.float32),
        grid=(n,),
        in_specs=in_specs,
        out_specs=pl.BlockSpec((None, 29, 128), lambda i: (i, 0, 0)),
        scratch_shapes=[pltpu.VMEM((24, 256), jnp.float32),   # L1 out (padded)
                        pltpu.VMEM((16, 128), jnp.float32),   # L2 out (padded)
                        pltpu.VMEM((24, 256), jnp.float32)],  # L3 out (padded)
        compiler_params=pltpu.CompilerParams(
            dimension_semantics=("parallel",)),
    )(xk, *operands)

    out = out[:, _ROW_PERM, :87]                 # undo phase ordering, un-pad
    out = out.reshape(n, 29, 29, 3)
    return jnp.transpose(out, (0, 3, 1, 2))


# ----------------------------------------------------------------------------
# Pure-JAX f32 reference (exact PyTorch semantics) for validation.
# ----------------------------------------------------------------------------
def _conv2d_ref(x_hwc, w, b):
    h, wd, _ = x_hwc.shape
    c_out = w.shape[0]
    h_o = (h + 2 * PAD - K) // STRIDE + 1
    w_o = (wd + 2 * PAD - K) // STRIDE + 1
    xp = jnp.pad(x_hwc, ((PAD, PAD), (PAD, PAD), (0, 0)))
    out = jnp.zeros((h_o, w_o, c_out), jnp.float32)
    for kh in range(K):
        for kw in range(K):
            xs = xp[kh:kh + STRIDE * h_o:STRIDE,
                    kw:kw + STRIDE * w_o:STRIDE, :]
            out = out + jnp.einsum("ijc,oc->ijo", xs, w[:, :, kh, kw])
    return out + b


def _conv_transpose2d_ref(x_hwc, w, b):
    h, wd, _ = x_hwc.shape
    c_out = w.shape[1]
    h_e = (h - 1) * STRIDE + K
    w_e = (wd - 1) * STRIDE + K
    out = jnp.zeros((h_e, w_e, c_out), jnp.float32)
    for kh in range(K):
        for kw in range(K):
            contrib = jnp.einsum("ijc,co->ijo", x_hwc, w[:, :, kh, kw])
            out = out.at[kh:kh + STRIDE * h:STRIDE,
                         kw:kw + STRIDE * wd:STRIDE, :].add(contrib)
    return (out + b)[PAD:h_e - PAD, PAD:w_e - PAD, :]


def model_forward_ref(x_nchw, params):
    def single(img):
        x = jnp.transpose(img, (1, 2, 0)).astype(jnp.float32)
        h = jnp.maximum(_conv2d_ref(x, params["w1"], params["b1"]) - 0.5, 0.0)
        h = jnp.maximum(_conv2d_ref(h, params["w2"], params["b2"]) - 1.7, 0.0)
        h = jnp.tanh(jnp.maximum(
            _conv_transpose2d_ref(h, params["w3"], params["b3"]) - 2.2, 0.0))
        h = jnp.maximum(
            _conv_transpose2d_ref(h, params["w4"], params["b4"]) - 0.4, 0.0)
        return jnp.transpose(h, (2, 0, 1))
    return jax.vmap(single)(x_nchw)


# ----------------------------------------------------------------------------
# Parameter init.  Bias ranges roughly cancel the fixed subtractions so the
# activations (and hence the numerical check) are non-degenerate.
# ----------------------------------------------------------------------------
def init_params(key):
    ks = jax.random.split(key, 8)

    def uni(k, shape, lo, hi):
        return jax.random.uniform(k, shape, jnp.float32, lo, hi)

    return {
        "w1": uni(ks[0], (10, 3, K, K), -0.18, 0.18),   # Conv2d(3, 10)
        "b1": uni(ks[1], (10,), 0.40, 0.60),
        "w2": uni(ks[2], (16, 10, K, K), -0.18, 0.18),  # Conv2d(10, 16) (fixed)
        "b2": uni(ks[3], (16,), 1.60, 1.80),
        "w3": uni(ks[4], (16, 10, K, K), -0.18, 0.18),  # ConvT(16, 10)  (fixed)
        "b3": uni(ks[5], (10,), 2.10, 2.30),
        "w4": uni(ks[6], (10, 3, K, K), -0.18, 0.18),   # ConvT(10, 3)
        "b4": uni(ks[7], (3,), 0.35, 0.55),
    }


if __name__ == "__main__":
    key = jax.random.PRNGKey(0)
    kx, kp = jax.random.split(key)
    x = jax.random.normal(kx, (2, 3, 32, 32), jnp.float32)
    params = init_params(kp)

    operands = prepare_operands(params)          # offline repack (once)
    fwd = jax.jit(model_forward)
    out = fwd(x, operands)
    jax.block_until_ready(out)

    ref = model_forward_ref(x, params)
    assert out.shape == (2, 3, 29, 29), out.shape
    err = float(jnp.max(jnp.abs(out - ref)))
    scale = float(jnp.max(jnp.abs(ref)))
    assert scale > 0.1, f"degenerate reference (max |ref| = {scale})"
    # bf16 weights/activations on the MXU with f32 accumulation: expect a few
    # percent of the output scale end-to-end.
    tol = max(0.02, 0.03 * scale)
    assert err < tol, f"max |pallas - ref| = {err} (tol {tol}, scale {scale})"
    print("KERNEL_OK")
</pallas_src>

<mosaic_0001>
module attributes {stable_mosaic.version = 11 : i64} {
  func.func @_fused_kernel(%arg0: i32, %arg1: memref<1x40x128xf32, #tpu.memory_space<vmem>>, %arg2: memref<640x256xbf16, #tpu.memory_space<vmem>>, %arg3: memref<1x256xf32, #tpu.memory_space<vmem>>, %arg4: memref<1280x128xbf16, #tpu.memory_space<vmem>>, %arg5: memref<1x128xf32, #tpu.memory_space<vmem>>, %arg6: memref<384x256xbf16, #tpu.memory_space<vmem>>, %arg7: memref<256x256xbf16, #tpu.memory_space<vmem>>, %arg8: memref<1x256xf32, #tpu.memory_space<vmem>>, %arg9: memref<768x128xbf16, #tpu.memory_space<vmem>>, %arg10: memref<512x128xbf16, #tpu.memory_space<vmem>>, %arg11: memref<1x128xf32, #tpu.memory_space<vmem>>, %arg12: memref<1x29x128xf32, #tpu.memory_space<vmem>>, %arg13: memref<24x256xf32, #tpu.memory_space<vmem>>, %arg14: memref<16x128xf32, #tpu.memory_space<vmem>>, %arg15: memref<24x256xf32, #tpu.memory_space<vmem>>) attributes {dimension_semantics = [#tpu.dimension_semantics<parallel>], iteration_bounds = array<i64: 2>, scalar_prefetch = 0 : i64, scratch_operands = 3 : i64, tpu.core_type = #tpu.core_type<tc>, window_params = [{transform_indices = @transform_0, window_bounds = array<i64: 1, 40, 128>}, {pipeline_mode = #tpu.pipeline_mode<synchronous>, transform_indices = @transform_1, window_bounds = array<i64: 640, 256>}, {pipeline_mode = #tpu.pipeline_mode<synchronous>, transform_indices = @transform_2, window_bounds = array<i64: 1, 256>}, {pipeline_mode = #tpu.pipeline_mode<synchronous>, transform_indices = @transform_3, window_bounds = array<i64: 1280, 128>}, {pipeline_mode = #tpu.pipeline_mode<synchronous>, transform_indices = @transform_4, window_bounds = array<i64: 1, 128>}, {pipeline_mode = #tpu.pipeline_mode<synchronous>, transform_indices = @transform_5, window_bounds = array<i64: 384, 256>}, {pipeline_mode = #tpu.pipeline_mode<synchronous>, transform_indices = @transform_6, window_bounds = array<i64: 256, 256>}, {pipeline_mode = #tpu.pipeline_mode<synchronous>, transform_indices = @transform_7, window_bounds = array<i64: 1, 256>}, {pipeline_mode = #tpu.pipeline_mode<synchronous>, transform_indices = @transform_8, window_bounds = array<i64: 768, 128>}, {pipeline_mode = #tpu.pipeline_mode<synchronous>, transform_indices = @transform_9, window_bounds = array<i64: 512, 128>}, {pipeline_mode = #tpu.pipeline_mode<synchronous>, transform_indices = @transform_10, window_bounds = array<i64: 1, 128>}, {transform_indices = @transform_11, window_bounds = array<i64: 1, 29, 128>}]} {
    %cst = arith.constant 0.000000e+00 : f32
    %0 = vector.broadcast %cst : f32 to vector<24x256xf32>
    %c0 = arith.constant 0 : index
    %c0_0 = arith.constant 0 : index
    %1 = vector.load %arg13[%c0, %c0_0] : memref<24x256xf32, #tpu.memory_space<vmem>>, vector<24x256xf32>
    tpu.vector_store %arg13[%c0, %c0_0], %0 {strides = array<i32>} : memref<24x256xf32, #tpu.memory_space<vmem>>, vector<24x256xf32>,
    %cst_1 = arith.constant 0.000000e+00 : f32
    %2 = vector.broadcast %cst_1 : f32 to vector<16x128xf32>
    %c0_2 = arith.constant 0 : index
    %c0_3 = arith.constant 0 : index
    %3 = vector.load %arg14[%c0_2, %c0_3] : memref<16x128xf32, #tpu.memory_space<vmem>>, vector<16x128xf32>
    tpu.vector_store %arg14[%c0_2, %c0_3], %2 {strides = array<i32>} : memref<16x128xf32, #tpu.memory_space<vmem>>, vector<16x128xf32>,
    %cst_4 = arith.constant 0.000000e+00 : f32
    %4 = vector.broadcast %cst_4 : f32 to vector<24x256xf32>
    %c0_5 = arith.constant 0 : index
    %c0_6 = arith.constant 0 : index
    %5 = vector.load %arg15[%c0_5, %c0_6] : memref<24x256xf32, #tpu.memory_space<vmem>>, vector<24x256xf32>
    tpu.vector_store %arg15[%c0_5, %c0_6], %4 {strides = array<i32>} : memref<24x256xf32, #tpu.memory_space<vmem>>, vector<24x256xf32>,
    %c0_7 = arith.constant 0 : index
    %c20 = arith.constant 20 : index
    %c0_8 = arith.constant 0 : index
    %6 = vector.load %arg1[%c0_7, %c20, %c0_8] : memref<1x40x128xf32, #tpu.memory_space<vmem>>, vector<1x8x128xf32>
    %7 = vector.shape_cast %6 : vector<1x8x128xf32> to vector<8x128xf32>
    %c0_9 = arith.constant 0 : index
    %c30 = arith.constant 30 : index
    %c0_10 = arith.constant 0 : index
    %8 = vector.load %arg1[%c0_9, %c30, %c0_10] : memref<1x40x128xf32, #tpu.memory_space<vmem>>, vector<1x8x128xf32>
    %9 = vector.shape_cast %8 : vector<1x8x128xf32> to vector<8x128xf32>
    %c0_11 = arith.constant 0 : index
    %c1 = arith.constant 1 : index
    %c0_12 = arith.constant 0 : index
    %10 = vector.load %arg1[%c0_11, %c1, %c0_12] : memref<1x40x128xf32, #tpu.memory_space<vmem>>, vector<1x8x128xf32>
    %11 = vector.shape_cast %10 : vector<1x8x128xf32> to vector<8x128xf32>
    %c0_13 = arith.constant 0 : index
    %c11 = arith.constant 11 : index
    %c0_14 = arith.constant 0 : index
    %12 = vector.load %arg1[%c0_13, %c11, %c0_14] : memref<1x40x128xf32, #tpu.memory_space<vmem>>, vector<1x8x128xf32>
    %13 = vector.shape_cast %12 : vector<1x8x128xf32> to vector<8x128xf32>
    %c0_15 = arith.constant 0 : index
    %c21 = arith.constant 21 : index
    %c0_16 = arith.constant 0 : index
    %14 = vector.load %arg1[%c0_15, %c21, %c0_16] : memref<1x40x128xf32, #tpu.memory_space<vmem>>, vector<1x8x128xf32>
    %15 = vector.shape_cast %14 : vector<1x8x128xf32> to vector<8x128xf32>
    %16 = tpu.concatenate %7, %9, %11, %13, %15 in 1 : vector<8x128xf32>, vector<8x128xf32>, vector<8x128xf32>, vector<8x128xf32>, vector<8x128xf32> -> vector<8x640xf32>
    %17 = arith.truncf %16 : vector<8x640xf32> to vector<8x640xbf16>
    %c0_17 = arith.constant 0 : index
    %c0_18 = arith.constant 0 : index
    %18 = vector.load %arg2[%c0_17, %c0_18] : memref<640x256xbf16, #tpu.memory_space<vmem>>, vector<640x256xbf16>
    %cst_19 = arith.constant dense<0.000000e+00> : vector<8x256xf32>
    %19 = tpu.matmul %17, %18, %cst_19 {dimension_numbers = #tpu.dot_dimension_numbers<[1], [0], [0], [1], [0, 0, 1, 1], [], []>} : vector<8x640xbf16>, vector<640x256xbf16>, vector<8x256xf32> -> vector<8x256xf32>
    %c0_20 = arith.constant 0 : index
    %c1_21 = arith.constant 1 : index
    %c0_22 = arith.constant 0 : index
    %20 = vector.load %arg1[%c0_20, %c1_21, %c0_22] : memref<1x40x128xf32, #tpu.memory_space<vmem>>, vector<1x8x128xf32>
    %21 = vector.shape_cast %20 : vector<1x8x128xf32> to vector<8x128xf32>
    %c0_23 = arith.constant 0 : index
    %c11_24 = arith.constant 11 : index
    %c0_25 = arith.constant 0 : index
    %22 = vector.load %arg1[%c0_23, %c11_24, %c0_25] : memref<1x40x128xf32, #tpu.memory_space<vmem>>, vector<1x8x128xf32>
    %23 = vector.shape_cast %22 : vector<1x8x128xf32> to vector<8x128xf32>
    %c0_26 = arith.constant 0 : index
    %c21_27 = arith.constant 21 : index
    %c0_28 = arith.constant 0 : index
    %24 = vector.load %arg1[%c0_26, %c21_27, %c0_28] : memref<1x40x128xf32, #tpu.memory_space<vmem>>, vector<1x8x128xf32>
    %25 = vector.shape_cast %24 : vector<1x8x128xf32> to vector<8x128xf32>
    %c0_29 = arith.constant 0 : index
    %c31 = arith.constant 31 : index
    %c0_30 = arith.constant 0 : index
    %26 = vector.load %arg1[%c0_29, %c31, %c0_30] : memref<1x40x128xf32, #tpu.memory_space<vmem>>, vector<1x8x128xf32>
    %27 = vector.shape_cast %26 : vector<1x8x128xf32> to vector<8x128xf32>
    %c0_31 = arith.constant 0 : index
    %c2 = arith.constant 2 : index
    %c0_32 = arith.constant 0 : index
    %28 = vector.load %arg1[%c0_31, %c2, %c0_32] : memref<1x40x128xf32, #tpu.memory_space<vmem>>, vector<1x8x128xf32>
    %29 = vector.shape_cast %28 : vector<1x8x128xf32> to vector<8x128xf32>
    %30 = tpu.concatenate %21, %23, %25, %27, %29 in 1 : vector<8x128xf32>, vector<8x128xf32>, vector<8x128xf32>, vector<8x128xf32>, vector<8x128xf32> -> vector<8x640xf32>
    %31 = arith.truncf %30 : vector<8x640xf32> to vector<8x640xbf16>
    %c0_33 = arith.constant 0 : index
    %c0_34 = arith.constant 0 : index
    %32 = vector.load %arg2[%c0_33, %c0_34] : memref<640x256xbf16, #tpu.memory_space<vmem>>, vector<640x256xbf16>
    %cst_35 = arith.constant dense<0.000000e+00> : vector<8x256xf32>
    %33 = tpu.matmul %31, %32, %cst_35 {dimension_numbers = #tpu.dot_dimension_numbers<[1], [0], [0], [1], [0, 0, 1, 1], [], []>} : vector<8x640xbf16>, vector<640x256xbf16>, vector<8x256xf32> -> vector<8x256xf32>
    %c0_36 = arith.constant 0 : index
    %c0_37 = arith.constant 0 : index
    %34 = vector.load %arg3[%c0_36, %c0_37] : memref<1x256xf32, #tpu.memory_space<vmem>>, vector<1x256xf32>
    %35 = vector.broadcast %34 : vector<1x256xf32> to vector<8x256xf32>
    %36 = arith.addf %19, %35 : vector<8x256xf32>
    %cst_38 = arith.constant 5.000000e-01 : f32
    %37 = vector.broadcast %cst_38 : f32 to vector<8x256xf32>
    %38 = arith.subf %36, %37 : vector<8x256xf32>
    %cst_39 = arith.constant 0.000000e+00 : f32
    %39 = vector.broadcast %cst_39 : f32 to vector<8x256xf32>
    %40 = arith.maximumf %38, %39 : vector<8x256xf32>
    %c0_40 = arith.constant 0 : index
    %c0_41 = arith.constant 0 : index
    %41 = vector.load %arg3[%c0_40, %c0_41] : memref<1x256xf32, #tpu.memory_space<vmem>>, vector<1x256xf32>
    %42 = vector.broadcast %41 : vector<1x256xf32> to vector<8x256xf32>
    %43 = arith.addf %33, %42 : vector<8x256xf32>
    %cst_42 = arith.constant 5.000000e-01 : f32
    %44 = vector.broadcast %cst_42 : f32 to vector<8x256xf32>
    %45 = arith.subf %43, %44 : vector<8x256xf32>
    %cst_43 = arith.constant 0.000000e+00 : f32
    %46 = vector.broadcast %cst_43 : f32 to vector<8x256xf32>
    %47 = arith.maximumf %45, %46 : vector<8x256xf32>
    %c1_44 = arith.constant 1 : index
    %c0_45 = arith.constant 0 : index
    %48 = vector.load %arg13[%c1_44, %c0_45] : memref<24x256xf32, #tpu.memory_space<vmem>>, vector<8x256xf32>
    tpu.vector_store %arg13[%c1_44, %c0_45], %40 {strides = array<i32>} : memref<24x256xf32, #tpu.memory_space<vmem>>, vector<8x256xf32>,
    %c11_46 = arith.constant 11 : index
    %c0_47 = arith.constant 0 : index
    %49 = vector.load %arg13[%c11_46, %c0_47] : memref<24x256xf32, #tpu.memory_space<vmem>>, vector<8x256xf32>
    tpu.vector_store %arg13[%c11_46, %c0_47], %47 {strides = array<i32>} : memref<24x256xf32, #tpu.memory_space<vmem>>, vector<8x256xf32>,
    %c0_48 = arith.constant 0 : index
    %c0_49 = arith.constant 0 : index
    %50 = vector.load %arg13[%c0_48, %c0_49] : memref<24x256xf32, #tpu.memory_space<vmem>>, vector<8x256xf32>
    %c10 = arith.constant 10 : index
    %c0_50 = arith.constant 0 : index
    %51 = vector.load %arg13[%c10, %c0_50] : memref<24x256xf32, #tpu.memory_space<vmem>>, vector<8x256xf32>
    %c1_51 = arith.constant 1 : index
    %c0_52 = arith.constant 0 : index
    %52 = vector.load %arg13[%c1_51, %c0_52] : memref<24x256xf32, #tpu.memory_space<vmem>>, vector<8x256xf32>
    %c11_53 = arith.constant 11 : index
    %c0_54 = arith.constant 0 : index
    %53 = vector.load %arg13[%c11_53, %c0_54] : memref<24x256xf32, #tpu.memory_space<vmem>>, vector<8x256xf32>
    %c2_55 = arith.constant 2 : index
    %c0_56 = arith.constant 0 : index
    %54 = vector.load %arg13[%c2_55, %c0_56] : memref<24x256xf32, #tpu.memory_space<vmem>>, vector<8x256xf32>
    %55 = tpu.concatenate %50, %51, %52, %53, %54 in 1 : vector<8x256xf32>, vector<8x256xf32>, vector<8x256xf32>, vector<8x256xf32>, vector<8x256xf32> -> vector<8x1280xf32>
    %56 = arith.truncf %55 : vector<8x1280xf32> to vector<8x1280xbf16>
    %c0_57 = arith.constant 0 : index
    %c0_58 = arith.constant 0 : index
    %57 = vector.load %arg4[%c0_57, %c0_58] : memref<1280x128xbf16, #tpu.memory_space<vmem>>, vector<1280x128xbf16>
    %cst_59 = arith.constant dense<0.000000e+00> : vector<8x128xf32>
    %58 = tpu.matmul %56, %57, %cst_59 {dimension_numbers = #tpu.dot_dimension_numbers<[1], [0], [0], [1], [0, 0, 1, 1], [], []>} : vector<8x1280xbf16>, vector<1280x128xbf16>, vector<8x128xf32> -> vector<8x128xf32>
    %c0_60 = arith.constant 0 : index
    %c0_61 = arith.constant 0 : index
    %59 = vector.load %arg5[%c0_60, %c0_61] : memref<1x128xf32, #tpu.memory_space<vmem>>, vector<1x128xf32>
    %60 = vector.broadcast %59 : vector<1x128xf32> to vector<8x128xf32>
    %61 = arith.addf %58, %60 : vector<8x128xf32>
    %cst_62 = arith.constant 1.700000e+00 : f32
    %62 = vector.broadcast %cst_62 : f32 to vector<8x128xf32>
    %63 = arith.subf %61, %62 : vector<8x128xf32>
    %cst_63 = arith.constant 0.000000e+00 : f32
    %64 = vector.broadcast %cst_63 : f32 to vector<8x128xf32>
    %65 = arith.maximumf %63, %64 : vector<8x128xf32>
    %c1_64 = arith.constant 1 : index
    %c0_65 = arith.constant 0 : index
    %66 = vector.load %arg14[%c1_64, %c0_65] : memref<16x128xf32, #tpu.memory_space<vmem>>, vector<8x128xf32>
    tpu.vector_store %arg14[%c1_64, %c0_65], %65 {strides = array<i32>} : memref<16x128xf32, #tpu.memory_space<vmem>>, vector<8x128xf32>,
    %c2_66 = arith.constant 2 : index
    %c0_67 = arith.constant 0 : index
    %67 = vector.load %arg14[%c2_66, %c0_67] : memref<16x128xf32, #tpu.memory_space<vmem>>, vector<8x128xf32>
    %c1_68 = arith.constant 1 : index
    %c0_69 = arith.constant 0 : index
    %68 = vector.load %arg14[%c1_68, %c0_69] : memref<16x128xf32, #tpu.memory_space<vmem>>, vector<8x128xf32>
    %c0_70 = arith.constant 0 : index
    %c0_71 = arith.constant 0 : index
    %69 = vector.load %arg14[%c0_70, %c0_71] : memref<16x128xf32, #tpu.memory_space<vmem>>, vector<8x128xf32>
    %70 = tpu.concatenate %67, %68, %69 in 1 : vector<8x128xf32>, vector<8x128xf32>, vector<8x128xf32> -> vector<8x384xf32>
    %71 = arith.truncf %70 : vector<8x384xf32> to vector<8x384xbf16>
    %c0_72 = arith.constant 0 : index
    %c0_73 = arith.constant 0 : index
    %72 = vector.load %arg6[%c0_72, %c0_73] : memref<384x256xbf16, #tpu.memory_space<vmem>>, vector<384x256xbf16>
    %cst_74 = arith.constant dense<0.000000e+00> : vector<8x256xf32>
    %73 = tpu.matmul %71, %72, %cst_74 {dimension_numbers = #tpu.dot_dimension_numbers<[1], [0], [0], [1], [0, 0, 1, 1], [], []>} : vector<8x384xbf16>, vector<384x256xbf16>, vector<8x256xf32> -> vector<8x256xf32>
    %c2_75 = arith.constant 2 : index
    %c0_76 = arith.constant 0 : index
    %74 = vector.load %arg14[%c2_75, %c0_76] : memref<16x128xf32, #tpu.memory_space<vmem>>, vector<7x128xf32>
    %c1_77 = arith.constant 1 : index
    %c0_78 = arith.constant 0 : index
    %75 = vector.load %arg14[%c1_77, %c0_78] : memref<16x128xf32, #tpu.memory_space<vmem>>, vector<7x128xf32>
    %76 = tpu.concatenate %74, %75 in 1 : vector<7x128xf32>, vector<7x128xf32> -> vector<7x256xf32>
    %77 = arith.truncf %76 : vector<7x256xf32> to vector<7x256xbf16>
    %c0_79 = arith.constant 0 : index
    %c0_80 = arith.constant 0 : index
    %78 = vector.load %arg7[%c0_79, %c0_80] : memref<256x256xbf16, #tpu.memory_space<vmem>>, vector<256x256xbf16>
    %cst_81 = arith.constant dense<0.000000e+00> : vector<7x256xf32>
    %79 = tpu.matmul %77, %78, %cst_81 {dimension_numbers = #tpu.dot_dimension_numbers<[1], [0], [0], [1], [0, 0, 1, 1], [], []>} : vector<7x256xbf16>, vector<256x256xbf16>, vector<7x256xf32> -> vector<7x256xf32>
    %c0_82 = arith.constant 0 : index
    %c0_83 = arith.constant 0 : index
    %80 = vector.load %arg8[%c0_82, %c0_83] : memref<1x256xf32, #tpu.memory_space<vmem>>, vector<1x256xf32>
    %81 = vector.broadcast %80 : vector<1x256xf32> to vector<8x256xf32>
    %82 = arith.addf %73, %81 : vector<8x256xf32>
    %cst_84 = arith.constant 2.200000e+00 : f32
    %83 = vector.broadcast %cst_84 : f32 to vector<8x256xf32>
    %84 = arith.subf %82, %83 : vector<8x256xf32>
    %cst_85 = arith.constant 0.000000e+00 : f32
    %85 = vector.broadcast %cst_85 : f32 to vector<8x256xf32>
    %86 = arith.maximumf %84, %85 : vector<8x256xf32>
    %87 = math.tanh %86 : vector<8x256xf32>
    %c0_86 = arith.constant 0 : index
    %c0_87 = arith.constant 0 : index
    %88 = vector.load %arg8[%c0_86, %c0_87] : memref<1x256xf32, #tpu.memory_space<vmem>>, vector<1x256xf32>
    %89 = vector.broadcast %88 : vector<1x256xf32> to vector<7x256xf32>
    %90 = arith.addf %79, %89 : vector<7x256xf32>
    %cst_88 = arith.constant 2.200000e+00 : f32
    %91 = vector.broadcast %cst_88 : f32 to vector<7x256xf32>
    %92 = arith.subf %90, %91 : vector<7x256xf32>
    %cst_89 = arith.constant 0.000000e+00 : f32
    %93 = vector.broadcast %cst_89 : f32 to vector<7x256xf32>
    %94 = arith.maximumf %92, %93 : vector<7x256xf32>
    %95 = math.tanh %94 : vector<7x256xf32>
    %c0_90 = arith.constant 0 : index
    %c0_91 = arith.constant 0 : index
    %96 = vector.load %arg15[%c0_90, %c0_91] : memref<24x256xf32, #tpu.memory_space<vmem>>, vector<8x256xf32>
    tpu.vector_store %arg15[%c0_90, %c0_91], %87 {strides = array<i32>} : memref<24x256xf32, #tpu.memory_space<vmem>>, vector<8x256xf32>,
    %c9 = arith.constant 9 : index
    %c0_92 = arith.constant 0 : index
    %97 = vector.load %arg15[%c9, %c0_92] : memref<24x256xf32, #tpu.memory_space<vmem>>, vector<7x256xf32>
    tpu.vector_store %arg15[%c9, %c0_92], %95 {strides = array<i32>} : memref<24x256xf32, #tpu.memory_space<vmem>>, vector<7x256xf32>,
    %c9_93 = arith.constant 9 : index
    %c0_94 = arith.constant 0 : index
    %98 = vector.load %arg15[%c9_93, %c0_94] : memref<24x256xf32, #tpu.memory_space<vmem>>, vector<8x256xf32>
    %c0_95 = arith.constant 0 : index
    %c0_96 = arith.constant 0 : index
    %99 = vector.load %arg15[%c0_95, %c0_96] : memref<24x256xf32, #tpu.memory_space<vmem>>, vector<8x256xf32>
    %c8 = arith.constant 8 : index
    %c0_97 = arith.constant 0 : index
    %100 = vector.load %arg15[%c8, %c0_97] : memref<24x256xf32, #tpu.memory_space<vmem>>, vector<8x256xf32>
    %101 = tpu.concatenate %98, %99, %100 in 1 : vector<8x256xf32>, vector<8x256xf32>, vector<8x256xf32> -> vector<8x768xf32>
    %102 = arith.truncf %101 : vector<8x768xf32> to vector<8x768xbf16>
    %c0_98 = arith.constant 0 : index
    %c0_99 = arith.constant 0 : index
    %103 = vector.load %arg9[%c0_98, %c0_99] : memref<768x128xbf16, #tpu.memory_space<vmem>>, vector<768x128xbf16>
    %cst_100 = arith.constant dense<0.000000e+00> : vector<8x128xf32>
    %104 = tpu.matmul %102, %103, %cst_100 {dimension_numbers = #tpu.dot_dimension_numbers<[1], [0], [0], [1], [0, 0, 1, 1], [], []>} : vector<8x768xbf16>, vector<768x128xbf16>, vector<8x128xf32> -> vector<8x128xf32>
    %c9_101 = arith.constant 9 : index
    %c0_102 = arith.constant 0 : index
    %105 = vector.load %arg15[%c9_101, %c0_102] : memref<24x256xf32, #tpu.memory_space<vmem>>, vector<7x256xf32>
    %c0_103 = arith.constant 0 : index
    %c0_104 = arith.constant 0 : index
    %106 = vector.load %arg15[%c0_103, %c0_104] : memref<24x256xf32, #tpu.memory_space<vmem>>, vector<7x256xf32>
    %107 = tpu.concatenate %105, %106 in 1 : vector<7x256xf32>, vector<7x256xf32> -> vector<7x512xf32>
    %108 = arith.truncf %107 : vector<7x512xf32> to vector<7x512xbf16>
    %c0_105 = arith.constant 0 : index
    %c0_106 = arith.constant 0 : index
    %109 = vector.load %arg10[%c0_105, %c0_106] : memref<512x128xbf16, #tpu.memory_space<vmem>>, vector<512x128xbf16>
    %cst_107 = arith.constant dense<0.000000e+00> : vector<7x128xf32>
    %110 = tpu.matmul %108, %109, %cst_107 {dimension_numbers = #tpu.dot_dimension_numbers<[1], [0], [0], [1], [0, 0, 1, 1], [], []>} : vector<7x512xbf16>, vector<512x128xbf16>, vector<7x128xf32> -> vector<7x128xf32>
    %c1_108 = arith.constant 1 : index
    %c0_109 = arith.constant 0 : index
    %111 = vector.load %arg15[%c1_108, %c0_109] : memref<24x256xf32, #tpu.memory_space<vmem>>, vector<7x256xf32>
    %c9_110 = arith.constant 9 : index
    %c0_111 = arith.constant 0 : index
    %112 = vector.load %arg15[%c9_110, %c0_111] : memref<24x256xf32, #tpu.memory_space<vmem>>, vector<7x256xf32>
    %c0_112 = arith.constant 0 : index
    %c0_113 = arith.constant 0 : index
    %113 = vector.load %arg15[%c0_112, %c0_113] : memref<24x256xf32, #tpu.memory_space<vmem>>, vector<7x256xf32>
    %114 = tpu.concatenate %111, %112, %113 in 1 : vector<7x256xf32>, vector<7x256xf32>, vector<7x256xf32> -> vector<7x768xf32>
    %115 = arith.truncf %114 : vector<7x768xf32> to vector<7x768xbf16>
    %c0_114 = arith.constant 0 : index
    %c0_115 = arith.constant 0 : index
    %116 = vector.load %arg9[%c0_114, %c0_115] : memref<768x128xbf16, #tpu.memory_space<vmem>>, vector<768x128xbf16>
    %cst_116 = arith.constant dense<0.000000e+00> : vector<7x128xf32>
    %117 = tpu.matmul %115, %116, %cst_116 {dimension_numbers = #tpu.dot_dimension_numbers<[1], [0], [0], [1], [0, 0, 1, 1], [], []>} : vector<7x768xbf16>, vector<768x128xbf16>, vector<7x128xf32> -> vector<7x128xf32>
    %c1_117 = arith.constant 1 : index
    %c0_118 = arith.constant 0 : index
    %118 = vector.load %arg15[%c1_117, %c0_118] : memref<24x256xf32, #tpu.memory_space<vmem>>, vector<7x256xf32>
    %c9_119 = arith.constant 9 : index
    %c0_120 = arith.constant 0 : index
    %119 = vector.load %arg15[%c9_119, %c0_120] : memref<24x256xf32, #tpu.memory_space<vmem>>, vector<7x256xf32>
    %120 = tpu.concatenate %118, %119 in 1 : vector<7x256xf32>, vector<7x256xf32> -> vector<7x512xf32>
    %121 = arith.truncf %120 : vector<7x512xf32> to vector<7x512xbf16>
    %c0_121 = arith.constant 0 : index
    %c0_122 = arith.constant 0 : index
    %122 = vector.load %arg10[%c0_121, %c0_122] : memref<512x128xbf16, #tpu.memory_space<vmem>>, vector<512x128xbf16>
    %cst_123 = arith.constant dense<0.000000e+00> : vector<7x128xf32>
    %123 = tpu.matmul %121, %122, %cst_123 {dimension_numbers = #tpu.dot_dimension_numbers<[1], [0], [0], [1], [0, 0, 1, 1], [], []>} : vector<7x512xbf16>, vector<512x128xbf16>, vector<7x128xf32> -> vector<7x128xf32>
    %c0_124 = arith.constant 0 : index
    %c0_125 = arith.constant 0 : index
    %124 = vector.load %arg11[%c0_124, %c0_125] : memref<1x128xf32, #tpu.memory_space<vmem>>, vector<1x128xf32>
    %125 = vector.broadcast %124 : vector<1x128xf32> to vector<8x128xf32>
    %126 = arith.addf %104, %125 : vector<8x128xf32>
    %cst_126 = arith.constant 4.000000e-01 : f32
    %127 = vector.broadcast %cst_126 : f32 to vector<8x128xf32>
    %128 = arith.subf %126, %127 : vector<8x128xf32>
    %cst_127 = arith.constant 0.000000e+00 : f32
    %129 = vector.broadcast %cst_127 : f32 to vector<8x128xf32>
    %130 = arith.maximumf %128, %129 : vector<8x128xf32>
    %c0_128 = arith.constant 0 : index
    %c0_129 = arith.constant 0 : index
    %c0_130 = arith.constant 0 : index
    %131 = vector.load %arg12[%c0_128, %c0_129, %c0_130] : memref<1x29x128xf32, #tpu.memory_space<vmem>>, vector<1x8x128xf32>
    %132 = vector.shape_cast %131 : vector<1x8x128xf32> to vector<8x128xf32>
    %133 = vector.shape_cast %130 : vector<8x128xf32> to vector<1x8x128xf32>
    tpu.vector_store %arg12[%c0_128, %c0_129, %c0_130], %133 {strides = array<i32>} : memref<1x29x128xf32, #tpu.memory_space<vmem>>, vector<1x8x128xf32>,
    %134 = vector.broadcast %124 : vector<1x128xf32> to vector<7x128xf32>
    %135 = arith.addf %110, %134 : vector<7x128xf32>
    %cst_131 = arith.constant 4.000000e-01 : f32
    %136 = vector.broadcast %cst_131 : f32 to vector<7x128xf32>
    %137 = arith.subf %135, %136 : vector<7x128xf32>
    %cst_132 = arith.constant 0.000000e+00 : f32
    %138 = vector.broadcast %cst_132 : f32 to vector<7x128xf32>
    %139 = arith.maximumf %137, %138 : vector<7x128xf32>
    %c0_133 = arith.constant 0 : index
    %c8_134 = arith.constant 8 : index
    %c0_135 = arith.constant 0 : index
    %140 = vector.load %arg12[%c0_133, %c8_134, %c0_135] : memref<1x29x128xf32, #tpu.memory_space<vmem>>, vector<1x7x128xf32>
    %141 = vector.shape_cast %140 : vector<1x7x128xf32> to vector<7x128xf32>
    %142 = vector.shape_cast %139 : vector<7x128xf32> to vector<1x7x128xf32>
    tpu.vector_store %arg12[%c0_133, %c8_134, %c0_135], %142 {strides = array<i32>} : memref<1x29x128xf32, #tpu.memory_space<vmem>>, vector<1x7x128xf32>,
    %143 = vector.broadcast %124 : vector<1x128xf32> to vector<7x128xf32>
    %144 = arith.addf %117, %143 : vector<7x128xf32>
    %cst_136 = arith.constant 4.000000e-01 : f32
    %145 = vector.broadcast %cst_136 : f32 to vector<7x128xf32>
    %146 = arith.subf %144, %145 : vector<7x128xf32>
    %cst_137 = arith.constant 0.000000e+00 : f32
    %147 = vector.broadcast %cst_137 : f32 to vector<7x128xf32>
    %148 = arith.maximumf %146, %147 : vector<7x128xf32>
    %c0_138 = arith.constant 0 : index
    %c15 = arith.constant 15 : index
    %c0_139 = arith.constant 0 : index
    %149 = vector.load %arg12[%c0_138, %c15, %c0_139] : memref<1x29x128xf32, #tpu.memory_space<vmem>>, vector<1x7x128xf32>
    %150 = vector.shape_cast %149 : vector<1x7x128xf32> to vector<7x128xf32>
    %151 = vector.shape_cast %148 : vector<7x128xf32> to vector<1x7x128xf32>
    tpu.vector_store %arg12[%c0_138, %c15, %c0_139], %151 {strides = array<i32>} : memref<1x29x128xf32, #tpu.memory_space<vmem>>, vector<1x7x128xf32>,
    %152 = vector.broadcast %124 : vector<1x128xf32> to vector<7x128xf32>
    %153 = arith.addf %123, %152 : vector<7x128xf32>
    %cst_140 = arith.constant 4.000000e-01 : f32
    %154 = vector.broadcast %cst_140 : f32 to vector<7x128xf32>
    %155 = arith.subf %153, %154 : vector<7x128xf32>
    %cst_141 = arith.constant 0.000000e+00 : f32
    %156 = vector.broadcast %cst_141 : f32 to vector<7x128xf32>
    %157 = arith.maximumf %155, %156 : vector<7x128xf32>
    %c0_142 = arith.constant 0 : index
    %c22 = arith.constant 22 : index
    %c0_143 = arith.constant 0 : index
    %158 = vector.load %arg12[%c0_142, %c22, %c0_143] : memref<1x29x128xf32, #tpu.memory_space<vmem>>, vector<1x7x128xf32>
    %159 = vector.shape_cast %158 : vector<1x7x128xf32> to vector<7x128xf32>
    %160 = vector.shape_cast %157 : vector<7x128xf32> to vector<1x7x128xf32>
    tpu.vector_store %arg12[%c0_142, %c22, %c0_143], %160 {strides = array<i32>} : memref<1x29x128xf32, #tpu.memory_space<vmem>>, vector<1x7x128xf32>,
    return
  }
  func.func @transform_0(%arg0: i32) -> (i32, i32, i32) {
    %c0_i32 = arith.constant 0 : i32
    %c0_i32_0 = arith.constant 0 : i32
    %c0_i32_1 = arith.constant 0 : i32
    return %arg0, %c0_i32, %c0_i32_0 : i32, i32, i32
  }
  func.func @transform_1(%arg0: i32) -> (i32, i32) {
    %c0_i32 = arith.constant 0 : i32
    %c0_i32_0 = arith.constant 0 : i32
    %c0_i32_1 = arith.constant 0 : i32
    return %c0_i32, %c0_i32_0 : i32, i32
  }
  func.func @transform_2(%arg0: i32) -> (i32, i32) {
    %c0_i32 = arith.constant 0 : i32
    %c0_i32_0 = arith.constant 0 : i32
    %c0_i32_1 = arith.constant 0 : i32
    return %c0_i32, %c0_i32_0 : i32, i32
  }
  func.func @transform_3(%arg0: i32) -> (i32, i32) {
    %c0_i32 = arith.constant 0 : i32
    %c0_i32_0 = arith.constant 0 : i32
    %c0_i32_1 = arith.constant 0 : i32
    return %c0_i32, %c0_i32_0 : i32, i32
  }
  func.func @transform_4(%arg0: i32) -> (i32, i32) {
    %c0_i32 = arith.constant 0 : i32
    %c0_i32_0 = arith.constant 0 : i32
    %c0_i32_1 = arith.constant 0 : i32
    return %c0_i32, %c0_i32_0 : i32, i32
  }
  func.func @transform_5(%arg0: i32) -> (i32, i32) {
    %c0_i32 = arith.constant 0 : i32
    %c0_i32_0 = arith.constant 0 : i32
    %c0_i32_1 = arith.constant 0 : i32
    return %c0_i32, %c0_i32_0 : i32, i32
  }
  func.func @transform_6(%arg0: i32) -> (i32, i32) {
    %c0_i32 = arith.constant 0 : i32
    %c0_i32_0 = arith.constant 0 : i32
    %c0_i32_1 = arith.constant 0 : i32
    return %c0_i32, %c0_i32_0 : i32, i32
  }
  func.func @transform_7(%arg0: i32) -> (i32, i32) {
    %c0_i32 = arith.constant 0 : i32
    %c0_i32_0 = arith.constant 0 : i32
    %c0_i32_1 = arith.constant 0 : i32
    return %c0_i32, %c0_i32_0 : i32, i32
  }
  func.func @transform_8(%arg0: i32) -> (i32, i32) {
    %c0_i32 = arith.constant 0 : i32
    %c0_i32_0 = arith.constant 0 : i32
    %c0_i32_1 = arith.constant 0 : i32
    return %c0_i32, %c0_i32_0 : i32, i32
  }
  func.func @transform_9(%arg0: i32) -> (i32, i32) {
    %c0_i32 = arith.constant 0 : i32
    %c0_i32_0 = arith.constant 0 : i32
    %c0_i32_1 = arith.constant 0 : i32
    return %c0_i32, %c0_i32_0 : i32, i32
  }
  func.func @transform_10(%arg0: i32) -> (i32, i32) {
    %c0_i32 = arith.constant 0 : i32
    %c0_i32_0 = arith.constant 0 : i32
    %c0_i32_1 = arith.constant 0 : i32
    return %c0_i32, %c0_i32_0 : i32, i32
  }
  func.func @transform_11(%arg0: i32) -> (i32, i32, i32) {
    %c0_i32 = arith.constant 0 : i32
    %c0_i32_0 = arith.constant 0 : i32
    %c0_i32_1 = arith.constant 0 : i32
    return %arg0, %c0_i32, %c0_i32_0 : i32, i32, i32
  }
}

</mosaic_0001>

<llo_original>
// kernel: model_forward.1
$region0: #{model_forward.1}
  #allocation0 [shape = 'u32[]', space=smem, size = 0x4, offset = 0x4, fixed_abs, tag = 'smem constant byte address 0x4 - core index']
  #allocation1 [shape = 'u32[144,128]{1,0:T(1,128)}', space=vmem, size = 0x12000, scoped, tag = 'internal scratch']
  #allocation2 [shape = 'f32[24,256]{1,0:T(8,128)}', space=vmem, size = 0x6000, scoped, tag = 'scratch operand']
  #allocation3 [shape = 'f32[16,128]{1,0:T(8,128)}', space=vmem, size = 0x2000, scoped, tag = 'scratch operand']
  #allocation4 [shape = 'f32[24,256]{1,0:T(8,128)}', space=vmem, size = 0x6000, scoped, tag = 'scratch operand']
  %s0 = inlined_call_operand.vmem [shape: f32[2,40,128], index: 0, kind: input, shape index: {}]
  %s1 = inlined_call_operand.hbm [shape: bf16[640,256], index: 1, kind: input, shape index: {}]
  %s2 = inlined_call_operand.hbm [shape: f32[1,256], index: 2, kind: input, shape index: {}]
  %s3 = inlined_call_operand.hbm [shape: bf16[1280,128], index: 3, kind: input, shape index: {}]
  %s4 = inlined_call_operand.hbm [shape: f32[1,128], index: 4, kind: input, shape index: {}]
  %s5 = inlined_call_operand.hbm [shape: bf16[384,256], index: 5, kind: input, shape index: {}]
  %s6 = inlined_call_operand.hbm [shape: bf16[256,256], index: 6, kind: input, shape index: {}]
  %s7 = inlined_call_operand.hbm [shape: f32[1,256], index: 7, kind: input, shape index: {}]
  %s8 = inlined_call_operand.hbm [shape: bf16[768,128], index: 8, kind: input, shape index: {}]
  %s9 = inlined_call_operand.hbm [shape: bf16[512,128], index: 9, kind: input, shape index: {}]
  %s10 = inlined_call_operand.hbm [shape: f32[1,128], index: 10, kind: input, shape index: {}]
  %s11 = inlined_call_operand.vmem [shape: f32[2,29,128], index: 11, kind: output, shape index: {}]
  %s12 = sld [smem:[#allocation0]]
  $region117: #{model_forward.1} parent=0
    _
  %s14 = ssub.s32 1, %s12
  %s15 = scalar_select 0, %s14, %s12
  $region1: #{model_forward.1} parent=0
    #allocation5 [shape = 'u8[327680]{0}', space=vmem, size = 0x50000, scoped, tag = 'input window, operand 1, single buffered']
    #allocation6 [shape = 's32[2]{0}', space=sflag, size = 0x8, scoped, tag = 'scoped memory for model_forward.1']
    #allocation7 [shape = 'u8[1024]{0}', space=vmem, size = 0x400, scoped, tag = 'input window, operand 2, single buffered']
    #allocation8 [shape = 's32[1]{0}', space=sflag, size = 0x4, scoped, tag = 'scoped memory for model_forward.1']
    #allocation9 [shape = 'u8[327680]{0}', space=vmem, size = 0x50000, scoped, tag = 'input window, operand 3, single buffered']
    #allocation10 [shape = 'u8[512]{0}', space=vmem, size = 0x400, scoped, tag = 'input window, operand 4, single buffered']
    #allocation11 [shape = 's32[1]{0}', space=sflag, size = 0x4, scoped, tag = 'scoped memory for model_forward.1']
    #allocation12 [shape = 'u8[196608]{0}', space=vmem, size = 0x30000, scoped, tag = 'input window, operand 5, single buffered']
    #allocation13 [shape = 'u8[131072]{0}', space=vmem, size = 0x20000, scoped, tag = 'input window, operand 6, single buffered']
    #allocation14 [shape = 's32[1]{0}', space=sflag, size = 0x4, scoped, tag = 'scoped memory for model_forward.1']
    #allocation15 [shape = 'u8[1024]{0}', space=vmem, size = 0x400, scoped, tag = 'input window, operand 7, single buffered']
    #allocation16 [shape = 'u8[196608]{0}', space=vmem, size = 0x30000, scoped, tag = 'input window, operand 8, single buffered']
    #allocation17 [shape = 's32[1]{0}', space=sflag, size = 0x4, scoped, tag = 'scoped memory for model_forward.1']
    #allocation18 [shape = 'u8[131072]{0}', space=vmem, size = 0x20000, scoped, tag = 'input window, operand 9, single buffered']
    #allocation19 [shape = 'u8[512]{0}', space=vmem, size = 0x400, scoped, tag = 'input window, operand 10, single buffered']
    #allocation20 [shape = 's32[1]{0}', space=sflag, size = 0x4, scoped, tag = 'scoped memory for model_forward.1']
    %16 = vsyncpa [#allocation6], 0
    %17 = vsyncpa [#allocation8], 0
    %18 = vsyncpa [#allocation11], 0
    %19 = vsyncpa [#allocation14], 0
    %20 = vsyncpa [#allocation17], 0
    %21 = vsyncpa [#allocation20], 0
    loop: start=0, step=1, limit=4
    $region2: #{model_forward.1} parent=1 // loop_pre_header
      _
    $region3: #{model_forward.1} parent=1 // loop_header
      %s23 = sphi 0, %s27
      %p24 = scmp.ge.s32.totalorder %s23, 4
      %s33 = sphi 0, %s35
      %s36 = sphi 0, %s33
      %s37 = sphi 0, %s36
      %s53 = sphi 0, %s37
      %s57 = sphi 0, %s57
      %s59 = sphi 0, %s57
      %s60 = sphi 0, %s59
      %s74 = sphi 0, %s60
      %s78 = sphi 0, %s78
      %s80 = sphi 0, %s78
      %s81 = sphi 0, %s80
      %s95 = sphi 0, %s81
      %s99 = sphi 0, %s99
      %s101 = sphi 0, %s99
      %s102 = sphi 0, %s101
      %s116 = sphi 0, %s102
      %s120 = sphi 0, %s120
      %s122 = sphi 0, %s120
      %s123 = sphi 0, %s122
      %s137 = sphi 0, %s123
      %s141 = sphi 0, %s141
      %s143 = sphi 0, %s141
      %s144 = sphi 0, %s143
      %s158 = sphi 0, %s144
      %s162 = sphi 0, %s162
      %s164 = sphi 0, %s162
      %s165 = sphi 0, %s164
      %s179 = sphi 0, %s165
      %s183 = sphi 0, %s183
      %s185 = sphi 0, %s183
      %s186 = sphi 0, %s185
      %s200 = sphi 0, %s186
      %s204 = sphi 0, %s204
      %s206 = sphi 0, %s204
      %s207 = sphi 0, %s206
      %s221 = sphi 0, %s207
      %s225 = sphi 0, %s225
      %s227 = sphi 0, %s225
      %s228 = sphi 0, %s227
      %s242 = sphi 0, %s228
      %s246 = sphi 0, %s246
      %s248 = sphi 0, %s246
      %s249 = sphi 0, %s248
      %s263 = sphi 0, %s249
      %s269 = sphi 0, %s271
      %s272 = sphi 0, %s269
      %s273 = sphi 0, %s272
      %s289 = sphi 0, %s273
    $region4: #{model_forward.1} parent=1 // loop_header_branch
      %26 = sbr.rel (%p24) target = $region8
    $region5: #{model_forward.1} parent=1 // loop_body
      %s28 = ssub.s32 %s23, 1
      %s29 = ssub.s32 %s23, 2
      %s30 = sadd.s32 %s23, 1
      %s31 = ssub.s32 %s23, %s30
      %p32 = scmp.eq.s32.totalorder %s31, 0
      %s34 = sadd.s32 %s33, 1
      %s35 = scalar_select %p32, %s33, %s34
      %p38 = pneg %p32
      %p39 = scmp.eq.s32.totalorder %s23, 1
      %p40 = por %p38, %p39
      %p41 = scmp.ne.s32.totalorder %s33, %s36
      %p42 = scmp.eq.s32.totalorder %s23, 0
      %p43 = por %p41, %p42
      %p44 = scmp.ne.s32.totalorder %s33, %s36
      %p45 = scmp.eq.s32.totalorder %s28, 1
      %p46 = por %p44, %p45
      %p47 = scmp.ne.s32.totalorder %s36, %s37
      %p48 = scmp.eq.s32.totalorder %s28, 0
      %p49 = por %p47, %p48
      %p50 = scmp.ne.s32.totalorder %s36, %s37
      %p51 = scmp.eq.s32.totalorder %s29, 1
      %p52 = por %p50, %p51
      %p54 = scmp.ne.s32.totalorder %s37, %s53
      %p55 = scmp.eq.s32.totalorder %s29, 0
      %p56 = por %p54, %p55
      %s58 = sadd.s32 %s57, 1
      %p61 = scmp.eq.s32.totalorder %s23, 1
      %p62 = scmp.ne.s32.totalorder %s57, %s59
      %p63 = scmp.eq.s32.totalorder %s23, 0
      %p64 = por %p62, %p63
      %p65 = scmp.ne.s32.totalorder %s57, %s59
      %p66 = scmp.eq.s32.totalorder %s28, 1
      %p67 = por %p65, %p66
      %p68 = scmp.ne.s32.totalorder %s59, %s60
      %p69 = scmp.eq.s32.totalorder %s28, 0
      %p70 = por %p68, %p69
      %p71 = scmp.ne.s32.totalorder %s59, %s60
      %p72 = scmp.eq.s32.totalorder %s29, 1
      %p73 = por %p71, %p72
      %p75 = scmp.ne.s32.totalorder %s60, %s74
      %p76 = scmp.eq.s32.totalorder %s29, 0
      %p77 = por %p75, %p76
      %s79 = sadd.s32 %s78, 1
      %p82 = scmp.eq.s32.totalorder %s23, 1
      %p83 = scmp.ne.s32.totalorder %s78, %s80
      %p84 = scmp.eq.s32.totalorder %s23, 0
      %p85 = por %p83, %p84
      %p86 = scmp.ne.s32.totalorder %s78, %s80
      %p87 = scmp.eq.s32.totalorder %s28, 1
      %p88 = por %p86, %p87
      %p89 = scmp.ne.s32.totalorder %s80, %s81
      %p90 = scmp.eq.s32.totalorder %s28, 0
      %p91 = por %p89, %p90
      %p92 = scmp.ne.s32.totalorder %s80, %s81
      %p93 = scmp.eq.s32.totalorder %s29, 1
      %p94 = por %p92, %p93
      %p96 = scmp.ne.s32.totalorder %s81, %s95
      %p97 = scmp.eq.s32.totalorder %s29, 0
      %p98 = por %p96, %p97
      %s100 = sadd.s32 %s99, 1
      %p103 = scmp.eq.s32.totalorder %s23, 1
      %p104 = scmp.ne.s32.totalorder %s99, %s101
      %p105 = scmp.eq.s32.totalorder %s23, 0
      %p106 = por %p104, %p105
      %p107 = scmp.ne.s32.totalorder %s99, %s101
      %p108 = scmp.eq.s32.totalorder %s28, 1
      %p109 = por %p107, %p108
      %p110 = scmp.ne.s32.totalorder %s101, %s102
      %p111 = scmp.eq.s32.totalorder %s28, 0
      %p112 = por %p110, %p111
      %p113 = scmp.ne.s32.totalorder %s101, %s102
      %p114 = scmp.eq.s32.totalorder %s29, 1
      %p115 = por %p113, %p114
      %p117 = scmp.ne.s32.totalorder %s102, %s116
      %p118 = scmp.eq.s32.totalorder %s29, 0
      %p119 = por %p117, %p118
      %s121 = sadd.s32 %s120, 1
      %p124 = scmp.eq.s32.totalorder %s23, 1
      %p125 = scmp.ne.s32.totalorder %s120, %s122
      %p126 = scmp.eq.s32.totalorder %s23, 0
      %p127 = por %p125, %p126
      %p128 = scmp.ne.s32.totalorder %s120, %s122
      %p129 = scmp.eq.s32.totalorder %s28, 1
      %p130 = por %p128, %p129
      %p131 = scmp.ne.s32.totalorder %s122, %s123
      %p132 = scmp.eq.s32.totalorder %s28, 0
      %p133 = por %p131, %p132
      %p134 = scmp.ne.s32.totalorder %s122, %s123
      %p135 = scmp.eq.s32.totalorder %s29, 1
      %p136 = por %p134, %p135
      %p138 = scmp.ne.s32.totalorder %s123, %s137
      %p139 = scmp.eq.s32.totalorder %s29, 0
      %p140 = por %p138, %p139
      %s142 = sadd.s32 %s141, 1
      %p145 = scmp.eq.s32.totalorder %s23, 1
      %p146 = scmp.ne.s32.totalorder %s141, %s143
      %p147 = scmp.eq.s32.totalorder %s23, 0
      %p148 = por %p146, %p147
      %p149 = scmp.ne.s32.totalorder %s141, %s143
      %p150 = scmp.eq.s32.totalorder %s28, 1
      %p151 = por %p149, %p150
      %p152 = scmp.ne.s32.totalorder %s143, %s144
      %p153 = scmp.eq.s32.totalorder %s28, 0
      %p154 = por %p152, %p153
      %p155 = scmp.ne.s32.totalorder %s143, %s144
      %p156 = scmp.eq.s32.totalorder %s29, 1
      %p157 = por %p155, %p156
      %p159 = scmp.ne.s32.totalorder %s144, %s158
      %p160 = scmp.eq.s32.totalorder %s29, 0
      %p161 = por %p159, %p160
      %s163 = sadd.s32 %s162, 1
      %p166 = scmp.eq.s32.totalorder %s23, 1
      %p167 = scmp.ne.s32.totalorder %s162, %s164
      %p168 = scmp.eq.s32.totalorder %s23, 0
      %p169 = por %p167, %p168
      %p170 = scmp.ne.s32.totalorder %s162, %s164
      %p171 = scmp.eq.s32.totalorder %s28, 1
      %p172 = por %p170, %p171
      %p173 = scmp.ne.s32.totalorder %s164, %s165
      %p174 = scmp.eq.s32.totalorder %s28, 0
      %p175 = por %p173, %p174
      %p176 = scmp.ne.s32.totalorder %s164, %s165
      %p177 = scmp.eq.s32.totalorder %s29, 1
      %p178 = por %p176, %p177
      %p180 = scmp.ne.s32.totalorder %s165, %s179
      %p181 = scmp.eq.s32.totalorder %s29, 0
      %p182 = por %p180, %p181
      %s184 = sadd.s32 %s183, 1
      %p187 = scmp.eq.s32.totalorder %s23, 1
      %p188 = scmp.ne.s32.totalorder %s183, %s185
      %p189 = scmp.eq.s32.totalorder %s23, 0
      %p190 = por %p188, %p189
      %p191 = scmp.ne.s32.totalorder %s183, %s185
      %p192 = scmp.eq.s32.totalorder %s28, 1
      %p193 = por %p191, %p192
      %p194 = scmp.ne.s32.totalorder %s185, %s186
      %p195 = scmp.eq.s32.totalorder %s28, 0
      %p196 = por %p194, %p195
      %p197 = scmp.ne.s32.totalorder %s185, %s186
      %p198 = scmp.eq.s32.totalorder %s29, 1
      %p199 = por %p197, %p198
      %p201 = scmp.ne.s32.totalorder %s186, %s200
      %p202 = scmp.eq.s32.totalorder %s29, 0
      %p203 = por %p201, %p202
      %s205 = sadd.s32 %s204, 1
      %p208 = scmp.eq.s32.totalorder %s23, 1
      %p209 = scmp.ne.s32.totalorder %s204, %s206
      %p210 = scmp.eq.s32.totalorder %s23, 0
      %p211 = por %p209, %p210
      %p212 = scmp.ne.s32.totalorder %s204, %s206
      %p213 = scmp.eq.s32.totalorder %s28, 1
      %p214 = por %p212, %p213
      %p215 = scmp.ne.s32.totalorder %s206, %s207
      %p216 = scmp.eq.s32.totalorder %s28, 0
      %p217 = por %p215, %p216
      %p218 = scmp.ne.s32.totalorder %s206, %s207
      %p219 = scmp.eq.s32.totalorder %s29, 1
      %p220 = por %p218, %p219
      %p222 = scmp.ne.s32.totalorder %s207, %s221
      %p223 = scmp.eq.s32.totalorder %s29, 0
      %p224 = por %p222, %p223
      %s226 = sadd.s32 %s225, 1
      %p229 = scmp.eq.s32.totalorder %s23, 1
      %p230 = scmp.ne.s32.totalorder %s225, %s227
      %p231 = scmp.eq.s32.totalorder %s23, 0
      %p232 = por %p230, %p231
      %p233 = scmp.ne.s32.totalorder %s225, %s227
      %p234 = scmp.eq.s32.totalorder %s28, 1
      %p235 = por %p233, %p234
      %p236 = scmp.ne.s32.totalorder %s227, %s228
      %p237 = scmp.eq.s32.totalorder %s28, 0
      %p238 = por %p236, %p237
      %p239 = scmp.ne.s32.totalorder %s227, %s228
      %p240 = scmp.eq.s32.totalorder %s29, 1
      %p241 = por %p239, %p240
      %p243 = scmp.ne.s32.totalorder %s228, %s242
      %p244 = scmp.eq.s32.totalorder %s29, 0
      %p245 = por %p243, %p244
      %s247 = sadd.s32 %s246, 1
      %p250 = scmp.eq.s32.totalorder %s23, 1
      %p251 = scmp.ne.s32.totalorder %s246, %s248
      %p252 = scmp.eq.s32.totalorder %s23, 0
      %p253 = por %p251, %p252
      %p254 = scmp.ne.s32.totalorder %s246, %s248
      %p255 = scmp.eq.s32.totalorder %s28, 1
      %p256 = por %p254, %p255
      %p257 = scmp.ne.s32.totalorder %s248, %s249
      %p258 = scmp.eq.s32.totalorder %s28, 0
      %p259 = por %p257, %p258
      %p260 = scmp.ne.s32.totalorder %s248, %s249
      %p261 = scmp.eq.s32.totalorder %s29, 1
      %p262 = por %p260, %p261
      %p264 = scmp.ne.s32.totalorder %s249, %s263
      %p265 = scmp.eq.s32.totalorder %s29, 0
      %p266 = por %p264, %p265
      %s267 = ssub.s32 %s23, %s30
      %p268 = scmp.eq.s32.totalorder %s267, 0
      %s270 = sadd.s32 %s269, 1
      %s271 = scalar_select %p268, %s269, %s270
      %p274 = pneg %p268
      %p275 = scmp.eq.s32.totalorder %s23, 1
      %p276 = por %p274, %p275
      %p277 = scmp.ne.s32.totalorder %s269, %s272
      %p278 = scmp.eq.s32.totalorder %s23, 0
      %p279 = por %p277, %p278
      %p280 = scmp.ne.s32.totalorder %s269, %s272
      %p281 = scmp.eq.s32.totalorder %s28, 1
      %p282 = por %p280, %p281
      %p283 = scmp.ne.s32.totalorder %s272, %s273
      %p284 = scmp.eq.s32.totalorder %s28, 0
      %p285 = por %p283, %p284
      %p286 = scmp.ne.s32.totalorder %s272, %s273
      %p287 = scmp.eq.s32.totalorder %s29, 1
      %p288 = por %p286, %p287
      %p290 = scmp.ne.s32.totalorder %s273, %s289
      %p291 = scmp.eq.s32.totalorder %s29, 0
      %p292 = por %p290, %p291
      %p293 = scmp.le.s32.totalorder 1, %s23
      %p294 = scmp.lt.s32.totalorder %s23, 3
      %p295 = pnand %p293, %p294
      %p296 = pneg %p295
      // Predicated region
      $region9: #{model_forward.1} parent=5 // pred_check
        _
      $region10: #{model_forward.1} parent=5 // pred_check_branch
        %298 = sbr.rel (%p295) target = $region12
      $region11: #{model_forward.1} parent=5 // pred_region
        %s299 = ssub.s32 %s23, 1
        // Predicated region
        $region13: #{model_forward.1} parent=11 // pred_check
          %p300 = pneg %p70
        $region14: #{model_forward.1} parent=11 // pred_check_branch
          %302 = sbr.rel (%p300) target = $region16
        $region15: #{model_forward.1} parent=11 // pred_region
          %s304 = ssub.s32 10240, 10240
          %305 = vsyncadd [#allocation6], %s304
          %s306 = sshll.u32 [#allocation5], 4
          %s307 = int_to_ptr.vmem [resolvable:$true] %s306
          %312 = dma.hbm_to_vmem [thread:$0]  %s1, 10240, %s307, [#allocation6], 128, 128, 8
        $region16: #{model_forward.1} parent=11 // pred_fallthru
          _
        // Predicated region
        $region17: #{model_forward.1} parent=11 // pred_check
          %p313 = pneg %p91
        $region18: #{model_forward.1} parent=11 // pred_check_branch
          %315 = sbr.rel (%p313) target = $region20
        $region19: #{model_forward.1} parent=11 // pred_region
          %s317 = ssub.s32 32, 32
          %318 = vsyncadd [#allocation8], %s317
          %s320 = sshll.u32 [#allocation7], 4
          %s321 = int_to_ptr.vmem [resolvable:$true] %s320
          %323 = dma.hbm_to_vmem [thread:$0]  %s2, 32, %s321, [#allocation8]
        $region20: #{model_forward.1} parent=11 // pred_fallthru
          _
        // Predicated region
        $region21: #{model_forward.1} parent=11 // pred_check
          %p324 = pneg %p112
        $region22: #{model_forward.1} parent=11 // pred_check_branch
          %326 = sbr.rel (%p324) target = $region24
        $region23: #{model_forward.1} parent=11 // pred_region
          %s328 = ssub.s32 10240, 10240
          %329 = vsyncadd [#allocation8], %s328
          %s330 = sshll.u32 [#allocation9], 4
          %s331 = int_to_ptr.vmem [resolvable:$true] %s330
          %336 = dma.hbm_to_vmem [thread:$0]  %s3, 10240, %s331, [#allocation8], 64, 64, 4
        $region24: #{model_forward.1} parent=11 // pred_fallthru
          _
        // Predicated region
        $region25: #{model_forward.1} parent=11 // pred_check
          %p337 = pneg %p133
        $region26: #{model_forward.1} parent=11 // pred_check_branch
          %339 = sbr.rel (%p337) target = $region28
        $region27: #{model_forward.1} parent=11 // pred_region
          %s341 = ssub.s32 16, 16
          %342 = vsyncadd [#allocation11], %s341
          %s344 = sshll.u32 [#allocation10], 4
          %s345 = int_to_ptr.vmem [resolvable:$true] %s344
          %347 = dma.hbm_to_vmem [thread:$0]  %s4, 16, %s345, [#allocation11]
        $region28: #{model_forward.1} parent=11 // pred_fallthru
          _
        // Predicated region
        $region29: #{model_forward.1} parent=11 // pred_check
          %p348 = pneg %p154
        $region30: #{model_forward.1} parent=11 // pred_check_branch
          %350 = sbr.rel (%p348) target = $region32
        $region31: #{model_forward.1} parent=11 // pred_region
          %s352 = ssub.s32 6144, 6144
          %353 = vsyncadd [#allocation11], %s352
          %s354 = sshll.u32 [#allocation12], 4
          %s355 = int_to_ptr.vmem [resolvable:$true] %s354
          %360 = dma.hbm_to_vmem [thread:$0]  %s5, 6144, %s355, [#allocation11], 128, 128, 8
        $region32: #{model_forward.1} parent=11 // pred_fallthru
          _
        // Predicated region
        $region33: #{model_forward.1} parent=11 // pred_check
          %p361 = pneg %p175
        $region34: #{model_forward.1} parent=11 // pred_check_branch
          %363 = sbr.rel (%p361) target = $region36
        $region35: #{model_forward.1} parent=11 // pred_region
          %s365 = ssub.s32 4096, 4096
          %366 = vsyncadd [#allocation14], %s365
          %s367 = sshll.u32 [#allocation13], 4
          %s368 = int_to_ptr.vmem [resolvable:$true] %s367
          %373 = dma.hbm_to_vmem [thread:$0]  %s6, 4096, %s368, [#allocation14], 128, 128, 8
        $region36: #{model_forward.1} parent=11 // pred_fallthru
          _
        // Predicated region
        $region37: #{model_forward.1} parent=11 // pred_check
          %p374 = pneg %p196
        $region38: #{model_forward.1} parent=11 // pred_check_branch
          %376 = sbr.rel (%p374) target = $region40
        $region39: #{model_forward.1} parent=11 // pred_region
          %s378 = ssub.s32 32, 32
          %379 = vsyncadd [#allocation14], %s378
          %s381 = sshll.u32 [#allocation15], 4
          %s382 = int_to_ptr.vmem [resolvable:$true] %s381
          %384 = dma.hbm_to_vmem [thread:$0]  %s7, 32, %s382, [#allocation14]
        $region40: #{model_forward.1} parent=11 // pred_fallthru
          _
        // Predicated region
        $region41: #{model_forward.1} parent=11 // pred_check
          %p385 = pneg %p217
        $region42: #{model_forward.1} parent=11 // pred_check_branch
          %387 = sbr.rel (%p385) target = $region44
        $region43: #{model_forward.1} parent=11 // pred_region
          %s389 = ssub.s32 6144, 6144
          %390 = vsyncadd [#allocation17], %s389
          %s391 = sshll.u32 [#allocation16], 4
          %s392 = int_to_ptr.vmem [resolvable:$true] %s391
          %397 = dma.hbm_to_vmem [thread:$0]  %s8, 6144, %s392, [#allocation17], 64, 64, 4
        $region44: #{model_forward.1} parent=11 // pred_fallthru
          _
        // Predicated region
        $region45: #{model_forward.1} parent=11 // pred_check
          %p398 = pneg %p238
        $region46: #{model_forward.1} parent=11 // pred_check_branch
          %400 = sbr.rel (%p398) target = $region48
        $region47: #{model_forward.1} parent=11 // pred_region
          %s402 = ssub.s32 4096, 4096
          %403 = vsyncadd [#allocation17], %s402
          %s404 = sshll.u32 [#allocation18], 4
          %s405 = int_to_ptr.vmem [resolvable:$true] %s404
          %410 = dma.hbm_to_vmem [thread:$0]  %s9, 4096, %s405, [#allocation17], 64, 64, 4
        $region48: #{model_forward.1} parent=11 // pred_fallthru
          _
        // Predicated region
        $region49: #{model_forward.1} parent=11 // pred_check
          %p411 = pneg %p259
        $region50: #{model_forward.1} parent=11 // pred_check_branch
          %413 = sbr.rel (%p411) target = $region52
        $region51: #{model_forward.1} parent=11 // pred_region
          %s415 = ssub.s32 16, 16
          %416 = vsyncadd [#allocation20], %s415
          %s418 = sshll.u32 [#allocation19], 4
          %s419 = int_to_ptr.vmem [resolvable:$true] %s418
          %421 = dma.hbm_to_vmem [thread:$0]  %s10, 16, %s419, [#allocation20]
        $region52: #{model_forward.1} parent=11 // pred_fallthru
          _
      $region12: #{model_forward.1} parent=5 // pred_fallthru
        _
      %p422 = scmp.lt.s32.totalorder %s23, 2
      // Predicated region
      $region53: #{model_forward.1} parent=5 // pred_check
        %p423 = pneg %p422
      $region54: #{model_forward.1} parent=5 // pred_check_branch
        %425 = sbr.rel (%p423) target = $region56
      $region55: #{model_forward.1} parent=5 // pred_region
        // Predicated region
        $region57: #{model_forward.1} parent=55 // pred_check
          %p426 = pneg %p43
        $region58: #{model_forward.1} parent=55 // pred_check_branch
          %428 = sbr.rel (%p426) target = $region60
        $region59: #{model_forward.1} parent=55 // pred_region
          %p429 = scmp.lt.s32.totalorder %s23, 1
          %s430 = scalar_select %p429, %s23, 1
          %s431 = smul.addr %s430, 5
          %s432 = smul.addr %s431, 8
          %s433 = scalar_lea.vmem %s0, %s432
        $region60: #{model_forward.1} parent=55 // pred_fallthru
          _
      $region56: #{model_forward.1} parent=5 // pred_fallthru
        _
      %p434 = scmp.le.s32.totalorder 1, %s23
      %p435 = scmp.lt.s32.totalorder %s23, 3
      %p436 = pnand %p434, %p435
      %p437 = pneg %p436
      // Predicated region
      $region61: #{model_forward.1} parent=5 // pred_check
        _
      $region62: #{model_forward.1} parent=5 // pred_check_branch
        %439 = sbr.rel (%p436) target = $region64
      $region63: #{model_forward.1} parent=5 // pred_region
        %s440 = ssub.s32 %s23, 1
        // Predicated region
        $region65: #{model_forward.1} parent=63 // pred_check
          %p441 = pneg %p70
        $region66: #{model_forward.1} parent=63 // pred_check_branch
          %443 = sbr.rel (%p441) target = $region68
        $region67: #{model_forward.1} parent=63 // pred_region
          %444 = dma.done [#allocation6], 10240
        $region68: #{model_forward.1} parent=63 // pred_fallthru
          _
        // Predicated region
        $region69: #{model_forward.1} parent=63 // pred_check
          %p445 = pneg %p91
        $region70: #{model_forward.1} parent=63 // pred_check_branch
          %447 = sbr.rel (%p445) target = $region72
        $region71: #{model_forward.1} parent=63 // pred_region
          %448 = dma.done [#allocation8], 32
        $region72: #{model_forward.1} parent=63 // pred_fallthru
          _
        // Predicated region
        $region73: #{model_forward.1} parent=63 // pred_check
          %p449 = pneg %p112
        $region74: #{model_forward.1} parent=63 // pred_check_branch
          %451 = sbr.rel (%p449) target = $region76
        $region75: #{model_forward.1} parent=63 // pred_region
          %452 = dma.done [#allocation8], 10240
        $region76: #{model_forward.1} parent=63 // pred_fallthru
          _
        // Predicated region
        $region77: #{model_forward.1} parent=63 // pred_check
          %p453 = pneg %p133
        $region78: #{model_forward.1} parent=63 // pred_check_branch
          %455 = sbr.rel (%p453) target = $region80
        $region79: #{model_forward.1} parent=63 // pred_region
          %456 = dma.done [#allocation11], 16
        $region80: #{model_forward.1} parent=63 // pred_fallthru
          _
        // Predicated region
        $region81: #{model_forward.1} parent=63 // pred_check
          %p457 = pneg %p154
        $region82: #{model_forward.1} parent=63 // pred_check_branch
          %459 = sbr.rel (%p457) target = $region84
        $region83: #{model_forward.1} parent=63 // pred_region
          %460 = dma.done [#allocation11], 6144
        $region84: #{model_forward.1} parent=63 // pred_fallthru
          _
        // Predicated region
        $region85: #{model_forward.1} parent=63 // pred_check
          %p461 = pneg %p175
        $region86: #{model_forward.1} parent=63 // pred_check_branch
          %463 = sbr.rel (%p461) target = $region88
        $region87: #{model_forward.1} parent=63 // pred_region
          %464 = dma.done [#allocation14], 4096
        $region88: #{model_forward.1} parent=63 // pred_fallthru
          _
        // Predicated region
        $region89: #{model_forward.1} parent=63 // pred_check
          %p465 = pneg %p196
        $region90: #{model_forward.1} parent=63 // pred_check_branch
          %467 = sbr.rel (%p465) target = $region92
        $region91: #{model_forward.1} parent=63 // pred_region
          %468 = dma.done [#allocation14], 32
        $region92: #{model_forward.1} parent=63 // pred_fallthru
          _
        // Predicated region
        $region93: #{model_forward.1} parent=63 // pred_check
          %p469 = pneg %p217
        $region94: #{model_forward.1} parent=63 // pred_check_branch
          %471 = sbr.rel (%p469) target = $region96
        $region95: #{model_forward.1} parent=63 // pred_region
          %472 = dma.done [#allocation17], 6144
        $region96: #{model_forward.1} parent=63 // pred_fallthru
          _
        // Predicated region
        $region97: #{model_forward.1} parent=63 // pred_check
          %p473 = pneg %p238
        $region98: #{model_forward.1} parent=63 // pred_check_branch
          %475 = sbr.rel (%p473) target = $region100
        $region99: #{model_forward.1} parent=63 // pred_region
          %476 = dma.done [#allocation17], 4096
        $region100: #{model_forward.1} parent=63 // pred_fallthru
          _
        // Predicated region
        $region101: #{model_forward.1} parent=63 // pred_check
          %p477 = pneg %p259
        $region102: #{model_forward.1} parent=63 // pred_check_branch
          %479 = sbr.rel (%p477) target = $region104
        $region103: #{model_forward.1} parent=63 // pred_region
          %480 = dma.done [#allocation20], 16
        $region104: #{model_forward.1} parent=63 // pred_fallthru
          _
        %p481 = scmp.lt.s32.totalorder %s28, 1
        %s482 = scalar_select %p481, %s28, 1
        %s483 = smul.addr %s482, 5
        %s484 = smul.addr %s483, 8
        %s485 = scalar_lea.vmem %s0, %s484
        %p486 = pneg %p49
        %p487 = pneg %p46
        %p488 = pneg %p70
        %p489 = pneg %p67
        %p490 = pneg %p91
        %p491 = pneg %p88
        %p492 = pneg %p112
        %p493 = pneg %p109
        %p494 = pneg %p133
        %p495 = pneg %p130
        %p496 = pneg %p154
        %p497 = pneg %p151
        %p498 = pneg %p175
        %p499 = pneg %p172
        %p500 = pneg %p196
        %p501 = pneg %p193
        %p502 = pneg %p217
        %p503 = pneg %p214
        %p504 = pneg %p238
        %p505 = pneg %p235
        %p506 = pneg %p259
        %p507 = pneg %p256
        %p508 = pneg %p285
        %p509 = pneg %p282
        %p510 = scmp.lt.s32.totalorder %s28, 1
        %s511 = scalar_select %p510, %s28, 1
        %s512 = smul.addr %s511, 4
        %s513 = smul.addr %s512, 8
        %s514 = scalar_lea.vmem %s11, %s513
        %p515 = scmp.lt.s32.totalorder %s28, 1
        %s516 = scalar_select %p515, %s28, 1
        %s517 = smul.addr %s516, 5
        %s518 = smul.addr %s517, 8
        %s519 = scalar_lea.vmem %s0, %s518
        %p520 = scmp.lt.s32.totalorder %s28, 1
        %s521 = scalar_select %p520, %s28, 1
        %s522 = smul.addr %s521, 4
        %s523 = smul.addr %s522, 8
        %s524 = scalar_lea.vmem %s11, %s523
        %526 = vst [vmem:[#allocation2] sm:$0xff] 0.0
        %527 = vst [vmem:[#allocation2 + $0x8] sm:$0xff] 0.0
        %528 = vst [vmem:[#allocation2 + $0x10] sm:$0xff] 0.0
        %529 = vst [vmem:[#allocation2 + $0x18] sm:$0xff] 0.0
        %530 = vst [vmem:[#allocation2 + $0x20] sm:$0xff] 0.0
        %531 = vst [vmem:[#allocation2 + $0x28] sm:$0xff] 0.0
        %532 = vst [vmem:[#allocation3] sm:$0xff] 0.0
        %533 = vst [vmem:[#allocation3 + $0x8] sm:$0xff] 0.0
        %534 = vst [vmem:[#allocation4] sm:$0xff] 0.0
        %535 = vst [vmem:[#allocation4 + $0x8] sm:$0xff] 0.0
        %536 = vst [vmem:[#allocation4 + $0x10] sm:$0xff] 0.0
        %537 = vst [vmem:[#allocation4 + $0x18] sm:$0xff] 0.0
        %538 = vst [vmem:[#allocation4 + $0x20] sm:$0xff] 0.0
        %539 = vst [vmem:[#allocation4 + $0x28] sm:$0xff] 0.0
        %v540 = vld [vmem:[%s519 + $0x14] sm:$0xff]
        %v541 = vld [vmem:[%s519 + $0x1e] sm:$0xff]
        %v542 = vld [vmem:[%s519 + $0x1] sm:$0xff]
        %v543 = vld [vmem:[%s519 + $0xb] sm:$0xff]
        %v544 = vld [vmem:[%s519 + $0x15] sm:$0xff]
        %v545 = vpack.c.bf16 %v540, %v540
        %v546 = vpack.c.bf16 %v541, %v541
        %v547 = vpack.c.bf16 %v542, %v542
        %v548 = vpack.c.bf16 %v543, %v543
        %v549 = vpack.c.bf16 %v544, %v544
        %v550 = vld [vmem:[#allocation5] sm:$0xff]
        %v551 = vld [vmem:[#allocation5 + $0x8] sm:$0xff]
        %v552 = vld [vmem:[#allocation5 + $0x10] sm:$0xff]
        %v553 = vld [vmem:[#allocation5 + $0x18] sm:$0xff]
        %v554 = vld [vmem:[#allocation5 + $0x20] sm:$0xff]
        %v555 = vld [vmem:[#allocation5 + $0x28] sm:$0xff]
        %v556 = vld [vmem:[#allocation5 + $0x30] sm:$0xff]
        %v557 = vld [vmem:[#allocation5 + $0x38] sm:$0xff]
        %v558 = vld [vmem:[#allocation5 + $0x40] sm:$0xff]
        %v559 = vld [vmem:[#allocation5 + $0x48] sm:$0xff]
        %v560 = vld [vmem:[#allocation5 + $0x50] sm:$0xff]
        %v561 = vld [vmem:[#allocation5 + $0x58] sm:$0xff]
        %v562 = vld [vmem:[#allocation5 + $0x60] sm:$0xff]
        %v563 = vld [vmem:[#allocation5 + $0x68] sm:$0xff]
        %v564 = vld [vmem:[#allocation5 + $0x70] sm:$0xff]
        %v565 = vld [vmem:[#allocation5 + $0x78] sm:$0xff]
        %v566 = vld [vmem:[#allocation5 + $0x80] sm:$0xff]
        %v567 = vld [vmem:[#allocation5 + $0x88] sm:$0xff]
        %v568 = vld [vmem:[#allocation5 + $0x90] sm:$0xff]
        %v569 = vld [vmem:[#allocation5 + $0x98] sm:$0xff]
        %v570 = vld [vmem:[#allocation5 + $0xa0] sm:$0xff]
        %v571 = vld [vmem:[#allocation5 + $0xa8] sm:$0xff]
        %v572 = vld [vmem:[#allocation5 + $0xb0] sm:$0xff]
        %v573 = vld [vmem:[#allocation5 + $0xb8] sm:$0xff]
        %v574 = vld [vmem:[#allocation5 + $0xc0] sm:$0xff]
        %v575 = vld [vmem:[#allocation5 + $0xc8] sm:$0xff]
        %v576 = vld [vmem:[#allocation5 + $0xd0] sm:$0xff]
        %v577 = vld [vmem:[#allocation5 + $0xd8] sm:$0xff]
        %v578 = vld [vmem:[#allocation5 + $0xe0] sm:$0xff]
        %v579 = vld [vmem:[#allocation5 + $0xe8] sm:$0xff]
        %v580 = vld [vmem:[#allocation5 + $0xf0] sm:$0xff]
        %v581 = vld [vmem:[#allocation5 + $0xf8] sm:$0xff]
        %v582 = vld [vmem:[#allocation5 + $0x100] sm:$0xff]
        %v583 = vld [vmem:[#allocation5 + $0x108] sm:$0xff]
        %v584 = vld [vmem:[#allocation5 + $0x110] sm:$0xff]
        %v585 = vld [vmem:[#allocation5 + $0x118] sm:$0xff]
        %v586 = vld [vmem:[#allocation5 + $0x120] sm:$0xff]
        %v587 = vld [vmem:[#allocation5 + $0x128] sm:$0xff]
        %v588 = vld [vmem:[#allocation5 + $0x130] sm:$0xff]
        %v589 = vld [vmem:[#allocation5 + $0x138] sm:$0xff]
        %v590 = vld [vmem:[#allocation5 + $0x140] sm:$0xff]
        %v591 = vld [vmem:[#allocation5 + $0x148] sm:$0xff]
        %v592 = vld [vmem:[#allocation5 + $0x150] sm:$0xff]
        %v593 = vld [vmem:[#allocation5 + $0x158] sm:$0xff]
        %v594 = vld [vmem:[#allocation5 + $0x160] sm:$0xff]
        %v595 = vld [vmem:[#allocation5 + $0x168] sm:$0xff]
        %v596 = vld [vmem:[#allocation5 + $0x170] sm:$0xff]
        %v597 = vld [vmem:[#allocation5 + $0x178] sm:$0xff]
        %v598 = vld [vmem:[#allocation5 + $0x180] sm:$0xff]
        %v599 = vld [vmem:[#allocation5 + $0x188] sm:$0xff]
        %v600 = vld [vmem:[#allocation5 + $0x190] sm:$0xff]
        %v601 = vld [vmem:[#allocation5 + $0x198] sm:$0xff]
        %v602 = vld [vmem:[#allocation5 + $0x1a0] sm:$0xff]
        %v603 = vld [vmem:[#allocation5 + $0x1a8] sm:$0xff]
        %v604 = vld [vmem:[#allocation5 + $0x1b0] sm:$0xff]
        %v605 = vld [vmem:[#allocation5 + $0x1b8] sm:$0xff]
        %v606 = vld [vmem:[#allocation5 + $0x1c0] sm:$0xff]
        %v607 = vld [vmem:[#allocation5 + $0x1c8] sm:$0xff]
        %v608 = vld [vmem:[#allocation5 + $0x1d0] sm:$0xff]
        %v609 = vld [vmem:[#allocation5 + $0x1d8] sm:$0xff]
        %v610 = vld [vmem:[#allocation5 + $0x1e0] sm:$0xff]
        %v611 = vld [vmem:[#allocation5 + $0x1e8] sm:$0xff]
        %v612 = vld [vmem:[#allocation5 + $0x1f0] sm:$0xff]
        %v613 = vld [vmem:[#allocation5 + $0x1f8] sm:$0xff]
        %v614 = vld [vmem:[#allocation5 + $0x200] sm:$0xff]
        %v615 = vld [vmem:[#allocation5 + $0x208] sm:$0xff]
        %v616 = vld [vmem:[#allocation5 + $0x210] sm:$0xff]
        %v617 = vld [vmem:[#allocation5 + $0x218] sm:$0xff]
        %v618 = vld [vmem:[#allocation5 + $0x220] sm:$0xff]
        %v619 = vld [vmem:[#allocation5 + $0x228] sm:$0xff]
        %v620 = vld [vmem:[#allocation5 + $0x230] sm:$0xff]
        %v621 = vld [vmem:[#allocation5 + $0x238] sm:$0xff]
        %v622 = vld [vmem:[#allocation5 + $0x240] sm:$0xff]
        %v623 = vld [vmem:[#allocation5 + $0x248] sm:$0xff]
        %v624 = vld [vmem:[#allocation5 + $0x250] sm:$0xff]
        %v625 = vld [vmem:[#allocation5 + $0x258] sm:$0xff]
        %v626 = vld [vmem:[#allocation5 + $0x260] sm:$0xff]
        %v627 = vld [vmem:[#allocation5 + $0x268] sm:$0xff]
        %v628 = vld [vmem:[#allocation5 + $0x270] sm:$0xff]
        %v629 = vld [vmem:[#allocation5 + $0x278] sm:$0xff]
        %v630 = vld [vmem:[%s519 + $0x1f] sm:$0xff]
        %v631 = vld [vmem:[%s519 + $0x2] sm:$0xff]
        %v632 = vpack.c.bf16 %v630, %v630
        %v633 = vpack.c.bf16 %v631, %v631
        %v634 = vld [vmem:[#allocation7] sm:$0x3]
        %v636 = vlaneseq
        %v637 = vshrl.u32 %v636, 7
        %v638 = vsub.s32 0, %v637
        %v639 = vrot.slane %v634, %v638
        %v640 = vlaneseq
        %v641 = vshrl.u32 %v640, 7
        %v642 = vsub.s32 1, %v641
        %v643 = vrot.slane %v634, %v642
        %v726 = vunpack.c.l.b16 %v550
        %v727 = vunpack.c.h.b16 %v550
        %v728 = vunpack.c.l.b16 %v551
        %v729 = vunpack.c.h.b16 %v551
        %v730 = vunpack.c.l.b16 %v552
        %v731 = vunpack.c.h.b16 %v552
        %v732 = vunpack.c.l.b16 %v553
        %v733 = vunpack.c.h.b16 %v553
        %v734 = vunpack.c.l.b16 %v554
        %v735 = vunpack.c.h.b16 %v554
        %v736 = vunpack.c.l.b16 %v555
        %v737 = vunpack.c.h.b16 %v555
        %v738 = vunpack.c.l.b16 %v556
        %v739 = vunpack.c.h.b16 %v556
        %v740 = vunpack.c.l.b16 %v557
        %v741 = vunpack.c.h.b16 %v557
        %v742 = vunpack.c.l.b16 %v558
        %v743 = vunpack.c.h.b16 %v558
        %v744 = vunpack.c.l.b16 %v559
        %v745 = vunpack.c.h.b16 %v559
        %v746 = vunpack.c.l.b16 %v560
        %v747 = vunpack.c.h.b16 %v560
        %v748 = vunpack.c.l.b16 %v561
        %v749 = vunpack.c.h.b16 %v561
        %v750 = vunpack.c.l.b16 %v562
        %v751 = vunpack.c.h.b16 %v562
        %v752 = vunpack.c.l.b16 %v563
        %v753 = vunpack.c.h.b16 %v563
        %v754 = vunpack.c.l.b16 %v564
        %v755 = vunpack.c.h.b16 %v564
        %v756 = vunpack.c.l.b16 %v565
        %v757 = vunpack.c.h.b16 %v565
        %v758 = vunpack.c.l.b16 %v566
        %v759 = vunpack.c.h.b16 %v566
        %v760 = vunpack.c.l.b16 %v567
        %v761 = vunpack.c.h.b16 %v567
        %v762 = vunpack.c.l.b16 %v568
        %v763 = vunpack.c.h.b16 %v568
        %v764 = vunpack.c.l.b16 %v569
        %v765 = vunpack.c.h.b16 %v569
        %v766 = vunpack.c.l.b16 %v570
        %v767 = vunpack.c.h.b16 %v570
        %v768 = vunpack.c.l.b16 %v571
        %v769 = vunpack.c.h.b16 %v571
        %v770 = vunpack.c.l.b16 %v572
        %v771 = vunpack.c.h.b16 %v572
        %v772 = vunpack.c.l.b16 %v573
        %v773 = vunpack.c.h.b16 %v573
        %v774 = vunpack.c.l.b16 %v574
        %v775 = vunpack.c.h.b16 %v574
        %v776 = vunpack.c.l.b16 %v575
        %v777 = vunpack.c.h.b16 %v575
        %v778 = vunpack.c.l.b16 %v576
        %v779 = vunpack.c.h.b16 %v576
        %v780 = vunpack.c.l.b16 %v577
        %v781 = vunpack.c.h.b16 %v577
        %v782 = vunpack.c.l.b16 %v578
        %v783 = vunpack.c.h.b16 %v578
        %v784 = vunpack.c.l.b16 %v579
        %v785 = vunpack.c.h.b16 %v579
        %v786 = vunpack.c.l.b16 %v580
        %v787 = vunpack.c.h.b16 %v580
        %v788 = vunpack.c.l.b16 %v581
        %v789 = vunpack.c.h.b16 %v581
        %v790 = vunpack.c.l.b16 %v582
        %v791 = vunpack.c.h.b16 %v582
        %v792 = vunpack.c.l.b16 %v583
        %v793 = vunpack.c.h.b16 %v583
        %v794 = vunpack.c.l.b16 %v584
        %v795 = vunpack.c.h.b16 %v584
        %v796 = vunpack.c.l.b16 %v585
        %v797 = vunpack.c.h.b16 %v585
        %v798 = vunpack.c.l.b16 %v586
        %v799 = vunpack.c.h.b16 %v586
        %v800 = vunpack.c.l.b16 %v587
        %v801 = vunpack.c.h.b16 %v587
        %v802 = vunpack.c.l.b16 %v588
        %v803 = vunpack.c.h.b16 %v588
        %v804 = vunpack.c.l.b16 %v589
        %v805 = vunpack.c.h.b16 %v589
        %v806 = vunpack.c.l.b16 %v590
        %v807 = vunpack.c.h.b16 %v590
        %v808 = vunpack.c.l.b16 %v591
        %v809 = vunpack.c.h.b16 %v591
        %v810 = vunpack.c.l.b16 %v592
        %v811 = vunpack.c.h.b16 %v592
        %v812 = vunpack.c.l.b16 %v593
        %v813 = vunpack.c.h.b16 %v593
        %v814 = vunpack.c.l.b16 %v594
        %v815 = vunpack.c.h.b16 %v594
        %v816 = vunpack.c.l.b16 %v595
        %v817 = vunpack.c.h.b16 %v595
        %v818 = vunpack.c.l.b16 %v596
        %v819 = vunpack.c.h.b16 %v596
        %v820 = vunpack.c.l.b16 %v597
        %v821 = vunpack.c.h.b16 %v597
        %v822 = vunpack.c.l.b16 %v598
        %v823 = vunpack.c.h.b16 %v598
        %v824 = vunpack.c.l.b16 %v599
        %v825 = vunpack.c.h.b16 %v599
        %v826 = vunpack.c.l.b16 %v600
        %v827 = vunpack.c.h.b16 %v600
        %v828 = vunpack.c.l.b16 %v601
        %v829 = vunpack.c.h.b16 %v601
        %v830 = vunpack.c.l.b16 %v602
        %v831 = vunpack.c.h.b16 %v602
        %v832 = vunpack.c.l.b16 %v603
        %v833 = vunpack.c.h.b16 %v603
        %v834 = vunpack.c.l.b16 %v604
        %v835 = vunpack.c.h.b16 %v604
        %v836 = vunpack.c.l.b16 %v605
        %v837 = vunpack.c.h.b16 %v605
        %v838 = vunpack.c.l.b16 %v606
        %v839 = vunpack.c.h.b16 %v606
        %v840 = vunpack.c.l.b16 %v607
        %v841 = vunpack.c.h.b16 %v607
        %v842 = vunpack.c.l.b16 %v608
        %v843 = vunpack.c.h.b16 %v608
        %v844 = vunpack.c.l.b16 %v609
        %v845 = vunpack.c.h.b16 %v609
        %v846 = vunpack.c.l.b16 %v610
        %v847 = vunpack.c.h.b16 %v610
        %v848 = vunpack.c.l.b16 %v611
        %v849 = vunpack.c.h.b16 %v611
        %v850 = vunpack.c.l.b16 %v612
        %v851 = vunpack.c.h.b16 %v612
        %v852 = vunpack.c.l.b16 %v613
        %v853 = vunpack.c.h.b16 %v613
        %v854 = vunpack.c.l.b16 %v614
        %v855 = vunpack.c.h.b16 %v614
        %v856 = vunpack.c.l.b16 %v615
        %v857 = vunpack.c.h.b16 %v615
        %v858 = vunpack.c.l.b16 %v616
        %v859 = vunpack.c.h.b16 %v616
        %v860 = vunpack.c.l.b16 %v617
        %v861 = vunpack.c.h.b16 %v617
        %v862 = vunpack.c.l.b16 %v618
        %v863 = vunpack.c.h.b16 %v618
        %v864 = vunpack.c.l.b16 %v619
        %v865 = vunpack.c.h.b16 %v619
        %v866 = vunpack.c.l.b16 %v620
        %v867 = vunpack.c.h.b16 %v620
        %v868 = vunpack.c.l.b16 %v621
        %v869 = vunpack.c.h.b16 %v621
        %v870 = vunpack.c.l.b16 %v622
        %v871 = vunpack.c.h.b16 %v622
        %v872 = vunpack.c.l.b16 %v623
        %v873 = vunpack.c.h.b16 %v623
        %v874 = vunpack.c.l.b16 %v624
        %v875 = vunpack.c.h.b16 %v624
        %v876 = vunpack.c.l.b16 %v625
        %v877 = vunpack.c.h.b16 %v625
        %v878 = vunpack.c.l.b16 %v626
        %v879 = vunpack.c.h.b16 %v626
        %v880 = vunpack.c.l.b16 %v627
        %v881 = vunpack.c.h.b16 %v627
        %v882 = vunpack.c.l.b16 %v628
        %v883 = vunpack.c.h.b16 %v628
        %v884 = vunpack.c.l.b16 %v629
        %v885 = vunpack.c.h.b16 %v629
        %v886 = vpack.c.b16 %v728, %v726
        %v887 = vpack.c.b16 %v729, %v727
        %v888 = vpack.c.b16 %v732, %v730
        %v889 = vpack.c.b16 %v733, %v731
        %v890 = vpack.c.b16 %v736, %v734
        %v891 = vpack.c.b16 %v737, %v735
        %v892 = vpack.c.b16 %v740, %v738
        %v893 = vpack.c.b16 %v741, %v739
        %v894 = vpack.c.b16 %v744, %v742
        %v895 = vpack.c.b16 %v745, %v743
        %v896 = vpack.c.b16 %v748, %v746
        %v897 = vpack.c.b16 %v749, %v747
        %v898 = vpack.c.b16 %v752, %v750
        %v899 = vpack.c.b16 %v753, %v751
        %v900 = vpack.c.b16 %v756, %v754
        %v901 = vpack.c.b16 %v757, %v755
        %v902 = vpack.c.b16 %v760, %v758
        %v903 = vpack.c.b16 %v761, %v759
        %v904 = vpack.c.b16 %v764, %v762
        %v905 = vpack.c.b16 %v765, %v763
        %v906 = vpack.c.b16 %v768, %v766
        %v907 = vpack.c.b16 %v769, %v767
        %v908 = vpack.c.b16 %v772, %v770
        %v909 = vpack.c.b16 %v773, %v771
        %v910 = vpack.c.b16 %v776, %v774
        %v911 = vpack.c.b16 %v777, %v775
        %v912 = vpack.c.b16 %v780, %v778
        %v913 = vpack.c.b16 %v781, %v779
        %v914 = vpack.c.b16 %v784, %v782
        %v915 = vpack.c.b16 %v785, %v783
        %v916 = vpack.c.b16 %v788, %v786
        %v917 = vpack.c.b16 %v789, %v787
        %v918 = vpack.c.b16 %v792, %v790
        %v919 = vpack.c.b16 %v793, %v791
        %v920 = vpack.c.b16 %v796, %v794
        %v921 = vpack.c.b16 %v797, %v795
        %v922 = vpack.c.b16 %v800, %v798
        %v923 = vpack.c.b16 %v801, %v799
        %v924 = vpack.c.b16 %v804, %v802
        %v925 = vpack.c.b16 %v805, %v803
        %v926 = vpack.c.b16 %v808, %v806
        %v927 = vpack.c.b16 %v809, %v807
        %v928 = vpack.c.b16 %v812, %v810
        %v929 = vpack.c.b16 %v813, %v811
        %v930 = vpack.c.b16 %v816, %v814
        %v931 = vpack.c.b16 %v817, %v815
        %v932 = vpack.c.b16 %v820, %v818
        %v933 = vpack.c.b16 %v821, %v819
        %v934 = vpack.c.b16 %v824, %v822
        %v935 = vpack.c.b16 %v825, %v823
        %v936 = vpack.c.b16 %v828, %v826
        %v937 = vpack.c.b16 %v829, %v827
        %v938 = vpack.c.b16 %v832, %v830
        %v939 = vpack.c.b16 %v833, %v831
        %v940 = vpack.c.b16 %v836, %v834
        %v941 = vpack.c.b16 %v837, %v835
        %v942 = vpack.c.b16 %v840, %v838
        %v943 = vpack.c.b16 %v841, %v839
        %v944 = vpack.c.b16 %v844, %v842
        %v945 = vpack.c.b16 %v845, %v843
        %v946 = vpack.c.b16 %v848, %v846
        %v947 = vpack.c.b16 %v849, %v847
        %v948 = vpack.c.b16 %v852, %v850
        %v949 = vpack.c.b16 %v853, %v851
        %v950 = vpack.c.b16 %v856, %v854
        %v951 = vpack.c.b16 %v857, %v855
        %v952 = vpack.c.b16 %v860, %v858
        %v953 = vpack.c.b16 %v861, %v859
        %v954 = vpack.c.b16 %v864, %v862
        %v955 = vpack.c.b16 %v865, %v863
        %v956 = vpack.c.b16 %v868, %v866
        %v957 = vpack.c.b16 %v869, %v867
        %v958 = vpack.c.b16 %v872, %v870
        %v959 = vpack.c.b16 %v873, %v871
        %v960 = vpack.c.b16 %v876, %v874
        %v961 = vpack.c.b16 %v877, %v875
        %v962 = vpack.c.b16 %v880, %v878
        %v963 = vpack.c.b16 %v881, %v879
        %v964 = vpack.c.b16 %v884, %v882
        %v965 = vpack.c.b16 %v885, %v883
        %1046 = vmatprep.subr.bf16.mxu0 %v887
        %1047 = vmatpush1.bf16.msra.mxu0 %v886
        %1048 = vmatprep.subr.bf16.mxu0 %v889
        %1049 = vmatpush1.bf16.msra.mxu0 %v888
        %1050 = vmatprep.subr.bf16.mxu0 %v891
        %1051 = vmatpush1.bf16.msra.mxu0 %v890
        %1052 = vmatprep.subr.bf16.mxu0 %v893
        %1053 = vmatpush1.bf16.msra.mxu0 %v892
        %1054 = vmatprep.subr.bf16.mxu0 %v895
        %1055 = vmatpush1.bf16.msra.mxu0 %v894
        %1056 = vmatprep.subr.bf16.mxu0 %v897
        %1057 = vmatpush1.bf16.msra.mxu0 %v896
        %1058 = vmatprep.subr.bf16.mxu0 %v899
        %1059 = vmatpush1.bf16.msra.mxu0 %v898
        %1060 = vmatprep.subr.bf16.mxu0 %v901
        %1061 = vmatpush1.bf16.msra.mxu0 %v900
        %1062 = vmatprep.subr.bf16.mxu0 %v903
        %1063 = vmatpush1.bf16.msra.mxu0 %v902
        %1064 = vmatprep.subr.bf16.mxu0 %v905
        %1065 = vmatpush1.bf16.msra.mxu0 %v904
        %1066 = vmatprep.subr.bf16.mxu0 %v907
        %1067 = vmatpush1.bf16.msra.mxu0 %v906
        %1068 = vmatprep.subr.bf16.mxu0 %v909
        %1069 = vmatpush1.bf16.msra.mxu0 %v908
        %1070 = vmatprep.subr.bf16.mxu0 %v911
        %1071 = vmatpush1.bf16.msra.mxu0 %v910
        %1072 = vmatprep.subr.bf16.mxu0 %v913
        %1073 = vmatpush1.bf16.msra.mxu0 %v912
        %1074 = vmatprep.subr.bf16.mxu0 %v915
        %1075 = vmatpush1.bf16.msra.mxu0 %v914
        %1076 = vmatprep.subr.bf16.mxu0 %v917
        %1077 = vmatpush1.bf16.msra.mxu0 %v916
        %1078 = vmatprep.mubr.bf16.mxu0 %v546
        %1079 = vmatmul.mubr.bf16.gmra.mrb[0].mxu0 %v545
        %v1080 = vpop.f32.mrb[0].mxu0
        %v1081 = vadd.f32 %v639, %v1080
        %v1082 = vpop.f32.mrb[0].mxu0
        %v1083 = vadd.f32 %v643, %v1082
        %v1084 = vpop.f32.mrb[0].mxu0
        %v1085 = vpop.f32.mrb[0].mxu0
        %1086 = vdwg.mxu0
        %1087 = vmatprep.subr.bf16.mxu0 %v919
        %1088 = vmatpush1.bf16.msra.mxu0 %v918
        %1089 = vmatprep.subr.bf16.mxu0 %v921
        %1090 = vmatpush1.bf16.msra.mxu0 %v920
        %1091 = vmatprep.subr.bf16.mxu0 %v923
        %1092 = vmatpush1.bf16.msra.mxu0 %v922
        %1093 = vmatprep.subr.bf16.mxu0 %v925
        %1094 = vmatpush1.bf16.msra.mxu0 %v924
        %1095 = vmatprep.subr.bf16.mxu0 %v927
        %1096 = vmatpush1.bf16.msra.mxu0 %v926
        %1097 = vmatprep.subr.bf16.mxu0 %v929
        %1098 = vmatpush1.bf16.msra.mxu0 %v928
        %1099 = vmatprep.subr.bf16.mxu0 %v931
        %1100 = vmatpush1.bf16.msra.mxu0 %v930
        %1101 = vmatprep.subr.bf16.mxu0 %v933
        %1102 = vmatpush1.bf16.msra.mxu0 %v932
        %1103 = vmatprep.subr.bf16.mxu0 %v935
        %1104 = vmatpush1.bf16.msra.mxu0 %v934
        %1105 = vmatprep.subr.bf16.mxu0 %v937
        %1106 = vmatpush1.bf16.msra.mxu0 %v936
        %1107 = vmatprep.subr.bf16.mxu0 %v939
        %1108 = vmatpush1.bf16.msra.mxu0 %v938
        %1109 = vmatprep.subr.bf16.mxu0 %v941
        %1110 = vmatpush1.bf16.msra.mxu0 %v940
        %1111 = vmatprep.subr.bf16.mxu0 %v943
        %1112 = vmatpush1.bf16.msra.mxu0 %v942
        %1113 = vmatprep.subr.bf16.mxu0 %v945
        %1114 = vmatpush1.bf16.msra.mxu0 %v944
        %1115 = vmatprep.subr.bf16.mxu0 %v947
        %1116 = vmatpush1.bf16.msra.mxu0 %v946
        %1117 = vmatprep.subr.bf16.mxu0 %v949
        %1118 = vmatpush1.bf16.msra.mxu0 %v948
        %1119 = vmatprep.mubr.bf16.mxu0 %v548
        %1120 = vmatmul.mubr.bf16.gmra.mrb[0].mxu0 %v547
        %v1121 = vpop.f32.mrb[0].mxu0
        %v1122 = vadd.f32 %v1081, %v1121
        %v1123 = vpop.f32.mrb[0].mxu0
        %v1124 = vadd.f32 %v1083, %v1123
        %v1125 = vpop.f32.mrb[0].mxu0
        %v1126 = vpop.f32.mrb[0].mxu0
        %1127 = vdwg.mxu0
        %1128 = vmatprep.subr.bf16.mxu0 %v951
        %1129 = vmatpush1.bf16.msra.mxu0 %v950
        %1130 = vmatprep.subr.bf16.mxu0 %v953
        %1131 = vmatpush1.bf16.msra.mxu0 %v952
        %1132 = vmatprep.subr.bf16.mxu0 %v955
        %1133 = vmatpush1.bf16.msra.mxu0 %v954
        %1134 = vmatprep.subr.bf16.mxu0 %v957
        %1135 = vmatpush1.bf16.msra.mxu0 %v956
        %1136 = vmatprep.subr.bf16.mxu0 %v959
        %1137 = vmatpush1.bf16.msra.mxu0 %v958
        %1138 = vmatprep.subr.bf16.mxu0 %v961
        %1139 = vmatpush1.bf16.msra.mxu0 %v960
        %1140 = vmatprep.subr.bf16.mxu0 %v963
        %1141 = vmatpush1.bf16.msra.mxu0 %v962
        %1142 = vmatprep.subr.bf16.mxu0 %v965
        %1143 = vmatpush1.bf16.msra.mxu0 %v964
        %1144 = vmatprep.subr.bf16.mxu0 0
        %1145 = vmatpush1.bf16.msra.mxu0 0
        %1146 = vmatprep.subr.bf16.mxu0 0
        %1147 = vmatpush1.bf16.msra.mxu0 0
        %1148 = vmatprep.subr.bf16.mxu0 0
        %1149 = vmatpush1.bf16.msra.mxu0 0
        %1150 = vmatprep.subr.bf16.mxu0 0
        %1151 = vmatpush1.bf16.msra.mxu0 0
        %1152 = vmatprep.subr.bf16.mxu0 0
        %1153 = vmatpush1.bf16.msra.mxu0 0
        %1154 = vmatprep.subr.bf16.mxu0 0
        %1155 = vmatpush1.bf16.msra.mxu0 0
        %1156 = vmatprep.subr.bf16.mxu0 0
        %1157 = vmatpush1.bf16.msra.mxu0 0
        %1158 = vmatprep.subr.bf16.mxu0 0
        %1159 = vmatpush1.bf16.msra.mxu0 0
        %1160 = vmatprep.mubr.bf16.mxu0 0
        %1161 = vmatmul.mubr.bf16.gmra.mrb[0].mxu0 %v549
        %v1162 = vpop.f32.mrb[0].mxu0
        %v1163 = vadd.f32 %v1122, %v1162
        %v1164 = vpop.f32.mrb[0].mxu0
        %v1165 = vadd.f32 %v1124, %v1164
        %v1166 = vpop.f32.mrb[0].mxu0
        %v1167 = vpop.f32.mrb[0].mxu0
        %1168 = vdwg.mxu0
        %v1169 = vsub.f32 %v1163, 0.5
        %v1170 = vsub.f32 %v1165, 0.5
        %v1171 = vmax.f32 %v1169, 0.0
        %v1172 = vmax.f32 %v1170, 0.0
        %1173 = vmatprep.subr.bf16.mxu0 %v887
        %1174 = vmatpush1.bf16.msra.mxu0 %v886
        %1175 = vmatprep.subr.bf16.mxu0 %v889
        %1176 = vmatpush1.bf16.msra.mxu0 %v888
        %1177 = vmatprep.subr.bf16.mxu0 %v891
        %1178 = vmatpush1.bf16.msra.mxu0 %v890
        %1179 = vmatprep.subr.bf16.mxu0 %v893
        %1180 = vmatpush1.bf16.msra.mxu0 %v892
        %1181 = vmatprep.subr.bf16.mxu0 %v895
        %1182 = vmatpush1.bf16.msra.mxu0 %v894
        %1183 = vmatprep.subr.bf16.mxu0 %v897
        %1184 = vmatpush1.bf16.msra.mxu0 %v896
        %1185 = vmatprep.subr.bf16.mxu0 %v899
        %1186 = vmatpush1.bf16.msra.mxu0 %v898
        %1187 = vmatprep.subr.bf16.mxu0 %v901
        %1188 = vmatpush1.bf16.msra.mxu0 %v900
        %1189 = vmatprep.subr.bf16.mxu0 %v903
        %1190 = vmatpush1.bf16.msra.mxu0 %v902
        %1191 = vmatprep.subr.bf16.mxu0 %v905
        %1192 = vmatpush1.bf16.msra.mxu0 %v904
        %1193 = vmatprep.subr.bf16.mxu0 %v907
        %1194 = vmatpush1.bf16.msra.mxu0 %v906
        %1195 = vmatprep.subr.bf16.mxu0 %v909
        %1196 = vmatpush1.bf16.msra.mxu0 %v908
        %1197 = vmatprep.subr.bf16.mxu0 %v911
        %1198 = vmatpush1.bf16.msra.mxu0 %v910
        %1199 = vmatprep.subr.bf16.mxu0 %v913
        %1200 = vmatpush1.bf16.msra.mxu0 %v912
        %1201 = vmatprep.subr.bf16.mxu0 %v915
        %1202 = vmatpush1.bf16.msra.mxu0 %v914
        %1203 = vmatprep.subr.bf16.mxu0 %v917
        %1204 = vmatpush1.bf16.msra.mxu0 %v916
        %1205 = vmatprep.mubr.bf16.mxu0 %v548
        %1206 = vmatmul.mubr.bf16.gmra.mrb[0].mxu0 %v547
        %v1207 = vpop.f32.mrb[0].mxu0
        %v1208 = vadd.f32 %v639, %v1207
        %v1209 = vpop.f32.mrb[0].mxu0
        %v1210 = vadd.f32 %v643, %v1209
        %v1211 = vpop.f32.mrb[0].mxu0
        %v1212 = vpop.f32.mrb[0].mxu0
        %1213 = vdwg.mxu0
        %1214 = vmatprep.subr.bf16.mxu0 %v919
        %1215 = vmatpush1.bf16.msra.mxu0 %v918
        %1216 = vmatprep.subr.bf16.mxu0 %v921
        %1217 = vmatpush1.bf16.msra.mxu0 %v920
        %1218 = vmatprep.subr.bf16.mxu0 %v923
        %1219 = vmatpush1.bf16.msra.mxu0 %v922
        %1220 = vmatprep.subr.bf16.mxu0 %v925
        %1221 = vmatpush1.bf16.msra.mxu0 %v924
        %1222 = vmatprep.subr.bf16.mxu0 %v927
        %1223 = vmatpush1.bf16.msra.mxu0 %v926
        %1224 = vmatprep.subr.bf16.mxu0 %v929
        %1225 = vmatpush1.bf16.msra.mxu0 %v928
        %1226 = vmatprep.subr.bf16.mxu0 %v931
        %1227 = vmatpush1.bf16.msra.mxu0 %v930
        %1228 = vmatprep.subr.bf16.mxu0 %v933
        %1229 = vmatpush1.bf16.msra.mxu0 %v932
        %1230 = vmatprep.subr.bf16.mxu0 %v935
        %1231 = vmatpush1.bf16.msra.mxu0 %v934
        %1232 = vmatprep.subr.bf16.mxu0 %v937
        %1233 = vmatpush1.bf16.msra.mxu0 %v936
        %1234 = vmatprep.subr.bf16.mxu0 %v939
        %1235 = vmatpush1.bf16.msra.mxu0 %v938
        %1236 = vmatprep.subr.bf16.mxu0 %v941
        %1237 = vmatpush1.bf16.msra.mxu0 %v940
        %1238 = vmatprep.subr.bf16.mxu0 %v943
        %1239 = vmatpush1.bf16.msra.mxu0 %v942
        %1240 = vmatprep.subr.bf16.mxu0 %v945
        %1241 = vmatpush1.bf16.msra.mxu0 %v944
        %1242 = vmatprep.subr.bf16.mxu0 %v947
        %1243 = vmatpush1.bf16.msra.mxu0 %v946
        %1244 = vmatprep.subr.bf16.mxu0 %v949
        %1245 = vmatpush1.bf16.msra.mxu0 %v948
        %1246 = vmatprep.mubr.bf16.mxu0 %v632
        %1247 = vmatmul.mubr.bf16.gmra.mrb[0].mxu0 %v549
        %v1248 = vpop.f32.mrb[0].mxu0
        %v1249 = vadd.f32 %v1208, %v1248
        %v1250 = vpop.f32.mrb[0].mxu0
        %v1251 = vadd.f32 %v1210, %v1250
        %v1252 = vpop.f32.mrb[0].mxu0
        %v1253 = vpop.f32.mrb[0].mxu0
        %1254 = vdwg.mxu0
        %1255 = vmatprep.subr.bf16.mxu0 %v951
        %1256 = vmatpush1.bf16.msra.mxu0 %v950
        %1257 = vmatprep.subr.bf16.mxu0 %v953
        %1258 = vmatpush1.bf16.msra.mxu0 %v952
        %1259 = vmatprep.subr.bf16.mxu0 %v955
        %1260 = vmatpush1.bf16.msra.mxu0 %v954
        %1261 = vmatprep.subr.bf16.mxu0 %v957
        %1262 = vmatpush1.bf16.msra.mxu0 %v956
        %1263 = vmatprep.subr.bf16.mxu0 %v959
        %1264 = vmatpush1.bf16.msra.mxu0 %v958
        %1265 = vmatprep.subr.bf16.mxu0 %v961
        %1266 = vmatpush1.bf16.msra.mxu0 %v960
        %1267 = vmatprep.subr.bf16.mxu0 %v963
        %1268 = vmatpush1.bf16.msra.mxu0 %v962
        %1269 = vmatprep.subr.bf16.mxu0 %v965
        %1270 = vmatpush1.bf16.msra.mxu0 %v964
        %1271 = vmatprep.subr.bf16.mxu0 0
        %1272 = vmatpush1.bf16.msra.mxu0 0
        %1273 = vmatprep.subr.bf16.mxu0 0
        %1274 = vmatpush1.bf16.msra.mxu0 0
        %1275 = vmatprep.subr.bf16.mxu0 0
        %1276 = vmatpush1.bf16.msra.mxu0 0
        %1277 = vmatprep.subr.bf16.mxu0 0
        %1278 = vmatpush1.bf16.msra.mxu0 0
        %1279 = vmatprep.subr.bf16.mxu0 0
        %1280 = vmatpush1.bf16.msra.mxu0 0
        %1281 = vmatprep.subr.bf16.mxu0 0
        %1282 = vmatpush1.bf16.msra.mxu0 0
        %1283 = vmatprep.subr.bf16.mxu0 0
        %1284 = vmatpush1.bf16.msra.mxu0 0
        %1285 = vmatprep.subr.bf16.mxu0 0
        %1286 = vmatpush1.bf16.msra.mxu0 0
        %1287 = vmatprep.mubr.bf16.mxu0 0
        %1288 = vmatmul.mubr.bf16.gmra.mrb[0].mxu0 %v633
        %v1289 = vpop.f32.mrb[0].mxu0
        %v1290 = vadd.f32 %v1249, %v1289
        %v1291 = vpop.f32.mrb[0].mxu0
        %v1292 = vadd.f32 %v1251, %v1291
        %v1293 = vpop.f32.mrb[0].mxu0
        %v1294 = vpop.f32.mrb[0].mxu0
        %1295 = vdwg.mxu0
        %v1296 = vsub.f32 %v1290, 0.5
        %v1297 = vsub.f32 %v1292, 0.5
        %v1298 = vmax.f32 %v1296, 0.0
        %v1299 = vmax.f32 %v1297, 0.0
        %v1302 = vrot.slane %v1171, 7
        %v1303 = vrot.slane %v1172, 7
        %1306 = vst [vmem:[#allocation2] sm:$0xfe] %v1302
        %1307 = vst [vmem:[#allocation2 + $0x8] sm:$0xfe] %v1303
        %1308 = vst [vmem:[#allocation2 + $0x10] sm:$0x1] %v1302
        %1309 = vst [vmem:[#allocation2 + $0x18] sm:$0x1] %v1303
        %v1312 = vrot.slane %v1298, 5
        %v1313 = vrot.slane %v1299, 5
        %1316 = vst [vmem:[#allocation2 + $0x10] sm:$0xf8] %v1312
        %1317 = vst [vmem:[#allocation2 + $0x18] sm:$0xf8] %v1313
        %1318 = vst [vmem:[#allocation2 + $0x20] sm:$0x7] %v1312
        %1319 = vst [vmem:[#allocation2 + $0x28] sm:$0x7] %v1313
        %v1320 = vld [vmem:[#allocation2] sm:$0xff]
        %v1321 = vld [vmem:[#allocation2 + $0x8] sm:$0xff]
        %v1322 = vld [vmem:[#allocation2 + $0x10] sm:$0xfc]
        %v1323 = vld [vmem:[#allocation2 + $0x18] sm:$0xfc]
        %v1324 = vld [vmem:[#allocation2 + $0x20] sm:$0x3]
        %v1325 = vld [vmem:[#allocation2 + $0x28] sm:$0x3]
        %v1326 = vld [vmem:[#allocation2] sm:$0xfe]
        %v1327 = vld [vmem:[#allocation2 + $0x8] sm:$0xfe]
        %v1328 = vld [vmem:[#allocation2 + $0x10] sm:$0x1]
        %v1329 = vld [vmem:[#allocation2 + $0x18] sm:$0x1]
        %v1330 = vld [vmem:[#allocation2 + $0x10] sm:$0xf8]
        %v1331 = vld [vmem:[#allocation2 + $0x18] sm:$0xf8]
        %v1332 = vld [vmem:[#allocation2 + $0x20] sm:$0x7]
        %v1333 = vld [vmem:[#allocation2 + $0x28] sm:$0x7]
        %v1334 = vld [vmem:[#allocation2] sm:$0xfc]
        %v1335 = vld [vmem:[#allocation2 + $0x8] sm:$0xfc]
        %v1336 = vld [vmem:[#allocation2 + $0x10] sm:$0x3]
        %v1337 = vld [vmem:[#allocation2 + $0x18] sm:$0x3]
        %vm1342 = vcmask 1045504
        %v1343 = vrot.slane %v1322, 2
        %v1344 = vrot.slane %v1324, 2
        %v1345 = vsel %vm1342, %v1343, %v1344
        %v1346 = vrot.slane %v1323, 2
        %v1347 = vrot.slane %v1325, 2
        %v1348 = vsel %vm1342, %v1346, %v1347
        %vm1355 = vcmask 1046528
        %v1356 = vrot.slane %v1326, 1
        %v1357 = vrot.slane %v1328, 1
        %v1358 = vsel %vm1355, %v1356, %v1357
        %v1359 = vrot.slane %v1327, 1
        %v1360 = vrot.slane %v1329, 1
        %v1361 = vsel %vm1355, %v1359, %v1360
        %vm1368 = vcmask 1044480
        %v1369 = vrot.slane %v1330, 3
        %v1370 = vrot.slane %v1332, 3
        %v1371 = vsel %vm1368, %v1369, %v1370
        %v1372 = vrot.slane %v1331, 3
        %v1373 = vrot.slane %v1333, 3
        %v1374 = vsel %vm1368, %v1372, %v1373
        %v1381 = vrot.slane %v1334, 2
        %v1382 = vrot.slane %v1336, 2
        %v1383 = vsel %vm1342, %v1381, %v1382
        %v1384 = vrot.slane %v1335, 2
        %v1385 = vrot.slane %v1337, 2
        %v1386 = vsel %vm1342, %v1384, %v1385
        %v1389 = vpack.c.bf16 %v1320, %v1320
        %v1390 = vpack.c.bf16 %v1321, %v1321
        %v1391 = vpack.c.bf16 %v1345, %v1345
        %v1392 = vpack.c.bf16 %v1348, %v1348
        %v1393 = vpack.c.bf16 %v1358, %v1358
        %v1394 = vpack.c.bf16 %v1361, %v1361
        %v1395 = vpack.c.bf16 %v1371, %v1371
        %v1396 = vpack.c.bf16 %v1374, %v1374
        %v1397 = vpack.c.bf16 %v1383, %v1383
        %v1398 = vpack.c.bf16 %v1386, %v1386
        %v1399 = vld [vmem:[#allocation9] sm:$0xf]
        %v1400 = vld [vmem:[#allocation9 + $0x4] sm:$0xf]
        %v1401 = vld [vmem:[#allocation9 + $0x8] sm:$0xf]
        %v1402 = vld [vmem:[#allocation9 + $0xc] sm:$0xf]
        %v1403 = vld [vmem:[#allocation9 + $0x10] sm:$0xf]
        %v1404 = vld [vmem:[#allocation9 + $0x14] sm:$0xf]
        %v1405 = vld [vmem:[#allocation9 + $0x18] sm:$0xf]
        %v1406 = vld [vmem:[#allocation9 + $0x1c] sm:$0xf]
        %v1407 = vld [vmem:[#allocation9 + $0x20] sm:$0xf]
        %v1408 = vld [vmem:[#allocation9 + $0x24] sm:$0xf]
        %v1409 = vld [vmem:[#allocation9 + $0x28] sm:$0xf]
        %v1410 = vld [vmem:[#allocation9 + $0x2c] sm:$0xf]
        %v1411 = vld [vmem:[#allocation9 + $0x30] sm:$0xf]
        %v1412 = vld [vmem:[#allocation9 + $0x34] sm:$0xf]
        %v1413 = vld [vmem:[#allocation9 + $0x38] sm:$0xf]
        %v1414 = vld [vmem:[#allocation9 + $0x3c] sm:$0xf]
        %v1415 = vld [vmem:[#allocation9 + $0x40] sm:$0xf]
        %v1416 = vld [vmem:[#allocation9 + $0x44] sm:$0xf]
        %v1417 = vld [vmem:[#allocation9 + $0x48] sm:$0xf]
        %v1418 = vld [vmem:[#allocation9 + $0x4c] sm:$0xf]
        %v1419 = vld [vmem:[#allocation9 + $0x50] sm:$0xf]
        %v1420 = vld [vmem:[#allocation9 + $0x54] sm:$0xf]
        %v1421 = vld [vmem:[#allocation9 + $0x58] sm:$0xf]
        %v1422 = vld [vmem:[#allocation9 + $0x5c] sm:$0xf]
        %v1423 = vld [vmem:[#allocation9 + $0x60] sm:$0xf]
        %v1424 = vld [vmem:[#allocation9 + $0x64] sm:$0xf]
        %v1425 = vld [vmem:[#allocation9 + $0x68] sm:$0xf]
        %v1426 = vld [vmem:[#allocation9 + $0x6c] sm:$0xf]
        %v1427 = vld [vmem:[#allocation9 + $0x70] sm:$0xf]
        %v1428 = vld [vmem:[#allocation9 + $0x74] sm:$0xf]
        %v1429 = vld [vmem:[#allocation9 + $0x78] sm:$0xf]
        %v1430 = vld [vmem:[#allocation9 + $0x7c] sm:$0xf]
        %v1431 = vld [vmem:[#allocation9 + $0x80] sm:$0xf]
        %v1432 = vld [vmem:[#allocation9 + $0x84] sm:$0xf]
        %v1433 = vld [vmem:[#allocation9 + $0x88] sm:$0xf]
        %v1434 = vld [vmem:[#allocation9 + $0x8c] sm:$0xf]
        %v1435 = vld [vmem:[#allocation9 + $0x90] sm:$0xf]
        %v1436 = vld [vmem:[#allocation9 + $0x94] sm:$0xf]
        %v1437 = vld [vmem:[#allocation9 + $0x98] sm:$0xf]
        %v1438 = vld [vmem:[#allocation9 + $0x9c] sm:$0xf]
        %v1439 = vld [vmem:[#allocation9 + $0xa0] sm:$0xf]
        %v1440 = vld [vmem:[#allocation9 + $0xa4] sm:$0xf]
        %v1441 = vld [vmem:[#allocation9 + $0xa8] sm:$0xf]
        %v1442 = vld [vmem:[#allocation9 + $0xac] sm:$0xf]
        %v1443 = vld [vmem:[#allocation9 + $0xb0] sm:$0xf]
        %v1444 = vld [vmem:[#allocation9 + $0xb4] sm:$0xf]
        %v1445 = vld [vmem:[#allocation9 + $0xb8] sm:$0xf]
        %v1446 = vld [vmem:[#allocation9 + $0xbc] sm:$0xf]
        %v1447 = vld [vmem:[#allocation9 + $0xc0] sm:$0xf]
        %v1448 = vld [vmem:[#allocation9 + $0xc4] sm:$0xf]
        %v1449 = vld [vmem:[#allocation9 + $0xc8] sm:$0xf]
        %v1450 = vld [vmem:[#allocation9 + $0xcc] sm:$0xf]
        %v1451 = vld [vmem:[#allocation9 + $0xd0] sm:$0xf]
        %v1452 = vld [vmem:[#allocation9 + $0xd4] sm:$0xf]
        %v1453 = vld [vmem:[#allocation9 + $0xd8] sm:$0xf]
        %v1454 = vld [vmem:[#allocation9 + $0xdc] sm:$0xf]
        %v1455 = vld [vmem:[#allocation9 + $0xe0] sm:$0xf]
        %v1456 = vld [vmem:[#allocation9 + $0xe4] sm:$0xf]
        %v1457 = vld [vmem:[#allocation9 + $0xe8] sm:$0xf]
        %v1458 = vld [vmem:[#allocation9 + $0xec] sm:$0xf]
        %v1459 = vld [vmem:[#allocation9 + $0xf0] sm:$0xf]
        %v1460 = vld [vmem:[#allocation9 + $0xf4] sm:$0xf]
        %v1461 = vld [vmem:[#allocation9 + $0xf8] sm:$0xf]
        %v1462 = vld [vmem:[#allocation9 + $0xfc] sm:$0xf]
        %v1463 = vld [vmem:[#allocation9 + $0x100] sm:$0xf]
        %v1464 = vld [vmem:[#allocation9 + $0x104] sm:$0xf]
        %v1465 = vld [vmem:[#allocation9 + $0x108] sm:$0xf]
        %v1466 = vld [vmem:[#allocation9 + $0x10c] sm:$0xf]
        %v1467 = vld [vmem:[#allocation9 + $0x110] sm:$0xf]
        %v1468 = vld [vmem:[#allocation9 + $0x114] sm:$0xf]
        %v1469 = vld [vmem:[#allocation9 + $0x118] sm:$0xf]
        %v1470 = vld [vmem:[#allocation9 + $0x11c] sm:$0xf]
        %v1471 = vld [vmem:[#allocation9 + $0x120] sm:$0xf]
        %v1472 = vld [vmem:[#allocation9 + $0x124] sm:$0xf]
        %v1473 = vld [vmem:[#allocation9 + $0x128] sm:$0xf]
        %v1474 = vld [vmem:[#allocation9 + $0x12c] sm:$0xf]
        %v1475 = vld [vmem:[#allocation9 + $0x130] sm:$0xf]
        %v1476 = vld [vmem:[#allocation9 + $0x134] sm:$0xf]
        %v1477 = vld [vmem:[#allocation9 + $0x138] sm:$0xf]
        %v1478 = vld [vmem:[#allocation9 + $0x13c] sm:$0xf]
        %v1479 = vld [vmem:[#allocation9 + $0x140] sm:$0xf]
        %v1480 = vld [vmem:[#allocation9 + $0x144] sm:$0xf]
        %v1481 = vld [vmem:[#allocation9 + $0x148] sm:$0xf]
        %v1482 = vld [vmem:[#allocation9 + $0x14c] sm:$0xf]
        %v1483 = vld [vmem:[#allocation9 + $0x150] sm:$0xf]
        %v1484 = vld [vmem:[#allocation9 + $0x154] sm:$0xf]
        %v1485 = vld [vmem:[#allocation9 + $0x158] sm:$0xf]
        %v1486 = vld [vmem:[#allocation9 + $0x15c] sm:$0xf]
        %v1487 = vld [vmem:[#allocation9 + $0x160] sm:$0xf]
        %v1488 = vld [vmem:[#allocation9 + $0x164] sm:$0xf]
        %v1489 = vld [vmem:[#allocation9 + $0x168] sm:$0xf]
        %v1490 = vld [vmem:[#allocation9 + $0x16c] sm:$0xf]
        %v1491 = vld [vmem:[#allocation9 + $0x170] sm:$0xf]
        %v1492 = vld [vmem:[#allocation9 + $0x174] sm:$0xf]
        %v1493 = vld [vmem:[#allocation9 + $0x178] sm:$0xf]
        %v1494 = vld [vmem:[#allocation9 + $0x17c] sm:$0xf]
        %v1495 = vld [vmem:[#allocation9 + $0x180] sm:$0xf]
        %v1496 = vld [vmem:[#allocation9 + $0x184] sm:$0xf]
        %v1497 = vld [vmem:[#allocation9 + $0x188] sm:$0xf]
        %v1498 = vld [vmem:[#allocation9 + $0x18c] sm:$0xf]
        %v1499 = vld [vmem:[#allocation9 + $0x190] sm:$0xf]
        %v1500 = vld [vmem:[#allocation9 + $0x194] sm:$0xf]
        %v1501 = vld [vmem:[#allocation9 + $0x198] sm:$0xf]
        %v1502 = vld [vmem:[#allocation9 + $0x19c] sm:$0xf]
        %v1503 = vld [vmem:[#allocation9 + $0x1a0] sm:$0xf]
        %v1504 = vld [vmem:[#allocation9 + $0x1a4] sm:$0xf]
        %v1505 = vld [vmem:[#allocation9 + $0x1a8] sm:$0xf]
        %v1506 = vld [vmem:[#allocation9 + $0x1ac] sm:$0xf]
        %v1507 = vld [vmem:[#allocation9 + $0x1b0] sm:$0xf]
        %v1508 = vld [vmem:[#allocation9 + $0x1b4] sm:$0xf]
        %v1509 = vld [vmem:[#allocation9 + $0x1b8] sm:$0xf]
        %v1510 = vld [vmem:[#allocation9 + $0x1bc] sm:$0xf]
        %v1511 = vld [vmem:[#allocation9 + $0x1c0] sm:$0xf]
        %v1512 = vld [vmem:[#allocation9 + $0x1c4] sm:$0xf]
        %v1513 = vld [vmem:[#allocation9 + $0x1c8] sm:$0xf]
        %v1514 = vld [vmem:[#allocation9 + $0x1cc] sm:$0xf]
        %v1515 = vld [vmem:[#allocation9 + $0x1d0] sm:$0xf]
        %v1516 = vld [vmem:[#allocation9 + $0x1d4] sm:$0xf]
        %v1517 = vld [vmem:[#allocation9 + $0x1d8] sm:$0xf]
        %v1518 = vld [vmem:[#allocation9 + $0x1dc] sm:$0xf]
        %v1519 = vld [vmem:[#allocation9 + $0x1e0] sm:$0xf]
        %v1520 = vld [vmem:[#allocation9 + $0x1e4] sm:$0xf]
        %v1521 = vld [vmem:[#allocation9 + $0x1e8] sm:$0xf]
        %v1522 = vld [vmem:[#allocation9 + $0x1ec] sm:$0xf]
        %v1523 = vld [vmem:[#allocation9 + $0x1f0] sm:$0xf]
        %v1524 = vld [vmem:[#allocation9 + $0x1f4] sm:$0xf]
        %v1525 = vld [vmem:[#allocation9 + $0x1f8] sm:$0xf]
        %v1526 = vld [vmem:[#allocation9 + $0x1fc] sm:$0xf]
        %v1527 = vld [vmem:[#allocation9 + $0x200] sm:$0xf]
        %v1528 = vld [vmem:[#allocation9 + $0x204] sm:$0xf]
        %v1529 = vld [vmem:[#allocation9 + $0x208] sm:$0xf]
        %v1530 = vld [vmem:[#allocation9 + $0x20c] sm:$0xf]
        %v1531 = vld [vmem:[#allocation9 + $0x210] sm:$0xf]
        %v1532 = vld [vmem:[#allocation9 + $0x214] sm:$0xf]
        %v1533 = vld [vmem:[#allocation9 + $0x218] sm:$0xf]
        %v1534 = vld [vmem:[#allocation9 + $0x21c] sm:$0xf]
        %v1535 = vld [vmem:[#allocation9 + $0x220] sm:$0xf]
        %v1536 = vld [vmem:[#allocation9 + $0x224] sm:$0xf]
        %v1537 = vld [vmem:[#allocation9 + $0x228] sm:$0xf]
        %v1538 = vld [vmem:[#allocation9 + $0x22c] sm:$0xf]
        %v1539 = vld [vmem:[#allocation9 + $0x230] sm:$0xf]
        %v1540 = vld [vmem:[#allocation9 + $0x234] sm:$0xf]
        %v1541 = vld [vmem:[#allocation9 + $0x238] sm:$0xf]
        %v1542 = vld [vmem:[#allocation9 + $0x23c] sm:$0xf]
        %v1543 = vld [vmem:[#allocation9 + $0x240] sm:$0xf]
        %v1544 = vld [vmem:[#allocation9 + $0x244] sm:$0xf]
        %v1545 = vld [vmem:[#allocation9 + $0x248] sm:$0xf]
        %v1546 = vld [vmem:[#allocation9 + $0x24c] sm:$0xf]
        %v1547 = vld [vmem:[#allocation9 + $0x250] sm:$0xf]
        %v1548 = vld [vmem:[#allocation9 + $0x254] sm:$0xf]
        %v1549 = vld [vmem:[#allocation9 + $0x258] sm:$0xf]
        %v1550 = vld [vmem:[#allocation9 + $0x25c] sm:$0xf]
        %v1551 = vld [vmem:[#allocation9 + $0x260] sm:$0xf]
        %v1552 = vld [vmem:[#allocation9 + $0x264] sm:$0xf]
        %v1553 = vld [vmem:[#allocation9 + $0x268] sm:$0xf]
        %v1554 = vld [vmem:[#allocation9 + $0x26c] sm:$0xf]
        %v1555 = vld [vmem:[#allocation9 + $0x270] sm:$0xf]
        %v1556 = vld [vmem:[#allocation9 + $0x274] sm:$0xf]
        %v1557 = vld [vmem:[#allocation9 + $0x278] sm:$0xf]
        %v1558 = vld [vmem:[#allocation9 + $0x27c] sm:$0xf]
        %v1559 = vld [vmem:[#allocation10] sm:$0x1]
        %v1561 = vlaneseq
        %v1562 = vshrl.u32 %v1561, 7
        %v1563 = vsub.s32 0, %v1562
        %v1564 = vrot.slane %v1559, %v1563
        %v1726 = vunpack.c.l.b16 %v1399
        %v1727 = vunpack.c.l.b16 %v1400
        %v1728 = vunpack.c.l.b16 %v1401
        %v1729 = vunpack.c.l.b16 %v1402
        %v1730 = vunpack.c.l.b16 %v1403
        %v1731 = vunpack.c.l.b16 %v1404
        %v1732 = vunpack.c.l.b16 %v1405
        %v1733 = vunpack.c.l.b16 %v1406
        %v1734 = vunpack.c.l.b16 %v1407
        %v1735 = vunpack.c.l.b16 %v1408
        %v1736 = vunpack.c.l.b16 %v1409
        %v1737 = vunpack.c.l.b16 %v1410
        %v1738 = vunpack.c.l.b16 %v1411
        %v1739 = vunpack.c.l.b16 %v1412
        %v1740 = vunpack.c.l.b16 %v1413
        %v1741 = vunpack.c.l.b16 %v1414
        %v1742 = vunpack.c.l.b16 %v1415
        %v1743 = vunpack.c.l.b16 %v1416
        %v1744 = vunpack.c.l.b16 %v1417
        %v1745 = vunpack.c.l.b16 %v1418
        %v1746 = vunpack.c.l.b16 %v1419
        %v1747 = vunpack.c.l.b16 %v1420
        %v1748 = vunpack.c.l.b16 %v1421
        %v1749 = vunpack.c.l.b16 %v1422
        %v1750 = vunpack.c.l.b16 %v1423
        %v1751 = vunpack.c.l.b16 %v1424
        %v1752 = vunpack.c.l.b16 %v1425
        %v1753 = vunpack.c.l.b16 %v1426
        %v1754 = vunpack.c.l.b16 %v1427
        %v1755 = vunpack.c.l.b16 %v1428
        %v1756 = vunpack.c.l.b16 %v1429
        %v1757 = vunpack.c.l.b16 %v1430
        %v1758 = vunpack.c.l.b16 %v1431
        %v1759 = vunpack.c.l.b16 %v1432
        %v1760 = vunpack.c.l.b16 %v1433
        %v1761 = vunpack.c.l.b16 %v1434
        %v1762 = vunpack.c.l.b16 %v1435
        %v1763 = vunpack.c.l.b16 %v1436
        %v1764 = vunpack.c.l.b16 %v1437
        %v1765 = vunpack.c.l.b16 %v1438
        %v1766 = vunpack.c.l.b16 %v1439
        %v1767 = vunpack.c.l.b16 %v1440
        %v1768 = vunpack.c.l.b16 %v1441
        %v1769 = vunpack.c.l.b16 %v1442
        %v1770 = vunpack.c.l.b16 %v1443
        %v1771 = vunpack.c.l.b16 %v1444
        %v1772 = vunpack.c.l.b16 %v1445
        %v1773 = vunpack.c.l.b16 %v1446
        %v1774 = vunpack.c.l.b16 %v1447
        %v1775 = vunpack.c.l.b16 %v1448
        %v1776 = vunpack.c.l.b16 %v1449
        %v1777 = vunpack.c.l.b16 %v1450
        %v1778 = vunpack.c.l.b16 %v1451
        %v1779 = vunpack.c.l.b16 %v1452
        %v1780 = vunpack.c.l.b16 %v1453
        %v1781 = vunpack.c.l.b16 %v1454
        %v1782 = vunpack.c.l.b16 %v1455
        %v1783 = vunpack.c.l.b16 %v1456
        %v1784 = vunpack.c.l.b16 %v1457
        %v1785 = vunpack.c.l.b16 %v1458
        %v1786 = vunpack.c.l.b16 %v1459
        %v1787 = vunpack.c.l.b16 %v1460
        %v1788 = vunpack.c.l.b16 %v1461
        %v1789 = vunpack.c.l.b16 %v1462
        %v1790 = vunpack.c.l.b16 %v1463
        %v1791 = vunpack.c.l.b16 %v1464
        %v1792 = vunpack.c.l.b16 %v1465
        %v1793 = vunpack.c.l.b16 %v1466
        %v1794 = vunpack.c.l.b16 %v1467
        %v1795 = vunpack.c.l.b16 %v1468
        %v1796 = vunpack.c.l.b16 %v1469
        %v1797 = vunpack.c.l.b16 %v1470
        %v1798 = vunpack.c.l.b16 %v1471
        %v1799 = vunpack.c.l.b16 %v1472
        %v1800 = vunpack.c.l.b16 %v1473
        %v1801 = vunpack.c.l.b16 %v1474
        %v1802 = vunpack.c.l.b16 %v1475
        %v1803 = vunpack.c.l.b16 %v1476
        %v1804 = vunpack.c.l.b16 %v1477
        %v1805 = vunpack.c.l.b16 %v1478
        %v1806 = vunpack.c.l.b16 %v1479
        %v1807 = vunpack.c.l.b16 %v1480
        %v1808 = vunpack.c.l.b16 %v1481
        %v1809 = vunpack.c.l.b16 %v1482
        %v1810 = vunpack.c.l.b16 %v1483
        %v1811 = vunpack.c.l.b16 %v1484
        %v1812 = vunpack.c.l.b16 %v1485
        %v1813 = vunpack.c.l.b16 %v1486
        %v1814 = vunpack.c.l.b16 %v1487
        %v1815 = vunpack.c.l.b16 %v1488
        %v1816 = vunpack.c.l.b16 %v1489
        %v1817 = vunpack.c.l.b16 %v1490
        %v1818 = vunpack.c.l.b16 %v1491
        %v1819 = vunpack.c.l.b16 %v1492
        %v1820 = vunpack.c.l.b16 %v1493
        %v1821 = vunpack.c.l.b16 %v1494
        %v1822 = vunpack.c.l.b16 %v1495
        %v1823 = vunpack.c.l.b16 %v1496
        %v1824 = vunpack.c.l.b16 %v1497
        %v1825 = vunpack.c.l.b16 %v1498
        %v1826 = vunpack.c.l.b16 %v1499
        %v1827 = vunpack.c.l.b16 %v1500
        %v1828 = vunpack.c.l.b16 %v1501
        %v1829 = vunpack.c.l.b16 %v1502
        %v1830 = vunpack.c.l.b16 %v1503
        %v1831 = vunpack.c.l.b16 %v1504
        %v1832 = vunpack.c.l.b16 %v1505
        %v1833 = vunpack.c.l.b16 %v1506
        %v1834 = vunpack.c.l.b16 %v1507
        %v1835 = vunpack.c.l.b16 %v1508
        %v1836 = vunpack.c.l.b16 %v1509
        %v1837 = vunpack.c.l.b16 %v1510
        %v1838 = vunpack.c.l.b16 %v1511
        %v1839 = vunpack.c.l.b16 %v1512
        %v1840 = vunpack.c.l.b16 %v1513
        %v1841 = vunpack.c.l.b16 %v1514
        %v1842 = vunpack.c.l.b16 %v1515
        %v1843 = vunpack.c.l.b16 %v1516
        %v1844 = vunpack.c.l.b16 %v1517
        %v1845 = vunpack.c.l.b16 %v1518
        %v1846 = vunpack.c.l.b16 %v1519
        %v1847 = vunpack.c.l.b16 %v1520
        %v1848 = vunpack.c.l.b16 %v1521
        %v1849 = vunpack.c.l.b16 %v1522
        %v1850 = vunpack.c.l.b16 %v1523
        %v1851 = vunpack.c.l.b16 %v1524
        %v1852 = vunpack.c.l.b16 %v1525
        %v1853 = vunpack.c.l.b16 %v1526
        %v1854 = vunpack.c.l.b16 %v1527
        %v1855 = vunpack.c.l.b16 %v1528
        %v1856 = vunpack.c.l.b16 %v1529
        %v1857 = vunpack.c.l.b16 %v1530
        %v1858 = vunpack.c.l.b16 %v1531
        %v1859 = vunpack.c.l.b16 %v1532
        %v1860 = vunpack.c.l.b16 %v1533
        %v1861 = vunpack.c.l.b16 %v1534
        %v1862 = vunpack.c.l.b16 %v1535
        %v1863 = vunpack.c.l.b16 %v1536
        %v1864 = vunpack.c.l.b16 %v1537
        %v1865 = vunpack.c.l.b16 %v1538
        %v1866 = vunpack.c.l.b16 %v1539
        %v1867 = vunpack.c.l.b16 %v1540
        %v1868 = vunpack.c.l.b16 %v1541
        %v1869 = vunpack.c.l.b16 %v1542
        %v1870 = vunpack.c.l.b16 %v1543
        %v1871 = vunpack.c.l.b16 %v1544
        %v1872 = vunpack.c.l.b16 %v1545
        %v1873 = vunpack.c.l.b16 %v1546
        %v1874 = vunpack.c.l.b16 %v1547
        %v1875 = vunpack.c.l.b16 %v1548
        %v1876 = vunpack.c.l.b16 %v1549
        %v1877 = vunpack.c.l.b16 %v1550
        %v1878 = vunpack.c.l.b16 %v1551
        %v1879 = vunpack.c.l.b16 %v1552
        %v1880 = vunpack.c.l.b16 %v1553
        %v1881 = vunpack.c.l.b16 %v1554
        %v1882 = vunpack.c.l.b16 %v1555
        %v1883 = vunpack.c.l.b16 %v1556
        %v1884 = vunpack.c.l.b16 %v1557
        %v1885 = vunpack.c.l.b16 %v1558
        %v1886 = vpack.c.b16 %v1727, %v1726
        %v1887 = vpack.c.b16 %v1729, %v1728
        %v1888 = vpack.c.b16 %v1731, %v1730
        %v1889 = vpack.c.b16 %v1733, %v1732
        %v1890 = vpack.c.b16 %v1735, %v1734
        %v1891 = vpack.c.b16 %v1737, %v1736
        %v1892 = vpack.c.b16 %v1739, %v1738
        %v1893 = vpack.c.b16 %v1741, %v1740
        %v1894 = vpack.c.b16 %v1743, %v1742
        %v1895 = vpack.c.b16 %v1745, %v1744
        %v1896 = vpack.c.b16 %v1747, %v1746
        %v1897 = vpack.c.b16 %v1749, %v1748
        %v1898 = vpack.c.b16 %v1751, %v1750
        %v1899 = vpack.c.b16 %v1753, %v1752
        %v1900 = vpack.c.b16 %v1755, %v1754
        %v1901 = vpack.c.b16 %v1757, %v1756
        %v1902 = vpack.c.b16 %v1759, %v1758
        %v1903 = vpack.c.b16 %v1761, %v1760
        %v1904 = vpack.c.b16 %v1763, %v1762
        %v1905 = vpack.c.b16 %v1765, %v1764
        %v1906 = vpack.c.b16 %v1767, %v1766
        %v1907 = vpack.c.b16 %v1769, %v1768
        %v1908 = vpack.c.b16 %v1771, %v1770
        %v1909 = vpack.c.b16 %v1773, %v1772
        %v1910 = vpack.c.b16 %v1775, %v1774
        %v1911 = vpack.c.b16 %v1777, %v1776
        %v1912 = vpack.c.b16 %v1779, %v1778
        %v1913 = vpack.c.b16 %v1781, %v1780
        %v1914 = vpack.c.b16 %v1783, %v1782
        %v1915 = vpack.c.b16 %v1785, %v1784
        %v1916 = vpack.c.b16 %v1787, %v1786
        %v1917 = vpack.c.b16 %v1789, %v1788
        %v1918 = vpack.c.b16 %v1791, %v1790
        %v1919 = vpack.c.b16 %v1793, %v1792
        %v1920 = vpack.c.b16 %v1795, %v1794
        %v1921 = vpack.c.b16 %v1797, %v1796
        %v1922 = vpack.c.b16 %v1799, %v1798
        %v1923 = vpack.c.b16 %v1801, %v1800
        %v1924 = vpack.c.b16 %v1803, %v1802
        %v1925 = vpack.c.b16 %v1805, %v1804
        %v1926 = vpack.c.b16 %v1807, %v1806
        %v1927 = vpack.c.b16 %v1809, %v1808
        %v1928 = vpack.c.b16 %v1811, %v1810
        %v1929 = vpack.c.b16 %v1813, %v1812
        %v1930 = vpack.c.b16 %v1815, %v1814
        %v1931 = vpack.c.b16 %v1817, %v1816
        %v1932 = vpack.c.b16 %v1819, %v1818
        %v1933 = vpack.c.b16 %v1821, %v1820
        %v1934 = vpack.c.b16 %v1823, %v1822
        %v1935 = vpack.c.b16 %v1825, %v1824
        %v1936 = vpack.c.b16 %v1827, %v1826
        %v1937 = vpack.c.b16 %v1829, %v1828
        %v1938 = vpack.c.b16 %v1831, %v1830
        %v1939 = vpack.c.b16 %v1833, %v1832
        %v1940 = vpack.c.b16 %v1835, %v1834
        %v1941 = vpack.c.b16 %v1837, %v1836
        %v1942 = vpack.c.b16 %v1839, %v1838
        %v1943 = vpack.c.b16 %v1841, %v1840
        %v1944 = vpack.c.b16 %v1843, %v1842
        %v1945 = vpack.c.b16 %v1845, %v1844
        %v1946 = vpack.c.b16 %v1847, %v1846
        %v1947 = vpack.c.b16 %v1849, %v1848
        %v1948 = vpack.c.b16 %v1851, %v1850
        %v1949 = vpack.c.b16 %v1853, %v1852
        %v1950 = vpack.c.b16 %v1855, %v1854
        %v1951 = vpack.c.b16 %v1857, %v1856
        %v1952 = vpack.c.b16 %v1859, %v1858
        %v1953 = vpack.c.b16 %v1861, %v1860
        %v1954 = vpack.c.b16 %v1863, %v1862
        %v1955 = vpack.c.b16 %v1865, %v1864
        %v1956 = vpack.c.b16 %v1867, %v1866
        %v1957 = vpack.c.b16 %v1869, %v1868
        %v1958 = vpack.c.b16 %v1871, %v1870
        %v1959 = vpack.c.b16 %v1873, %v1872
        %v1960 = vpack.c.b16 %v1875, %v1874
        %v1961 = vpack.c.b16 %v1877, %v1876
        %v1962 = vpack.c.b16 %v1879, %v1878
        %v1963 = vpack.c.b16 %v1881, %v1880
        %v1964 = vpack.c.b16 %v1883, %v1882
        %v1965 = vpack.c.b16 %v1885, %v1884
        %2046 = vmatprep.subr.bf16.mxu0 0
        %2047 = vmatpush1.bf16.msra.mxu0 %v1886
        %2048 = vmatprep.subr.bf16.mxu0 0
        %2049 = vmatpush1.bf16.msra.mxu0 %v1887
        %2050 = vmatprep.subr.bf16.mxu0 0
        %2051 = vmatpush1.bf16.msra.mxu0 %v1888
        %2052 = vmatprep.subr.bf16.mxu0 0
        %2053 = vmatpush1.bf16.msra.mxu0 %v1889
        %2054 = vmatprep.subr.bf16.mxu0 0
        %2055 = vmatpush1.bf16.msra.mxu0 %v1890
        %2056 = vmatprep.subr.bf16.mxu0 0
        %2057 = vmatpush1.bf16.msra.mxu0 %v1891
        %2058 = vmatprep.subr.bf16.mxu0 0
        %2059 = vmatpush1.bf16.msra.mxu0 %v1892
        %2060 = vmatprep.subr.bf16.mxu0 0
        %2061 = vmatpush1.bf16.msra.mxu0 %v1893
        %2062 = vmatprep.subr.bf16.mxu0 0
        %2063 = vmatpush1.bf16.msra.mxu0 %v1894
        %2064 = vmatprep.subr.bf16.mxu0 0
        %2065 = vmatpush1.bf16.msra.mxu0 %v1895
        %2066 = vmatprep.subr.bf16.mxu0 0
        %2067 = vmatpush1.bf16.msra.mxu0 %v1896
        %2068 = vmatprep.subr.bf16.mxu0 0
        %2069 = vmatpush1.bf16.msra.mxu0 %v1897
        %2070 = vmatprep.subr.bf16.mxu0 0
        %2071 = vmatpush1.bf16.msra.mxu0 %v1898
        %2072 = vmatprep.subr.bf16.mxu0 0
        %2073 = vmatpush1.bf16.msra.mxu0 %v1899
        %2074 = vmatprep.subr.bf16.mxu0 0
        %2075 = vmatpush1.bf16.msra.mxu0 %v1900
        %2076 = vmatprep.subr.bf16.mxu0 0
        %2077 = vmatpush1.bf16.msra.mxu0 %v1901
        %2078 = vmatprep.mubr.bf16.mxu0 %v1390
        %2079 = vmatmul.mubr.bf16.gmra.mrb[0].mxu0 %v1389
        %v2080 = vpop.f32.mrb[0].mxu0
        %v2081 = vadd.f32 %v1564, %v2080
        %v2082 = vpop.f32.mrb[0].mxu0
        %v2083 = vpop.f32.mrb[0].mxu0
        %v2084 = vpop.f32.mrb[0].mxu0
        %2085 = vdwg.mxu0
        %2086 = vmatprep.subr.bf16.mxu0 0
        %2087 = vmatpush1.bf16.msra.mxu0 %v1902
        %2088 = vmatprep.subr.bf16.mxu0 0
        %2089 = vmatpush1.bf16.msra.mxu0 %v1903
        %2090 = vmatprep.subr.bf16.mxu0 0
        %2091 = vmatpush1.bf16.msra.mxu0 %v1904
        %2092 = vmatprep.subr.bf16.mxu0 0
        %2093 = vmatpush1.bf16.msra.mxu0 %v1905
        %2094 = vmatprep.subr.bf16.mxu0 0
        %2095 = vmatpush1.bf16.msra.mxu0 %v1906
        %2096 = vmatprep.subr.bf16.mxu0 0
        %2097 = vmatpush1.bf16.msra.mxu0 %v1907
        %2098 = vmatprep.subr.bf16.mxu0 0
        %2099 = vmatpush1.bf16.msra.mxu0 %v1908
        %2100 = vmatprep.subr.bf16.mxu0 0
        %2101 = vmatpush1.bf16.msra.mxu0 %v1909
        %2102 = vmatprep.subr.bf16.mxu0 0
        %2103 = vmatpush1.bf16.msra.mxu0 %v1910
        %2104 = vmatprep.subr.bf16.mxu0 0
        %2105 = vmatpush1.bf16.msra.mxu0 %v1911
        %2106 = vmatprep.subr.bf16.mxu0 0
        %2107 = vmatpush1.bf16.msra.mxu0 %v1912
        %2108 = vmatprep.subr.bf16.mxu0 0
        %2109 = vmatpush1.bf16.msra.mxu0 %v1913
        %2110 = vmatprep.subr.bf16.mxu0 0
        %2111 = vmatpush1.bf16.msra.mxu0 %v1914
        %2112 = vmatprep.subr.bf16.mxu0 0
        %2113 = vmatpush1.bf16.msra.mxu0 %v1915
        %2114 = vmatprep.subr.bf16.mxu0 0
        %2115 = vmatpush1.bf16.msra.mxu0 %v1916
        %2116 = vmatprep.subr.bf16.mxu0 0
        %2117 = vmatpush1.bf16.msra.mxu0 %v1917
        %2118 = vmatprep.mubr.bf16.mxu0 %v1392
        %2119 = vmatmul.mubr.bf16.gmra.mrb[0].mxu0 %v1391
        %v2120 = vpop.f32.mrb[0].mxu0
        %v2121 = vadd.f32 %v2081, %v2120
        %v2122 = vpop.f32.mrb[0].mxu0
        %v2123 = vpop.f32.mrb[0].mxu0
        %v2124 = vpop.f32.mrb[0].mxu0
        %2125 = vdwg.mxu0
        %2126 = vmatprep.subr.bf16.mxu0 0
        %2127 = vmatpush1.bf16.msra.mxu0 %v1918
        %2128 = vmatprep.subr.bf16.mxu0 0
        %2129 = vmatpush1.bf16.msra.mxu0 %v1919
        %2130 = vmatprep.subr.bf16.mxu0 0
        %2131 = vmatpush1.bf16.msra.mxu0 %v1920
        %2132 = vmatprep.subr.bf16.mxu0 0
        %2133 = vmatpush1.bf16.msra.mxu0 %v1921
        %2134 = vmatprep.subr.bf16.mxu0 0
        %2135 = vmatpush1.bf16.msra.mxu0 %v1922
        %2136 = vmatprep.subr.bf16.mxu0 0
        %2137 = vmatpush1.bf16.msra.mxu0 %v1923
        %2138 = vmatprep.subr.bf16.mxu0 0
        %2139 = vmatpush1.bf16.msra.mxu0 %v1924
        %2140 = vmatprep.subr.bf16.mxu0 0
        %2141 = vmatpush1.bf16.msra.mxu0 %v1925
        %2142 = vmatprep.subr.bf16.mxu0 0
        %2143 = vmatpush1.bf16.msra.mxu0 %v1926
        %2144 = vmatprep.subr.bf16.mxu0 0
        %2145 = vmatpush1.bf16.msra.mxu0 %v1927
        %2146 = vmatprep.subr.bf16.mxu0 0
        %2147 = vmatpush1.bf16.msra.mxu0 %v1928
        %2148 = vmatprep.subr.bf16.mxu0 0
        %2149 = vmatpush1.bf16.msra.mxu0 %v1929
        %2150 = vmatprep.subr.bf16.mxu0 0
        %2151 = vmatpush1.bf16.msra.mxu0 %v1930
        %2152 = vmatprep.subr.bf16.mxu0 0
        %2153 = vmatpush1.bf16.msra.mxu0 %v1931
        %2154 = vmatprep.subr.bf16.mxu0 0
        %2155 = vmatpush1.bf16.msra.mxu0 %v1932
        %2156 = vmatprep.subr.bf16.mxu0 0
        %2157 = vmatpush1.bf16.msra.mxu0 %v1933
        %2158 = vmatprep.mubr.bf16.mxu0 %v1394
        %2159 = vmatmul.mubr.bf16.gmra.mrb[0].mxu0 %v1393
        %v2160 = vpop.f32.mrb[0].mxu0
        %v2161 = vadd.f32 %v2121, %v2160
        %v2162 = vpop.f32.mrb[0].mxu0
        %v2163 = vpop.f32.mrb[0].mxu0
        %v2164 = vpop.f32.mrb[0].mxu0
        %2165 = vdwg.mxu0
        %2166 = vmatprep.subr.bf16.mxu0 0
        %2167 = vmatpush1.bf16.msra.mxu0 %v1934
        %2168 = vmatprep.subr.bf16.mxu0 0
        %2169 = vmatpush1.bf16.msra.mxu0 %v1935
        %2170 = vmatprep.subr.bf16.mxu0 0
        %2171 = vmatpush1.bf16.msra.mxu0 %v1936
        %2172 = vmatprep.subr.bf16.mxu0 0
        %2173 = vmatpush1.bf16.msra.mxu0 %v1937
        %2174 = vmatprep.subr.bf16.mxu0 0
        %2175 = vmatpush1.bf16.msra.mxu0 %v1938
        %2176 = vmatprep.subr.bf16.mxu0 0
        %2177 = vmatpush1.bf16.msra.mxu0 %v1939
        %2178 = vmatprep.subr.bf16.mxu0 0
        %2179 = vmatpush1.bf16.msra.mxu0 %v1940
        %2180 = vmatprep.subr.bf16.mxu0 0
        %2181 = vmatpush1.bf16.msra.mxu0 %v1941
        %2182 = vmatprep.subr.bf16.mxu0 0
        %2183 = vmatpush1.bf16.msra.mxu0 %v1942
        %2184 = vmatprep.subr.bf16.mxu0 0
        %2185 = vmatpush1.bf16.msra.mxu0 %v1943
        %2186 = vmatprep.subr.bf16.mxu0 0
        %2187 = vmatpush1.bf16.msra.mxu0 %v1944
        %2188 = vmatprep.subr.bf16.mxu0 0
        %2189 = vmatpush1.bf16.msra.mxu0 %v1945
        %2190 = vmatprep.subr.bf16.mxu0 0
        %2191 = vmatpush1.bf16.msra.mxu0 %v1946
        %2192 = vmatprep.subr.bf16.mxu0 0
        %2193 = vmatpush1.bf16.msra.mxu0 %v1947
        %2194 = vmatprep.subr.bf16.mxu0 0
        %2195 = vmatpush1.bf16.msra.mxu0 %v1948
        %2196 = vmatprep.subr.bf16.mxu0 0
        %2197 = vmatpush1.bf16.msra.mxu0 %v1949
        %2198 = vmatprep.mubr.bf16.mxu0 %v1396
        %2199 = vmatmul.mubr.bf16.gmra.mrb[0].mxu0 %v1395
        %v2200 = vpop.f32.mrb[0].mxu0
        %v2201 = vadd.f32 %v2161, %v2200
        %v2202 = vpop.f32.mrb[0].mxu0
        %v2203 = vpop.f32.mrb[0].mxu0
        %v2204 = vpop.f32.mrb[0].mxu0
        %2205 = vdwg.mxu0
        %2206 = vmatprep.subr.bf16.mxu0 0
        %2207 = vmatpush1.bf16.msra.mxu0 %v1950
        %2208 = vmatprep.subr.bf16.mxu0 0
        %2209 = vmatpush1.bf16.msra.mxu0 %v1951
        %2210 = vmatprep.subr.bf16.mxu0 0
        %2211 = vmatpush1.bf16.msra.mxu0 %v1952
        %2212 = vmatprep.subr.bf16.mxu0 0
        %2213 = vmatpush1.bf16.msra.mxu0 %v1953
        %2214 = vmatprep.subr.bf16.mxu0 0
        %2215 = vmatpush1.bf16.msra.mxu0 %v1954
        %2216 = vmatprep.subr.bf16.mxu0 0
        %2217 = vmatpush1.bf16.msra.mxu0 %v1955
        %2218 = vmatprep.subr.bf16.mxu0 0
        %2219 = vmatpush1.bf16.msra.mxu0 %v1956
        %2220 = vmatprep.subr.bf16.mxu0 0
        %2221 = vmatpush1.bf16.msra.mxu0 %v1957
        %2222 = vmatprep.subr.bf16.mxu0 0
        %2223 = vmatpush1.bf16.msra.mxu0 %v1958
        %2224 = vmatprep.subr.bf16.mxu0 0
        %2225 = vmatpush1.bf16.msra.mxu0 %v1959
        %2226 = vmatprep.subr.bf16.mxu0 0
        %2227 = vmatpush1.bf16.msra.mxu0 %v1960
        %2228 = vmatprep.subr.bf16.mxu0 0
        %2229 = vmatpush1.bf16.msra.mxu0 %v1961
        %2230 = vmatprep.subr.bf16.mxu0 0
        %2231 = vmatpush1.bf16.msra.mxu0 %v1962
        %2232 = vmatprep.subr.bf16.mxu0 0
        %2233 = vmatpush1.bf16.msra.mxu0 %v1963
        %2234 = vmatprep.subr.bf16.mxu0 0
        %2235 = vmatpush1.bf16.msra.mxu0 %v1964
        %2236 = vmatprep.subr.bf16.mxu0 0
        %2237 = vmatpush1.bf16.msra.mxu0 %v1965
        %2238 = vmatprep.mubr.bf16.mxu0 %v1398
        %2239 = vmatmul.mubr.bf16.gmra.mrb[0].mxu0 %v1397
        %v2240 = vpop.f32.mrb[0].mxu0
        %v2241 = vadd.f32 %v2201, %v2240
        %v2242 = vpop.f32.mrb[0].mxu0
        %v2243 = vpop.f32.mrb[0].mxu0
        %v2244 = vpop.f32.mrb[0].mxu0
        %2245 = vdwg.mxu0
        %v2246 = vsub.f32 %v2241, 1.7
        %v2247 = vmax.f32 %v2246, 0.0
        %2248 = vst [vmem:[#allocation3 + $0x1] sm:$0xff] %v2247
        %v2249 = vld [vmem:[#allocation3 + $0x2] sm:$0xff]
        %v2250 = vld [vmem:[#allocation3 + $0x1] sm:$0xff]
        %v2251 = vld [vmem:[#allocation3] sm:$0xff]
        %v2252 = vpack.c.bf16 %v2249, %v2249
        %v2253 = vpack.c.bf16 %v2250, %v2250
        %v2254 = vpack.c.bf16 %v2251, %v2251
        %v2255 = vld [vmem:[#allocation12] sm:$0xff]
        %v2256 = vld [vmem:[#allocation12 + $0x8] sm:$0xff]
        %v2257 = vld [vmem:[#allocation12 + $0x10] sm:$0xff]
        %v2258 = vld [vmem:[#allocation12 + $0x18] sm:$0xff]
        %v2259 = vld [vmem:[#allocation12 + $0x20] sm:$0xff]
        %v2260 = vld [vmem:[#allocation12 + $0x28] sm:$0xff]
        %v2261 = vld [vmem:[#allocation12 + $0x30] sm:$0xff]
        %v2262 = vld [vmem:[#allocation12 + $0x38] sm:$0xff]
        %v2263 = vld [vmem:[#allocation12 + $0x40] sm:$0xff]
        %v2264 = vld [vmem:[#allocation12 + $0x48] sm:$0xff]
        %v2265 = vld [vmem:[#allocation12 + $0x50] sm:$0xff]
        %v2266 = vld [vmem:[#allocation12 + $0x58] sm:$0xff]
        %v2267 = vld [vmem:[#allocation12 + $0x60] sm:$0xff]
        %v2268 = vld [vmem:[#allocation12 + $0x68] sm:$0xff]
        %v2269 = vld [vmem:[#allocation12 + $0x70] sm:$0xff]
        %v2270 = vld [vmem:[#allocation12 + $0x78] sm:$0xff]
        %v2271 = vld [vmem:[#allocation12 + $0x80] sm:$0xff]
        %v2272 = vld [vmem:[#allocation12 + $0x88] sm:$0xff]
        %v2273 = vld [vmem:[#allocation12 + $0x90] sm:$0xff]
        %v2274 = vld [vmem:[#allocation12 + $0x98] sm:$0xff]
        %v2275 = vld [vmem:[#allocation12 + $0xa0] sm:$0xff]
        %v2276 = vld [vmem:[#allocation12 + $0xa8] sm:$0xff]
        %v2277 = vld [vmem:[#allocation12 + $0xb0] sm:$0xff]
        %v2278 = vld [vmem:[#allocation12 + $0xb8] sm:$0xff]
        %v2279 = vld [vmem:[#allocation12 + $0xc0] sm:$0xff]
        %v2280 = vld [vmem:[#allocation12 + $0xc8] sm:$0xff]
        %v2281 = vld [vmem:[#allocation12 + $0xd0] sm:$0xff]
        %v2282 = vld [vmem:[#allocation12 + $0xd8] sm:$0xff]
        %v2283 = vld [vmem:[#allocation12 + $0xe0] sm:$0xff]
        %v2284 = vld [vmem:[#allocation12 + $0xe8] sm:$0xff]
        %v2285 = vld [vmem:[#allocation12 + $0xf0] sm:$0xff]
        %v2286 = vld [vmem:[#allocation12 + $0xf8] sm:$0xff]
        %v2287 = vld [vmem:[#allocation12 + $0x100] sm:$0xff]
        %v2288 = vld [vmem:[#allocation12 + $0x108] sm:$0xff]
        %v2289 = vld [vmem:[#allocation12 + $0x110] sm:$0xff]
        %v2290 = vld [vmem:[#allocation12 + $0x118] sm:$0xff]
        %v2291 = vld [vmem:[#allocation12 + $0x120] sm:$0xff]
        %v2292 = vld [vmem:[#allocation12 + $0x128] sm:$0xff]
        %v2293 = vld [vmem:[#allocation12 + $0x130] sm:$0xff]
        %v2294 = vld [vmem:[#allocation12 + $0x138] sm:$0xff]
        %v2295 = vld [vmem:[#allocation12 + $0x140] sm:$0xff]
        %v2296 = vld [vmem:[#allocation12 + $0x148] sm:$0xff]
        %v2297 = vld [vmem:[#allocation12 + $0x150] sm:$0xff]
        %v2298 = vld [vmem:[#allocation12 + $0x158] sm:$0xff]
        %v2299 = vld [vmem:[#allocation12 + $0x160] sm:$0xff]
        %v2300 = vld [vmem:[#allocation12 + $0x168] sm:$0xff]
        %v2301 = vld [vmem:[#allocation12 + $0x170] sm:$0xff]
        %v2302 = vld [vmem:[#allocation12 + $0x178] sm:$0xff]
        %v2303 = vld [vmem:[#allocation3 + $0x2] sm:$0x7f]
        %v2304 = vld [vmem:[#allocation3 + $0x1] sm:$0x7f]
        %v2305 = vpack.c.bf16 %v2303, %v2303
        %v2306 = vpack.c.bf16 %v2304, %v2304
        %v2307 = vld [vmem:[#allocation13] sm:$0xff]
        %v2308 = vld [vmem:[#allocation13 + $0x8] sm:$0xff]
        %v2309 = vld [vmem:[#allocation13 + $0x10] sm:$0xff]
        %v2310 = vld [vmem:[#allocation13 + $0x18] sm:$0xff]
        %v2311 = vld [vmem:[#allocation13 + $0x20] sm:$0xff]
        %v2312 = vld [vmem:[#allocation13 + $0x28] sm:$0xff]
        %v2313 = vld [vmem:[#allocation13 + $0x30] sm:$0xff]
        %v2314 = vld [vmem:[#allocation13 + $0x38] sm:$0xff]
        %v2315 = vld [vmem:[#allocation13 + $0x40] sm:$0xff]
        %v2316 = vld [vmem:[#allocation13 + $0x48] sm:$0xff]
        %v2317 = vld [vmem:[#allocation13 + $0x50] sm:$0xff]
        %v2318 = vld [vmem:[#allocation13 + $0x58] sm:$0xff]
        %v2319 = vld [vmem:[#allocation13 + $0x60] sm:$0xff]
        %v2320 = vld [vmem:[#allocation13 + $0x68] sm:$0xff]
        %v2321 = vld [vmem:[#allocation13 + $0x70] sm:$0xff]
        %v2322 = vld [vmem:[#allocation13 + $0x78] sm:$0xff]
        %v2323 = vld [vmem:[#allocation13 + $0x80] sm:$0xff]
        %v2324 = vld [vmem:[#allocation13 + $0x88] sm:$0xff]
        %v2325 = vld [vmem:[#allocation13 + $0x90] sm:$0xff]
        %v2326 = vld [vmem:[#allocation13 + $0x98] sm:$0xff]
        %v2327 = vld [vmem:[#allocation13 + $0xa0] sm:$0xff]
        %v2328 = vld [vmem:[#allocation13 + $0xa8] sm:$0xff]
        %v2329 = vld [vmem:[#allocation13 + $0xb0] sm:$0xff]
        %v2330 = vld [vmem:[#allocation13 + $0xb8] sm:$0xff]
        %v2331 = vld [vmem:[#allocation13 + $0xc0] sm:$0xff]
        %v2332 = vld [vmem:[#allocation13 + $0xc8] sm:$0xff]
        %v2333 = vld [vmem:[#allocation13 + $0xd0] sm:$0xff]
        %v2334 = vld [vmem:[#allocation13 + $0xd8] sm:$0xff]
        %v2335 = vld [vmem:[#allocation13 + $0xe0] sm:$0xff]
        %v2336 = vld [vmem:[#allocation13 + $0xe8] sm:$0xff]
        %v2337 = vld [vmem:[#allocation13 + $0xf0] sm:$0xff]
        %v2338 = vld [vmem:[#allocation13 + $0xf8] sm:$0xff]
        %v2339 = vld [vmem:[#allocation15] sm:$0x3]
        %v2341 = vlaneseq
        %v2342 = vshrl.u32 %v2341, 7
        %v2343 = vsub.s32 0, %v2342
        %v2344 = vrot.slane %v2339, %v2343
        %v2345 = vlaneseq
        %v2346 = vshrl.u32 %v2345, 7
        %v2347 = vsub.s32 1, %v2346
        %v2348 = vrot.slane %v2339, %v2347
        %v2399 = vunpack.c.l.b16 %v2255
        %v2400 = vunpack.c.h.b16 %v2255
        %v2401 = vunpack.c.l.b16 %v2256
        %v2402 = vunpack.c.h.b16 %v2256
        %v2403 = vunpack.c.l.b16 %v2257
        %v2404 = vunpack.c.h.b16 %v2257
        %v2405 = vunpack.c.l.b16 %v2258
        %v2406 = vunpack.c.h.b16 %v2258
        %v2407 = vunpack.c.l.b16 %v2259
        %v2408 = vunpack.c.h.b16 %v2259
        %v2409 = vunpack.c.l.b16 %v2260
        %v2410 = vunpack.c.h.b16 %v2260
        %v2411 = vunpack.c.l.b16 %v2261
        %v2412 = vunpack.c.h.b16 %v2261
        %v2413 = vunpack.c.l.b16 %v2262
        %v2414 = vunpack.c.h.b16 %v2262
        %v2415 = vunpack.c.l.b16 %v2263
        %v2416 = vunpack.c.h.b16 %v2263
        %v2417 = vunpack.c.l.b16 %v2264
        %v2418 = vunpack.c.h.b16 %v2264
        %v2419 = vunpack.c.l.b16 %v2265
        %v2420 = vunpack.c.h.b16 %v2265
        %v2421 = vunpack.c.l.b16 %v2266
        %v2422 = vunpack.c.h.b16 %v2266
        %v2423 = vunpack.c.l.b16 %v2267
        %v2424 = vunpack.c.h.b16 %v2267
        %v2425 = vunpack.c.l.b16 %v2268
        %v2426 = vunpack.c.h.b16 %v2268
        %v2427 = vunpack.c.l.b16 %v2269
        %v2428 = vunpack.c.h.b16 %v2269
        %v2429 = vunpack.c.l.b16 %v2270
        %v2430 = vunpack.c.h.b16 %v2270
        %v2431 = vunpack.c.l.b16 %v2271
        %v2432 = vunpack.c.h.b16 %v2271
        %v2433 = vunpack.c.l.b16 %v2272
        %v2434 = vunpack.c.h.b16 %v2272
        %v2435 = vunpack.c.l.b16 %v2273
        %v2436 = vunpack.c.h.b16 %v2273
        %v2437 = vunpack.c.l.b16 %v2274
        %v2438 = vunpack.c.h.b16 %v2274
        %v2439 = vunpack.c.l.b16 %v2275
        %v2440 = vunpack.c.h.b16 %v2275
        %v2441 = vunpack.c.l.b16 %v2276
        %v2442 = vunpack.c.h.b16 %v2276
        %v2443 = vunpack.c.l.b16 %v2277
        %v2444 = vunpack.c.h.b16 %v2277
        %v2445 = vunpack.c.l.b16 %v2278
        %v2446 = vunpack.c.h.b16 %v2278
        %v2447 = vunpack.c.l.b16 %v2279
        %v2448 = vunpack.c.h.b16 %v2279
        %v2449 = vunpack.c.l.b16 %v2280
        %v2450 = vunpack.c.h.b16 %v2280
        %v2451 = vunpack.c.l.b16 %v2281
        %v2452 = vunpack.c.h.b16 %v2281
        %v2453 = vunpack.c.l.b16 %v2282
        %v2454 = vunpack.c.h.b16 %v2282
        %v2455 = vunpack.c.l.b16 %v2283
        %v2456 = vunpack.c.h.b16 %v2283
        %v2457 = vunpack.c.l.b16 %v2284
        %v2458 = vunpack.c.h.b16 %v2284
        %v2459 = vunpack.c.l.b16 %v2285
        %v2460 = vunpack.c.h.b16 %v2285
        %v2461 = vunpack.c.l.b16 %v2286
        %v2462 = vunpack.c.h.b16 %v2286
        %v2463 = vunpack.c.l.b16 %v2287
        %v2464 = vunpack.c.h.b16 %v2287
        %v2465 = vunpack.c.l.b16 %v2288
        %v2466 = vunpack.c.h.b16 %v2288
        %v2467 = vunpack.c.l.b16 %v2289
        %v2468 = vunpack.c.h.b16 %v2289
        %v2469 = vunpack.c.l.b16 %v2290
        %v2470 = vunpack.c.h.b16 %v2290
        %v2471 = vunpack.c.l.b16 %v2291
        %v2472 = vunpack.c.h.b16 %v2291
        %v2473 = vunpack.c.l.b16 %v2292
        %v2474 = vunpack.c.h.b16 %v2292
        %v2475 = vunpack.c.l.b16 %v2293
        %v2476 = vunpack.c.h.b16 %v2293
        %v2477 = vunpack.c.l.b16 %v2294
        %v2478 = vunpack.c.h.b16 %v2294
        %v2479 = vunpack.c.l.b16 %v2295
        %v2480 = vunpack.c.h.b16 %v2295
        %v2481 = vunpack.c.l.b16 %v2296
        %v2482 = vunpack.c.h.b16 %v2296
        %v2483 = vunpack.c.l.b16 %v2297
        %v2484 = vunpack.c.h.b16 %v2297
        %v2485 = vunpack.c.l.b16 %v2298
        %v2486 = vunpack.c.h.b16 %v2298
        %v2487 = vunpack.c.l.b16 %v2299
        %v2488 = vunpack.c.h.b16 %v2299
        %v2489 = vunpack.c.l.b16 %v2300
        %v2490 = vunpack.c.h.b16 %v2300
        %v2491 = vunpack.c.l.b16 %v2301
        %v2492 = vunpack.c.h.b16 %v2301
        %v2493 = vunpack.c.l.b16 %v2302
        %v2494 = vunpack.c.h.b16 %v2302
        %v2495 = vpack.c.b16 %v2401, %v2399
        %v2496 = vpack.c.b16 %v2402, %v2400
        %v2497 = vpack.c.b16 %v2405, %v2403
        %v2498 = vpack.c.b16 %v2406, %v2404
        %v2499 = vpack.c.b16 %v2409, %v2407
        %v2500 = vpack.c.b16 %v2410, %v2408
        %v2501 = vpack.c.b16 %v2413, %v2411
        %v2502 = vpack.c.b16 %v2414, %v2412
        %v2503 = vpack.c.b16 %v2417, %v2415
        %v2504 = vpack.c.b16 %v2418, %v2416
        %v2505 = vpack.c.b16 %v2421, %v2419
        %v2506 = vpack.c.b16 %v2422, %v2420
        %v2507 = vpack.c.b16 %v2425, %v2423
        %v2508 = vpack.c.b16 %v2426, %v2424
        %v2509 = vpack.c.b16 %v2429, %v2427
        %v2510 = vpack.c.b16 %v2430, %v2428
        %v2511 = vpack.c.b16 %v2433, %v2431
        %v2512 = vpack.c.b16 %v2434, %v2432
        %v2513 = vpack.c.b16 %v2437, %v2435
        %v2514 = vpack.c.b16 %v2438, %v2436
        %v2515 = vpack.c.b16 %v2441, %v2439
        %v2516 = vpack.c.b16 %v2442, %v2440
        %v2517 = vpack.c.b16 %v2445, %v2443
        %v2518 = vpack.c.b16 %v2446, %v2444
        %v2519 = vpack.c.b16 %v2449, %v2447
        %v2520 = vpack.c.b16 %v2450, %v2448
        %v2521 = vpack.c.b16 %v2453, %v2451
        %v2522 = vpack.c.b16 %v2454, %v2452
        %v2523 = vpack.c.b16 %v2457, %v2455
        %v2524 = vpack.c.b16 %v2458, %v2456
        %v2525 = vpack.c.b16 %v2461, %v2459
        %v2526 = vpack.c.b16 %v2462, %v2460
        %v2527 = vpack.c.b16 %v2465, %v2463
        %v2528 = vpack.c.b16 %v2466, %v2464
        %v2529 = vpack.c.b16 %v2469, %v2467
        %v2530 = vpack.c.b16 %v2470, %v2468
        %v2531 = vpack.c.b16 %v2473, %v2471
        %v2532 = vpack.c.b16 %v2474, %v2472
        %v2533 = vpack.c.b16 %v2477, %v2475
        %v2534 = vpack.c.b16 %v2478, %v2476
        %v2535 = vpack.c.b16 %v2481, %v2479
        %v2536 = vpack.c.b16 %v2482, %v2480
        %v2537 = vpack.c.b16 %v2485, %v2483
        %v2538 = vpack.c.b16 %v2486, %v2484
        %v2539 = vpack.c.b16 %v2489, %v2487
        %v2540 = vpack.c.b16 %v2490, %v2488
        %v2541 = vpack.c.b16 %v2493, %v2491
        %v2542 = vpack.c.b16 %v2494, %v2492
        %2591 = vmatprep.subr.bf16.mxu0 %v2496
        %2592 = vmatpush1.bf16.msra.mxu0 %v2495
        %2593 = vmatprep.subr.bf16.mxu0 %v2498
        %2594 = vmatpush1.bf16.msra.mxu0 %v2497
        %2595 = vmatprep.subr.bf16.mxu0 %v2500
        %2596 = vmatpush1.bf16.msra.mxu0 %v2499
        %2597 = vmatprep.subr.bf16.mxu0 %v2502
        %2598 = vmatpush1.bf16.msra.mxu0 %v2501
        %2599 = vmatprep.subr.bf16.mxu0 %v2504
        %2600 = vmatpush1.bf16.msra.mxu0 %v2503
        %2601 = vmatprep.subr.bf16.mxu0 %v2506
        %2602 = vmatpush1.bf16.msra.mxu0 %v2505
        %2603 = vmatprep.subr.bf16.mxu0 %v2508
        %2604 = vmatpush1.bf16.msra.mxu0 %v2507
        %2605 = vmatprep.subr.bf16.mxu0 %v2510
        %2606 = vmatpush1.bf16.msra.mxu0 %v2509
        %2607 = vmatprep.subr.bf16.mxu0 %v2512
        %2608 = vmatpush1.bf16.msra.mxu0 %v2511
        %2609 = vmatprep.subr.bf16.mxu0 %v2514
        %2610 = vmatpush1.bf16.msra.mxu0 %v2513
        %2611 = vmatprep.subr.bf16.mxu0 %v2516
        %2612 = vmatpush1.bf16.msra.mxu0 %v2515
        %2613 = vmatprep.subr.bf16.mxu0 %v2518
        %2614 = vmatpush1.bf16.msra.mxu0 %v2517
        %2615 = vmatprep.subr.bf16.mxu0 %v2520
        %2616 = vmatpush1.bf16.msra.mxu0 %v2519
        %2617 = vmatprep.subr.bf16.mxu0 %v2522
        %2618 = vmatpush1.bf16.msra.mxu0 %v2521
        %2619 = vmatprep.subr.bf16.mxu0 %v2524
        %2620 = vmatpush1.bf16.msra.mxu0 %v2523
        %2621 = vmatprep.subr.bf16.mxu0 %v2526
        %2622 = vmatpush1.bf16.msra.mxu0 %v2525
        %2623 = vmatprep.mubr.bf16.mxu0 %v2253
        %2624 = vmatmul.mubr.bf16.gmra.mrb[0].mxu0 %v2252
        %v2625 = vpop.f32.mrb[0].mxu0
        %v2626 = vadd.f32 %v2344, %v2625
        %v2627 = vpop.f32.mrb[0].mxu0
        %v2628 = vadd.f32 %v2348, %v2627
        %v2629 = vpop.f32.mrb[0].mxu0
        %v2630 = vpop.f32.mrb[0].mxu0
        %2631 = vdwg.mxu0
        %2632 = vmatprep.subr.bf16.mxu0 %v2528
        %2633 = vmatpush1.bf16.msra.mxu0 %v2527
        %2634 = vmatprep.subr.bf16.mxu0 %v2530
        %2635 = vmatpush1.bf16.msra.mxu0 %v2529
        %2636 = vmatprep.subr.bf16.mxu0 %v2532
        %2637 = vmatpush1.bf16.msra.mxu0 %v2531
        %2638 = vmatprep.subr.bf16.mxu0 %v2534
        %2639 = vmatpush1.bf16.msra.mxu0 %v2533
        %2640 = vmatprep.subr.bf16.mxu0 %v2536
        %2641 = vmatpush1.bf16.msra.mxu0 %v2535
        %2642 = vmatprep.subr.bf16.mxu0 %v2538
        %2643 = vmatpush1.bf16.msra.mxu0 %v2537
        %2644 = vmatprep.subr.bf16.mxu0 %v2540
        %2645 = vmatpush1.bf16.msra.mxu0 %v2539
        %2646 = vmatprep.subr.bf16.mxu0 %v2542
        %2647 = vmatpush1.bf16.msra.mxu0 %v2541
        %2648 = vmatprep.subr.bf16.mxu0 0
        %2649 = vmatpush1.bf16.msra.mxu0 0
        %2650 = vmatprep.subr.bf16.mxu0 0
        %2651 = vmatpush1.bf16.msra.mxu0 0
        %2652 = vmatprep.subr.bf16.mxu0 0
        %2653 = vmatpush1.bf16.msra.mxu0 0
        %2654 = vmatprep.subr.bf16.mxu0 0
        %2655 = vmatpush1.bf16.msra.mxu0 0
        %2656 = vmatprep.subr.bf16.mxu0 0
        %2657 = vmatpush1.bf16.msra.mxu0 0
        %2658 = vmatprep.subr.bf16.mxu0 0
        %2659 = vmatpush1.bf16.msra.mxu0 0
        %2660 = vmatprep.subr.bf16.mxu0 0
        %2661 = vmatpush1.bf16.msra.mxu0 0
        %2662 = vmatprep.subr.bf16.mxu0 0
        %2663 = vmatpush1.bf16.msra.mxu0 0
        %2664 = vmatprep.mubr.bf16.mxu0 0
        %2665 = vmatmul.mubr.bf16.gmra.mrb[0].mxu0 %v2254
        %v2666 = vpop.f32.mrb[0].mxu0
        %v2667 = vadd.f32 %v2626, %v2666
        %v2668 = vpop.f32.mrb[0].mxu0
        %v2669 = vadd.f32 %v2628, %v2668
        %v2670 = vpop.f32.mrb[0].mxu0
        %v2671 = vpop.f32.mrb[0].mxu0
        %2672 = vdwg.mxu0
        %v2673 = vsub.f32 %v2667, 2.2
        %v2674 = vsub.f32 %v2669, 2.2
        %v2675 = vmax.f32 %v2673, 0.0
        %v2676 = vmax.f32 %v2674, 0.0
        %v2677 = vtanh.pop %v2675
        %v2678 = vtanh.pop %v2676
        %v2711 = vunpack.c.l.b16 %v2307
        %v2712 = vunpack.c.h.b16 %v2307
        %v2713 = vunpack.c.l.b16 %v2308
        %v2714 = vunpack.c.h.b16 %v2308
        %v2715 = vunpack.c.l.b16 %v2309
        %v2716 = vunpack.c.h.b16 %v2309
        %v2717 = vunpack.c.l.b16 %v2310
        %v2718 = vunpack.c.h.b16 %v2310
        %v2719 = vunpack.c.l.b16 %v2311
        %v2720 = vunpack.c.h.b16 %v2311
        %v2721 = vunpack.c.l.b16 %v2312
        %v2722 = vunpack.c.h.b16 %v2312
        %v2723 = vunpack.c.l.b16 %v2313
        %v2724 = vunpack.c.h.b16 %v2313
        %v2725 = vunpack.c.l.b16 %v2314
        %v2726 = vunpack.c.h.b16 %v2314
        %v2727 = vunpack.c.l.b16 %v2315
        %v2728 = vunpack.c.h.b16 %v2315
        %v2729 = vunpack.c.l.b16 %v2316
        %v2730 = vunpack.c.h.b16 %v2316
        %v2731 = vunpack.c.l.b16 %v2317
        %v2732 = vunpack.c.h.b16 %v2317
        %v2733 = vunpack.c.l.b16 %v2318
        %v2734 = vunpack.c.h.b16 %v2318
        %v2735 = vunpack.c.l.b16 %v2319
        %v2736 = vunpack.c.h.b16 %v2319
        %v2737 = vunpack.c.l.b16 %v2320
        %v2738 = vunpack.c.h.b16 %v2320
        %v2739 = vunpack.c.l.b16 %v2321
        %v2740 = vunpack.c.h.b16 %v2321
        %v2741 = vunpack.c.l.b16 %v2322
        %v2742 = vunpack.c.h.b16 %v2322
        %v2743 = vunpack.c.l.b16 %v2323
        %v2744 = vunpack.c.h.b16 %v2323
        %v2745 = vunpack.c.l.b16 %v2324
        %v2746 = vunpack.c.h.b16 %v2324
        %v2747 = vunpack.c.l.b16 %v2325
        %v2748 = vunpack.c.h.b16 %v2325
        %v2749 = vunpack.c.l.b16 %v2326
        %v2750 = vunpack.c.h.b16 %v2326
        %v2751 = vunpack.c.l.b16 %v2327
        %v2752 = vunpack.c.h.b16 %v2327
        %v2753 = vunpack.c.l.b16 %v2328
        %v2754 = vunpack.c.h.b16 %v2328
        %v2755 = vunpack.c.l.b16 %v2329
        %v2756 = vunpack.c.h.b16 %v2329
        %v2757 = vunpack.c.l.b16 %v2330
        %v2758 = vunpack.c.h.b16 %v2330
        %v2759 = vunpack.c.l.b16 %v2331
        %v2760 = vunpack.c.h.b16 %v2331
        %v2761 = vunpack.c.l.b16 %v2332
        %v2762 = vunpack.c.h.b16 %v2332
        %v2763 = vunpack.c.l.b16 %v2333
        %v2764 = vunpack.c.h.b16 %v2333
        %v2765 = vunpack.c.l.b16 %v2334
        %v2766 = vunpack.c.h.b16 %v2334
        %v2767 = vunpack.c.l.b16 %v2335
        %v2768 = vunpack.c.h.b16 %v2335
        %v2769 = vunpack.c.l.b16 %v2336
        %v2770 = vunpack.c.h.b16 %v2336
        %v2771 = vunpack.c.l.b16 %v2337
        %v2772 = vunpack.c.h.b16 %v2337
        %v2773 = vunpack.c.l.b16 %v2338
        %v2774 = vunpack.c.h.b16 %v2338
        %v2775 = vpack.c.b16 %v2713, %v2711
        %v2776 = vpack.c.b16 %v2714, %v2712
        %v2777 = vpack.c.b16 %v2717, %v2715
        %v2778 = vpack.c.b16 %v2718, %v2716
        %v2779 = vpack.c.b16 %v2721, %v2719
        %v2780 = vpack.c.b16 %v2722, %v2720
        %v2781 = vpack.c.b16 %v2725, %v2723
        %v2782 = vpack.c.b16 %v2726, %v2724
        %v2783 = vpack.c.b16 %v2729, %v2727
        %v2784 = vpack.c.b16 %v2730, %v2728
        %v2785 = vpack.c.b16 %v2733, %v2731
        %v2786 = vpack.c.b16 %v2734, %v2732
        %v2787 = vpack.c.b16 %v2737, %v2735
        %v2788 = vpack.c.b16 %v2738, %v2736
        %v2789 = vpack.c.b16 %v2741, %v2739
        %v2790 = vpack.c.b16 %v2742, %v2740
        %v2791 = vpack.c.b16 %v2745, %v2743
        %v2792 = vpack.c.b16 %v2746, %v2744
        %v2793 = vpack.c.b16 %v2749, %v2747
        %v2794 = vpack.c.b16 %v2750, %v2748
        %v2795 = vpack.c.b16 %v2753, %v2751
        %v2796 = vpack.c.b16 %v2754, %v2752
        %v2797 = vpack.c.b16 %v2757, %v2755
        %v2798 = vpack.c.b16 %v2758, %v2756
        %v2799 = vpack.c.b16 %v2761, %v2759
        %v2800 = vpack.c.b16 %v2762, %v2760
        %v2801 = vpack.c.b16 %v2765, %v2763
        %v2802 = vpack.c.b16 %v2766, %v2764
        %v2803 = vpack.c.b16 %v2769, %v2767
        %v2804 = vpack.c.b16 %v2770, %v2768
        %v2805 = vpack.c.b16 %v2773, %v2771
        %v2806 = vpack.c.b16 %v2774, %v2772
        %2839 = vmatprep.subr.bf16.mxu0 %v2776
        %2840 = vmatpush1.bf16.msra.mxu0 %v2775
        %2841 = vmatprep.subr.bf16.mxu0 %v2778
        %2842 = vmatpush1.bf16.msra.mxu0 %v2777
        %2843 = vmatprep.subr.bf16.mxu0 %v2780
        %2844 = vmatpush1.bf16.msra.mxu0 %v2779
        %2845 = vmatprep.subr.bf16.mxu0 %v2782
        %2846 = vmatpush1.bf16.msra.mxu0 %v2781
        %2847 = vmatprep.subr.bf16.mxu0 %v2784
        %2848 = vmatpush1.bf16.msra.mxu0 %v2783
        %2849 = vmatprep.subr.bf16.mxu0 %v2786
        %2850 = vmatpush1.bf16.msra.mxu0 %v2785
        %2851 = vmatprep.subr.bf16.mxu0 %v2788
        %2852 = vmatpush1.bf16.msra.mxu0 %v2787
        %2853 = vmatprep.subr.bf16.mxu0 %v2790
        %2854 = vmatpush1.bf16.msra.mxu0 %v2789
        %2855 = vmatprep.subr.bf16.mxu0 %v2792
        %2856 = vmatpush1.bf16.msra.mxu0 %v2791
        %2857 = vmatprep.subr.bf16.mxu0 %v2794
        %2858 = vmatpush1.bf16.msra.mxu0 %v2793
        %2859 = vmatprep.subr.bf16.mxu0 %v2796
        %2860 = vmatpush1.bf16.msra.mxu0 %v2795
        %2861 = vmatprep.subr.bf16.mxu0 %v2798
        %2862 = vmatpush1.bf16.msra.mxu0 %v2797
        %2863 = vmatprep.subr.bf16.mxu0 %v2800
        %2864 = vmatpush1.bf16.msra.mxu0 %v2799
        %2865 = vmatprep.subr.bf16.mxu0 %v2802
        %2866 = vmatpush1.bf16.msra.mxu0 %v2801
        %2867 = vmatprep.subr.bf16.mxu0 %v2804
        %2868 = vmatpush1.bf16.msra.mxu0 %v2803
        %2869 = vmatprep.subr.bf16.mxu0 %v2806
        %2870 = vmatpush1.bf16.msra.mxu0 %v2805
        %2871 = vmatprep.mubr.bf16.mxu0 %v2306
        %2872 = vmatmul.mubr.bf16.gmra.mrb[0].mxu0 %v2305
        %v2873 = vpop.f32.mrb[0].mxu0
        %v2874 = vadd.f32 %v2344, %v2873
        %v2875 = vpop.f32.mrb[0].mxu0
        %v2876 = vadd.f32 %v2348, %v2875
        %v2877 = vpop.f32.mrb[0].mxu0
        %v2878 = vpop.f32.mrb[0].mxu0
        %2879 = vdwg.mxu0
        %v2880 = vsub.f32 %v2874, 2.2
        %v2881 = vsub.f32 %v2876, 2.2
        %v2882 = vmax.f32 %v2880, 0.0
        %v2883 = vmax.f32 %v2881, 0.0
        %v2884 = vtanh.pop %v2882
        %v2885 = vtanh.pop %v2883
        %2886 = vst [vmem:[#allocation4] sm:$0xff] %v2677
        %2887 = vst [vmem:[#allocation4 + $0x8] sm:$0xff] %v2678
        %v2890 = vrot.slane %v2884, 7
        %v2891 = vrot.slane %v2885, 7
        %2894 = vst [vmem:[#allocation4 + $0x10] sm:$0xfe] %v2890
        %2895 = vst [vmem:[#allocation4 + $0x18] sm:$0xfe] %v2891
        %v2896 = vld [vmem:[#allocation4 + $0x10] sm:$0xfe]
        %v2897 = vld [vmem:[#allocation4 + $0x18] sm:$0xfe]
        %v2898 = vld [vmem:[#allocation4 + $0x20] sm:$0x1]
        %v2899 = vld [vmem:[#allocation4 + $0x28] sm:$0x1]
        %v2900 = vld [vmem:[#allocation4] sm:$0xff]
        %v2901 = vld [vmem:[#allocation4 + $0x8] sm:$0xff]
        %v2902 = vld [vmem:[#allocation4 + $0x10] sm:$0xff]
        %v2903 = vld [vmem:[#allocation4 + $0x18] sm:$0xff]
        %v2906 = vrot.slane %v2900, 7
        %v2907 = vrot.slane %v2901, 7
        %v2912 = vrot.slane %v2902, 7
        %v2913 = vrot.slane %v2903, 7
        %v2916 = vpack.c.bf16 %v2898, %v2896
        %v2917 = vpack.c.bf16 %v2899, %v2897
        %v2918 = vpack.c.bf16 %v2906, %v2906
        %v2919 = vpack.c.bf16 %v2907, %v2907
        %v2920 = vpack.c.bf16 %v2912, %v2912
        %v2921 = vpack.c.bf16 %v2913, %v2913
        %v2922 = vld [vmem:[#allocation16] sm:$0xf]
        %v2923 = vld [vmem:[#allocation16 + $0x4] sm:$0xf]
        %v2924 = vld [vmem:[#allocation16 + $0x8] sm:$0xf]
        %v2925 = vld [vmem:[#allocation16 + $0xc] sm:$0xf]
        %v2926 = vld [vmem:[#allocation16 + $0x10] sm:$0xf]
        %v2927 = vld [vmem:[#allocation16 + $0x14] sm:$0xf]
        %v2928 = vld [vmem:[#allocation16 + $0x18] sm:$0xf]
        %v2929 = vld [vmem:[#allocation16 + $0x1c] sm:$0xf]
        %v2930 = vld [vmem:[#allocation16 + $0x20] sm:$0xf]
        %v2931 = vld [vmem:[#allocation16 + $0x24] sm:$0xf]
        %v2932 = vld [vmem:[#allocation16 + $0x28] sm:$0xf]
        %v2933 = vld [vmem:[#allocation16 + $0x2c] sm:$0xf]
        %v2934 = vld [vmem:[#allocation16 + $0x30] sm:$0xf]
        %v2935 = vld [vmem:[#allocation16 + $0x34] sm:$0xf]
        %v2936 = vld [vmem:[#allocation16 + $0x38] sm:$0xf]
        %v2937 = vld [vmem:[#allocation16 + $0x3c] sm:$0xf]
        %v2938 = vld [vmem:[#allocation16 + $0x40] sm:$0xf]
        %v2939 = vld [vmem:[#allocation16 + $0x44] sm:$0xf]
        %v2940 = vld [vmem:[#allocation16 + $0x48] sm:$0xf]
        %v2941 = vld [vmem:[#allocation16 + $0x4c] sm:$0xf]
        %v2942 = vld [vmem:[#allocation16 + $0x50] sm:$0xf]
        %v2943 = vld [vmem:[#allocation16 + $0x54] sm:$0xf]
        %v2944 = vld [vmem:[#allocation16 + $0x58] sm:$0xf]
        %v2945 = vld [vmem:[#allocation16 + $0x5c] sm:$0xf]
        %v2946 = vld [vmem:[#allocation16 + $0x60] sm:$0xf]
        %v2947 = vld [vmem:[#allocation16 + $0x64] sm:$0xf]
        %v2948 = vld [vmem:[#allocation16 + $0x68] sm:$0xf]
        %v2949 = vld [vmem:[#allocation16 + $0x6c] sm:$0xf]
        %v2950 = vld [vmem:[#allocation16 + $0x70] sm:$0xf]
        %v2951 = vld [vmem:[#allocation16 + $0x74] sm:$0xf]
        %v2952 = vld [vmem:[#allocation16 + $0x78] sm:$0xf]
        %v2953 = vld [vmem:[#allocation16 + $0x7c] sm:$0xf]
        %v2954 = vld [vmem:[#allocation16 + $0x80] sm:$0xf]
        %v2955 = vld [vmem:[#allocation16 + $0x84] sm:$0xf]
        %v2956 = vld [vmem:[#allocation16 + $0x88] sm:$0xf]
        %v2957 = vld [vmem:[#allocation16 + $0x8c] sm:$0xf]
        %v2958 = vld [vmem:[#allocation16 + $0x90] sm:$0xf]
        %v2959 = vld [vmem:[#allocation16 + $0x94] sm:$0xf]
        %v2960 = vld [vmem:[#allocation16 + $0x98] sm:$0xf]
        %v2961 = vld [vmem:[#allocation16 + $0x9c] sm:$0xf]
        %v2962 = vld [vmem:[#allocation16 + $0xa0] sm:$0xf]
        %v2963 = vld [vmem:[#allocation16 + $0xa4] sm:$0xf]
        %v2964 = vld [vmem:[#allocation16 + $0xa8] sm:$0xf]
        %v2965 = vld [vmem:[#allocation16 + $0xac] sm:$0xf]
        %v2966 = vld [vmem:[#allocation16 + $0xb0] sm:$0xf]
        %v2967 = vld [vmem:[#allocation16 + $0xb4] sm:$0xf]
        %v2968 = vld [vmem:[#allocation16 + $0xb8] sm:$0xf]
        %v2969 = vld [vmem:[#allocation16 + $0xbc] sm:$0xf]
        %v2970 = vld [vmem:[#allocation16 + $0xc0] sm:$0xf]
        %v2971 = vld [vmem:[#allocation16 + $0xc4] sm:$0xf]
        %v2972 = vld [vmem:[#allocation16 + $0xc8] sm:$0xf]
        %v2973 = vld [vmem:[#allocation16 + $0xcc] sm:$0xf]
        %v2974 = vld [vmem:[#allocation16 + $0xd0] sm:$0xf]
        %v2975 = vld [vmem:[#allocation16 + $0xd4] sm:$0xf]
        %v2976 = vld [vmem:[#allocation16 + $0xd8] sm:$0xf]
        %v2977 = vld [vmem:[#allocation16 + $0xdc] sm:$0xf]
        %v2978 = vld [vmem:[#allocation16 + $0xe0] sm:$0xf]
        %v2979 = vld [vmem:[#allocation16 + $0xe4] sm:$0xf]
        %v2980 = vld [vmem:[#allocation16 + $0xe8] sm:$0xf]
        %v2981 = vld [vmem:[#allocation16 + $0xec] sm:$0xf]
        %v2982 = vld [vmem:[#allocation16 + $0xf0] sm:$0xf]
        %v2983 = vld [vmem:[#allocation16 + $0xf4] sm:$0xf]
        %v2984 = vld [vmem:[#allocation16 + $0xf8] sm:$0xf]
        %v2985 = vld [vmem:[#allocation16 + $0xfc] sm:$0xf]
        %v2986 = vld [vmem:[#allocation16 + $0x100] sm:$0xf]
        %v2987 = vld [vmem:[#allocation16 + $0x104] sm:$0xf]
        %v2988 = vld [vmem:[#allocation16 + $0x108] sm:$0xf]
        %v2989 = vld [vmem:[#allocation16 + $0x10c] sm:$0xf]
        %v2990 = vld [vmem:[#allocation16 + $0x110] sm:$0xf]
        %v2991 = vld [vmem:[#allocation16 + $0x114] sm:$0xf]
        %v2992 = vld [vmem:[#allocation16 + $0x118] sm:$0xf]
        %v2993 = vld [vmem:[#allocation16 + $0x11c] sm:$0xf]
        %v2994 = vld [vmem:[#allocation16 + $0x120] sm:$0xf]
        %v2995 = vld [vmem:[#allocation16 + $0x124] sm:$0xf]
        %v2996 = vld [vmem:[#allocation16 + $0x128] sm:$0xf]
        %v2997 = vld [vmem:[#allocation16 + $0x12c] sm:$0xf]
        %v2998 = vld [vmem:[#allocation16 + $0x130] sm:$0xf]
        %v2999 = vld [vmem:[#allocation16 + $0x134] sm:$0xf]
        %v3000 = vld [vmem:[#allocation16 + $0x138] sm:$0xf]
        %v3001 = vld [vmem:[#allocation16 + $0x13c] sm:$0xf]
        %v3002 = vld [vmem:[#allocation16 + $0x140] sm:$0xf]
        %v3003 = vld [vmem:[#allocation16 + $0x144] sm:$0xf]
        %v3004 = vld [vmem:[#allocation16 + $0x148] sm:$0xf]
        %v3005 = vld [vmem:[#allocation16 + $0x14c] sm:$0xf]
        %v3006 = vld [vmem:[#allocation16 + $0x150] sm:$0xf]
        %v3007 = vld [vmem:[#allocation16 + $0x154] sm:$0xf]
        %v3008 = vld [vmem:[#allocation16 + $0x158] sm:$0xf]
        %v3009 = vld [vmem:[#allocation16 + $0x15c] sm:$0xf]
        %v3010 = vld [vmem:[#allocation16 + $0x160] sm:$0xf]
        %v3011 = vld [vmem:[#allocation16 + $0x164] sm:$0xf]
        %v3012 = vld [vmem:[#allocation16 + $0x168] sm:$0xf]
        %v3013 = vld [vmem:[#allocation16 + $0x16c] sm:$0xf]
        %v3014 = vld [vmem:[#allocation16 + $0x170] sm:$0xf]
        %v3015 = vld [vmem:[#allocation16 + $0x174] sm:$0xf]
        %v3016 = vld [vmem:[#allocation16 + $0x178] sm:$0xf]
        %v3017 = vld [vmem:[#allocation16 + $0x17c] sm:$0xf]
        %v3018 = vld [vmem:[#allocation4 + $0x10] sm:$0xfe]
        %v3019 = vld [vmem:[#allocation4 + $0x18] sm:$0xfe]
        %v3020 = vld [vmem:[#allocation4] sm:$0x7f]
        %v3021 = vld [vmem:[#allocation4 + $0x8] sm:$0x7f]
        %v3024 = vrot.slane %v3020, 7
        %v3025 = vrot.slane %v3021, 7
        %v3028 = vpack.c.bf16 %v3018, %v3018
        %v3029 = vpack.c.bf16 %v3019, %v3019
        %v3030 = vpack.c.bf16 %v3024, %v3024
        %v3031 = vpack.c.bf16 %v3025, %v3025
        %v3032 = vld [vmem:[#allocation18] sm:$0xf]
        %v3033 = vld [vmem:[#allocation18 + $0x4] sm:$0xf]
        %v3034 = vld [vmem:[#allocation18 + $0x8] sm:$0xf]
        %v3035 = vld [vmem:[#allocation18 + $0xc] sm:$0xf]
        %v3036 = vld [vmem:[#allocation18 + $0x10] sm:$0xf]
        %v3037 = vld [vmem:[#allocation18 + $0x14] sm:$0xf]
        %v3038 = vld [vmem:[#allocation18 + $0x18] sm:$0xf]
        %v3039 = vld [vmem:[#allocation18 + $0x1c] sm:$0xf]
        %v3040 = vld [vmem:[#allocation18 + $0x20] sm:$0xf]
        %v3041 = vld [vmem:[#allocation18 + $0x24] sm:$0xf]
        %v3042 = vld [vmem:[#allocation18 + $0x28] sm:$0xf]
        %v3043 = vld [vmem:[#allocation18 + $0x2c] sm:$0xf]
        %v3044 = vld [vmem:[#allocation18 + $0x30] sm:$0xf]
        %v3045 = vld [vmem:[#allocation18 + $0x34] sm:$0xf]
        %v3046 = vld [vmem:[#allocation18 + $0x38] sm:$0xf]
        %v3047 = vld [vmem:[#allocation18 + $0x3c] sm:$0xf]
        %v3048 = vld [vmem:[#allocation18 + $0x40] sm:$0xf]
        %v3049 = vld [vmem:[#allocation18 + $0x44] sm:$0xf]
        %v3050 = vld [vmem:[#allocation18 + $0x48] sm:$0xf]
        %v3051 = vld [vmem:[#allocation18 + $0x4c] sm:$0xf]
        %v3052 = vld [vmem:[#allocation18 + $0x50] sm:$0xf]
        %v3053 = vld [vmem:[#allocation18 + $0x54] sm:$0xf]
        %v3054 = vld [vmem:[#allocation18 + $0x58] sm:$0xf]
        %v3055 = vld [vmem:[#allocation18 + $0x5c] sm:$0xf]
        %v3056 = vld [vmem:[#allocation18 + $0x60] sm:$0xf]
        %v3057 = vld [vmem:[#allocation18 + $0x64] sm:$0xf]
        %v3058 = vld [vmem:[#allocation18 + $0x68] sm:$0xf]
        %v3059 = vld [vmem:[#allocation18 + $0x6c] sm:$0xf]
        %v3060 = vld [vmem:[#allocation18 + $0x70] sm:$0xf]
        %v3061 = vld [vmem:[#allocation18 + $0x74] sm:$0xf]
        %v3062 = vld [vmem:[#allocation18 + $0x78] sm:$0xf]
        %v3063 = vld [vmem:[#allocation18 + $0x7c] sm:$0xf]
        %v3064 = vld [vmem:[#allocation18 + $0x80] sm:$0xf]
        %v3065 = vld [vmem:[#allocation18 + $0x84] sm:$0xf]
        %v3066 = vld [vmem:[#allocation18 + $0x88] sm:$0xf]
        %v3067 = vld [vmem:[#allocation18 + $0x8c] sm:$0xf]
        %v3068 = vld [vmem:[#allocation18 + $0x90] sm:$0xf]
        %v3069 = vld [vmem:[#allocation18 + $0x94] sm:$0xf]
        %v3070 = vld [vmem:[#allocation18 + $0x98] sm:$0xf]
        %v3071 = vld [vmem:[#allocation18 + $0x9c] sm:$0xf]
        %v3072 = vld [vmem:[#allocation18 + $0xa0] sm:$0xf]
        %v3073 = vld [vmem:[#allocation18 + $0xa4] sm:$0xf]
        %v3074 = vld [vmem:[#allocation18 + $0xa8] sm:$0xf]
        %v3075 = vld [vmem:[#allocation18 + $0xac] sm:$0xf]
        %v3076 = vld [vmem:[#allocation18 + $0xb0] sm:$0xf]
        %v3077 = vld [vmem:[#allocation18 + $0xb4] sm:$0xf]
        %v3078 = vld [vmem:[#allocation18 + $0xb8] sm:$0xf]
        %v3079 = vld [vmem:[#allocation18 + $0xbc] sm:$0xf]
        %v3080 = vld [vmem:[#allocation18 + $0xc0] sm:$0xf]
        %v3081 = vld [vmem:[#allocation18 + $0xc4] sm:$0xf]
        %v3082 = vld [vmem:[#allocation18 + $0xc8] sm:$0xf]
        %v3083 = vld [vmem:[#allocation18 + $0xcc] sm:$0xf]
        %v3084 = vld [vmem:[#allocation18 + $0xd0] sm:$0xf]
        %v3085 = vld [vmem:[#allocation18 + $0xd4] sm:$0xf]
        %v3086 = vld [vmem:[#allocation18 + $0xd8] sm:$0xf]
        %v3087 = vld [vmem:[#allocation18 + $0xdc] sm:$0xf]
        %v3088 = vld [vmem:[#allocation18 + $0xe0] sm:$0xf]
        %v3089 = vld [vmem:[#allocation18 + $0xe4] sm:$0xf]
        %v3090 = vld [vmem:[#allocation18 + $0xe8] sm:$0xf]
        %v3091 = vld [vmem:[#allocation18 + $0xec] sm:$0xf]
        %v3092 = vld [vmem:[#allocation18 + $0xf0] sm:$0xf]
        %v3093 = vld [vmem:[#allocation18 + $0xf4] sm:$0xf]
        %v3094 = vld [vmem:[#allocation18 + $0xf8] sm:$0xf]
        %v3095 = vld [vmem:[#allocation18 + $0xfc] sm:$0xf]
        %v3096 = vld [vmem:[#allocation4] sm:$0xfe]
        %v3097 = vld [vmem:[#allocation4 + $0x8] sm:$0xfe]
        %v3098 = vpack.c.bf16 %v3096, %v3096
        %v3099 = vpack.c.bf16 %v3097, %v3097
        %v3100 = vld [vmem:[#allocation19] sm:$0x1]
        %v3102 = vlaneseq
        %v3103 = vshrl.u32 %v3102, 7
        %v3104 = vsub.s32 0, %v3103
        %v3105 = vrot.slane %v3100, %v3104
        %v3108 = vshrl.u32 %v2916, 16
        %v3110 = vshll.u32 %v2916, 16
        %v3112 = vrot.slane %v3110, 1
        %v3113 = vor.u32 %v3108, %v3112
        %v3115 = vshrl.u32 %v2917, 16
        %v3117 = vshll.u32 %v2917, 16
        %v3119 = vrot.slane %v3117, 1
        %v3120 = vor.u32 %v3115, %v3119
        %v3122 = vshrl.u32 %v2918, 16
        %v3124 = vshll.u32 %v2918, 16
        %v3126 = vrot.slane %v3124, 1
        %v3127 = vor.u32 %v3122, %v3126
        %v3129 = vshrl.u32 %v2919, 16
        %v3131 = vshll.u32 %v2919, 16
        %v3133 = vrot.slane %v3131, 1
        %v3134 = vor.u32 %v3129, %v3133
        %v3136 = vshrl.u32 %v2920, 16
        %v3138 = vshll.u32 %v2920, 16
        %v3140 = vrot.slane %v3138, 1
        %v3141 = vor.u32 %v3136, %v3140
        %v3143 = vshrl.u32 %v2921, 16
        %v3145 = vshll.u32 %v2921, 16
        %v3147 = vrot.slane %v3145, 1
        %v3148 = vor.u32 %v3143, %v3147
        %v3251 = vunpack.c.l.b16 %v2922
        %v3252 = vunpack.c.l.b16 %v2923
        %v3253 = vunpack.c.l.b16 %v2924
        %v3254 = vunpack.c.l.b16 %v2925
        %v3255 = vunpack.c.l.b16 %v2926
        %v3256 = vunpack.c.l.b16 %v2927
        %v3257 = vunpack.c.l.b16 %v2928
        %v3258 = vunpack.c.l.b16 %v2929
        %v3259 = vunpack.c.l.b16 %v2930
        %v3260 = vunpack.c.l.b16 %v2931
        %v3261 = vunpack.c.l.b16 %v2932
        %v3262 = vunpack.c.l.b16 %v2933
        %v3263 = vunpack.c.l.b16 %v2934
        %v3264 = vunpack.c.l.b16 %v2935
        %v3265 = vunpack.c.l.b16 %v2936
        %v3266 = vunpack.c.l.b16 %v2937
        %v3267 = vunpack.c.l.b16 %v2938
        %v3268 = vunpack.c.l.b16 %v2939
        %v3269 = vunpack.c.l.b16 %v2940
        %v3270 = vunpack.c.l.b16 %v2941
        %v3271 = vunpack.c.l.b16 %v2942
        %v3272 = vunpack.c.l.b16 %v2943
        %v3273 = vunpack.c.l.b16 %v2944
        %v3274 = vunpack.c.l.b16 %v2945
        %v3275 = vunpack.c.l.b16 %v2946
        %v3276 = vunpack.c.l.b16 %v2947
        %v3277 = vunpack.c.l.b16 %v2948
        %v3278 = vunpack.c.l.b16 %v2949
        %v3279 = vunpack.c.l.b16 %v2950
        %v3280 = vunpack.c.l.b16 %v2951
        %v3281 = vunpack.c.l.b16 %v2952
        %v3282 = vunpack.c.l.b16 %v2953
        %v3283 = vunpack.c.l.b16 %v2954
        %v3284 = vunpack.c.l.b16 %v2955
        %v3285 = vunpack.c.l.b16 %v2956
        %v3286 = vunpack.c.l.b16 %v2957
        %v3287 = vunpack.c.l.b16 %v2958
        %v3288 = vunpack.c.l.b16 %v2959
        %v3289 = vunpack.c.l.b16 %v2960
        %v3290 = vunpack.c.l.b16 %v2961
        %v3291 = vunpack.c.l.b16 %v2962
        %v3292 = vunpack.c.l.b16 %v2963
        %v3293 = vunpack.c.l.b16 %v2964
        %v3294 = vunpack.c.l.b16 %v2965
        %v3295 = vunpack.c.l.b16 %v2966
        %v3296 = vunpack.c.l.b16 %v2967
        %v3297 = vunpack.c.l.b16 %v2968
        %v3298 = vunpack.c.l.b16 %v2969
        %v3299 = vunpack.c.l.b16 %v2970
        %v3300 = vunpack.c.l.b16 %v2971
        %v3301 = vunpack.c.l.b16 %v2972
        %v3302 = vunpack.c.l.b16 %v2973
        %v3303 = vunpack.c.l.b16 %v2974
        %v3304 = vunpack.c.l.b16 %v2975
        %v3305 = vunpack.c.l.b16 %v2976
        %v3306 = vunpack.c.l.b16 %v2977
        %v3307 = vunpack.c.l.b16 %v2978
        %v3308 = vunpack.c.l.b16 %v2979
        %v3309 = vunpack.c.l.b16 %v2980
        %v3310 = vunpack.c.l.b16 %v2981
        %v3311 = vunpack.c.l.b16 %v2982
        %v3312 = vunpack.c.l.b16 %v2983
        %v3313 = vunpack.c.l.b16 %v2984
        %v3314 = vunpack.c.l.b16 %v2985
        %v3315 = vunpack.c.l.b16 %v2986
        %v3316 = vunpack.c.l.b16 %v2987
        %v3317 = vunpack.c.l.b16 %v2988
        %v3318 = vunpack.c.l.b16 %v2989
        %v3319 = vunpack.c.l.b16 %v2990
        %v3320 = vunpack.c.l.b16 %v2991
        %v3321 = vunpack.c.l.b16 %v2992
        %v3322 = vunpack.c.l.b16 %v2993
        %v3323 = vunpack.c.l.b16 %v2994
        %v3324 = vunpack.c.l.b16 %v2995
        %v3325 = vunpack.c.l.b16 %v2996
        %v3326 = vunpack.c.l.b16 %v2997
        %v3327 = vunpack.c.l.b16 %v2998
        %v3328 = vunpack.c.l.b16 %v2999
        %v3329 = vunpack.c.l.b16 %v3000
        %v3330 = vunpack.c.l.b16 %v3001
        %v3331 = vunpack.c.l.b16 %v3002
        %v3332 = vunpack.c.l.b16 %v3003
        %v3333 = vunpack.c.l.b16 %v3004
        %v3334 = vunpack.c.l.b16 %v3005
        %v3335 = vunpack.c.l.b16 %v3006
        %v3336 = vunpack.c.l.b16 %v3007
        %v3337 = vunpack.c.l.b16 %v3008
        %v3338 = vunpack.c.l.b16 %v3009
        %v3339 = vunpack.c.l.b16 %v3010
        %v3340 = vunpack.c.l.b16 %v3011
        %v3341 = vunpack.c.l.b16 %v3012
        %v3342 = vunpack.c.l.b16 %v3013
        %v3343 = vunpack.c.l.b16 %v3014
        %v3344 = vunpack.c.l.b16 %v3015
        %v3345 = vunpack.c.l.b16 %v3016
        %v3346 = vunpack.c.l.b16 %v3017
        %v3347 = vpack.c.b16 %v3252, %v3251
        %v3348 = vpack.c.b16 %v3254, %v3253
        %v3349 = vpack.c.b16 %v3256, %v3255
        %v3350 = vpack.c.b16 %v3258, %v3257
        %v3351 = vpack.c.b16 %v3260, %v3259
        %v3352 = vpack.c.b16 %v3262, %v3261
        %v3353 = vpack.c.b16 %v3264, %v3263
        %v3354 = vpack.c.b16 %v3266, %v3265
        %v3355 = vpack.c.b16 %v3268, %v3267
        %v3356 = vpack.c.b16 %v3270, %v3269
        %v3357 = vpack.c.b16 %v3272, %v3271
        %v3358 = vpack.c.b16 %v3274, %v3273
        %v3359 = vpack.c.b16 %v3276, %v3275
        %v3360 = vpack.c.b16 %v3278, %v3277
        %v3361 = vpack.c.b16 %v3280, %v3279
        %v3362 = vpack.c.b16 %v3282, %v3281
        %v3363 = vpack.c.b16 %v3284, %v3283
        %v3364 = vpack.c.b16 %v3286, %v3285
        %v3365 = vpack.c.b16 %v3288, %v3287
        %v3366 = vpack.c.b16 %v3290, %v3289
        %v3367 = vpack.c.b16 %v3292, %v3291
        %v3368 = vpack.c.b16 %v3294, %v3293
        %v3369 = vpack.c.b16 %v3296, %v3295
        %v3370 = vpack.c.b16 %v3298, %v3297
        %v3371 = vpack.c.b16 %v3300, %v3299
        %v3372 = vpack.c.b16 %v3302, %v3301
        %v3373 = vpack.c.b16 %v3304, %v3303
        %v3374 = vpack.c.b16 %v3306, %v3305
        %v3375 = vpack.c.b16 %v3308, %v3307
        %v3376 = vpack.c.b16 %v3310, %v3309
        %v3377 = vpack.c.b16 %v3312, %v3311
        %v3378 = vpack.c.b16 %v3314, %v3313
        %v3379 = vpack.c.b16 %v3316, %v3315
        %v3380 = vpack.c.b16 %v3318, %v3317
        %v3381 = vpack.c.b16 %v3320, %v3319
        %v3382 = vpack.c.b16 %v3322, %v3321
        %v3383 = vpack.c.b16 %v3324, %v3323
        %v3384 = vpack.c.b16 %v3326, %v3325
        %v3385 = vpack.c.b16 %v3328, %v3327
        %v3386 = vpack.c.b16 %v3330, %v3329
        %v3387 = vpack.c.b16 %v3332, %v3331
        %v3388 = vpack.c.b16 %v3334, %v3333
        %v3389 = vpack.c.b16 %v3336, %v3335
        %v3390 = vpack.c.b16 %v3338, %v3337
        %v3391 = vpack.c.b16 %v3340, %v3339
        %v3392 = vpack.c.b16 %v3342, %v3341
        %v3393 = vpack.c.b16 %v3344, %v3343
        %v3394 = vpack.c.b16 %v3346, %v3345
        %3443 = vmatprep.subr.bf16.mxu0 0
        %3444 = vmatpush1.bf16.msra.mxu0 %v3347
        %3445 = vmatprep.subr.bf16.mxu0 0
        %3446 = vmatpush1.bf16.msra.mxu0 %v3348
        %3447 = vmatprep.subr.bf16.mxu0 0
        %3448 = vmatpush1.bf16.msra.mxu0 %v3349
        %3449 = vmatprep.subr.bf16.mxu0 0
        %3450 = vmatpush1.bf16.msra.mxu0 %v3350
        %3451 = vmatprep.subr.bf16.mxu0 0
        %3452 = vmatpush1.bf16.msra.mxu0 %v3351
        %3453 = vmatprep.subr.bf16.mxu0 0
        %3454 = vmatpush1.bf16.msra.mxu0 %v3352
        %3455 = vmatprep.subr.bf16.mxu0 0
        %3456 = vmatpush1.bf16.msra.mxu0 %v3353
        %3457 = vmatprep.subr.bf16.mxu0 0
        %3458 = vmatpush1.bf16.msra.mxu0 %v3354
        %3459 = vmatprep.subr.bf16.mxu0 0
        %3460 = vmatpush1.bf16.msra.mxu0 %v3355
        %3461 = vmatprep.subr.bf16.mxu0 0
        %3462 = vmatpush1.bf16.msra.mxu0 %v3356
        %3463 = vmatprep.subr.bf16.mxu0 0
        %3464 = vmatpush1.bf16.msra.mxu0 %v3357
        %3465 = vmatprep.subr.bf16.mxu0 0
        %3466 = vmatpush1.bf16.msra.mxu0 %v3358
        %3467 = vmatprep.subr.bf16.mxu0 0
        %3468 = vmatpush1.bf16.msra.mxu0 %v3359
        %3469 = vmatprep.subr.bf16.mxu0 0
        %3470 = vmatpush1.bf16.msra.mxu0 %v3360
        %3471 = vmatprep.subr.bf16.mxu0 0
        %3472 = vmatpush1.bf16.msra.mxu0 %v3361
        %3473 = vmatprep.subr.bf16.mxu0 0
        %3474 = vmatpush1.bf16.msra.mxu0 %v3362
        %3475 = vmatprep.mubr.bf16.mxu0 %v3120
        %3476 = vmatmul.mubr.bf16.gmra.mrb[0].mxu0 %v3113
        %v3477 = vpop.f32.mrb[0].mxu0
        %v3478 = vadd.f32 %v3105, %v3477
        %v3479 = vpop.f32.mrb[0].mxu0
        %v3480 = vpop.f32.mrb[0].mxu0
        %v3481 = vpop.f32.mrb[0].mxu0
        %3482 = vdwg.mxu0
        %3483 = vmatprep.subr.bf16.mxu0 0
        %3484 = vmatpush1.bf16.msra.mxu0 %v3363
        %3485 = vmatprep.subr.bf16.mxu0 0
        %3486 = vmatpush1.bf16.msra.mxu0 %v3364
        %3487 = vmatprep.subr.bf16.mxu0 0
        %3488 = vmatpush1.bf16.msra.mxu0 %v3365
        %3489 = vmatprep.subr.bf16.mxu0 0
        %3490 = vmatpush1.bf16.msra.mxu0 %v3366
        %3491 = vmatprep.subr.bf16.mxu0 0
        %3492 = vmatpush1.bf16.msra.mxu0 %v3367
        %3493 = vmatprep.subr.bf16.mxu0 0
        %3494 = vmatpush1.bf16.msra.mxu0 %v3368
        %3495 = vmatprep.subr.bf16.mxu0 0
        %3496 = vmatpush1.bf16.msra.mxu0 %v3369
        %3497 = vmatprep.subr.bf16.mxu0 0
        %3498 = vmatpush1.bf16.msra.mxu0 %v3370
        %3499 = vmatprep.subr.bf16.mxu0 0
        %3500 = vmatpush1.bf16.msra.mxu0 %v3371
        %3501 = vmatprep.subr.bf16.mxu0 0
        %3502 = vmatpush1.bf16.msra.mxu0 %v3372
        %3503 = vmatprep.subr.bf16.mxu0 0
        %3504 = vmatpush1.bf16.msra.mxu0 %v3373
        %3505 = vmatprep.subr.bf16.mxu0 0
        %3506 = vmatpush1.bf16.msra.mxu0 %v3374
        %3507 = vmatprep.subr.bf16.mxu0 0
        %3508 = vmatpush1.bf16.msra.mxu0 %v3375
        %3509 = vmatprep.subr.bf16.mxu0 0
        %3510 = vmatpush1.bf16.msra.mxu0 %v3376
        %3511 = vmatprep.subr.bf16.mxu0 0
        %3512 = vmatpush1.bf16.msra.mxu0 %v3377
        %3513 = vmatprep.subr.bf16.mxu0 0
        %3514 = vmatpush1.bf16.msra.mxu0 %v3378
        %3515 = vmatprep.mubr.bf16.mxu0 %v3134
        %3516 = vmatmul.mubr.bf16.gmra.mrb[0].mxu0 %v3127
        %v3517 = vpop.f32.mrb[0].mxu0
        %v3518 = vadd.f32 %v3478, %v3517
        %v3519 = vpop.f32.mrb[0].mxu0
        %v3520 = vpop.f32.mrb[0].mxu0
        %v3521 = vpop.f32.mrb[0].mxu0
        %3522 = vdwg.mxu0
        %3523 = vmatprep.subr.bf16.mxu0 0
        %3524 = vmatpush1.bf16.msra.mxu0 %v3379
        %3525 = vmatprep.subr.bf16.mxu0 0
        %3526 = vmatpush1.bf16.msra.mxu0 %v3380
        %3527 = vmatprep.subr.bf16.mxu0 0
        %3528 = vmatpush1.bf16.msra.mxu0 %v3381
        %3529 = vmatprep.subr.bf16.mxu0 0
        %3530 = vmatpush1.bf16.msra.mxu0 %v3382
        %3531 = vmatprep.subr.bf16.mxu0 0
        %3532 = vmatpush1.bf16.msra.mxu0 %v3383
        %3533 = vmatprep.subr.bf16.mxu0 0
        %3534 = vmatpush1.bf16.msra.mxu0 %v3384
        %3535 = vmatprep.subr.bf16.mxu0 0
        %3536 = vmatpush1.bf16.msra.mxu0 %v3385
        %3537 = vmatprep.subr.bf16.mxu0 0
        %3538 = vmatpush1.bf16.msra.mxu0 %v3386
        %3539 = vmatprep.subr.bf16.mxu0 0
        %3540 = vmatpush1.bf16.msra.mxu0 %v3387
        %3541 = vmatprep.subr.bf16.mxu0 0
        %3542 = vmatpush1.bf16.msra.mxu0 %v3388
        %3543 = vmatprep.subr.bf16.mxu0 0
        %3544 = vmatpush1.bf16.msra.mxu0 %v3389
        %3545 = vmatprep.subr.bf16.mxu0 0
        %3546 = vmatpush1.bf16.msra.mxu0 %v3390
        %3547 = vmatprep.subr.bf16.mxu0 0
        %3548 = vmatpush1.bf16.msra.mxu0 %v3391
        %3549 = vmatprep.subr.bf16.mxu0 0
        %3550 = vmatpush1.bf16.msra.mxu0 %v3392
        %3551 = vmatprep.subr.bf16.mxu0 0
        %3552 = vmatpush1.bf16.msra.mxu0 %v3393
        %3553 = vmatprep.subr.bf16.mxu0 0
        %3554 = vmatpush1.bf16.msra.mxu0 %v3394
        %3555 = vmatprep.mubr.bf16.mxu0 %v3148
        %3556 = vmatmul.mubr.bf16.gmra.mrb[0].mxu0 %v3141
        %v3557 = vpop.f32.mrb[0].mxu0
        %v3558 = vadd.f32 %v3518, %v3557
        %v3559 = vpop.f32.mrb[0].mxu0
        %v3560 = vpop.f32.mrb[0].mxu0
        %v3561 = vpop.f32.mrb[0].mxu0
        %3562 = vdwg.mxu0
        %v3563 = vsub.f32 %v3558, 0.4
        %v3564 = vmax.f32 %v3563, 0.0
        %3565 = vst [vmem:[%s524] sm:$0xff] %v3564
        %v3567 = vshrl.u32 %v3028, 16
        %v3569 = vshll.u32 %v3028, 16
        %v3571 = vrot.slane %v3569, 1
        %v3572 = vor.u32 %v3567, %v3571
        %v3574 = vshrl.u32 %v3029, 16
        %v3576 = vshll.u32 %v3029, 16
        %v3578 = vrot.slane %v3576, 1
        %v3579 = vor.u32 %v3574, %v3578
        %v3581 = vshrl.u32 %v3030, 16
        %v3583 = vshll.u32 %v3030, 16
        %v3585 = vrot.slane %v3583, 1
        %v3586 = vor.u32 %v3581, %v3585
        %v3588 = vshrl.u32 %v3031, 16
        %v3590 = vshll.u32 %v3031, 16
        %v3592 = vrot.slane %v3590, 1
        %v3593 = vor.u32 %v3588, %v3592
        %v3662 = vunpack.c.l.b16 %v3032
        %v3663 = vunpack.c.l.b16 %v3033
        %v3664 = vunpack.c.l.b16 %v3034
        %v3665 = vunpack.c.l.b16 %v3035
        %v3666 = vunpack.c.l.b16 %v3036
        %v3667 = vunpack.c.l.b16 %v3037
        %v3668 = vunpack.c.l.b16 %v3038
        %v3669 = vunpack.c.l.b16 %v3039
        %v3670 = vunpack.c.l.b16 %v3040
        %v3671 = vunpack.c.l.b16 %v3041
        %v3672 = vunpack.c.l.b16 %v3042
        %v3673 = vunpack.c.l.b16 %v3043
        %v3674 = vunpack.c.l.b16 %v3044
        %v3675 = vunpack.c.l.b16 %v3045
        %v3676 = vunpack.c.l.b16 %v3046
        %v3677 = vunpack.c.l.b16 %v3047
        %v3678 = vunpack.c.l.b16 %v3048
        %v3679 = vunpack.c.l.b16 %v3049
        %v3680 = vunpack.c.l.b16 %v3050
        %v3681 = vunpack.c.l.b16 %v3051
        %v3682 = vunpack.c.l.b16 %v3052
        %v3683 = vunpack.c.l.b16 %v3053
        %v3684 = vunpack.c.l.b16 %v3054
        %v3685 = vunpack.c.l.b16 %v3055
        %v3686 = vunpack.c.l.b16 %v3056
        %v3687 = vunpack.c.l.b16 %v3057
        %v3688 = vunpack.c.l.b16 %v3058
        %v3689 = vunpack.c.l.b16 %v3059
        %v3690 = vunpack.c.l.b16 %v3060
        %v3691 = vunpack.c.l.b16 %v3061
        %v3692 = vunpack.c.l.b16 %v3062
        %v3693 = vunpack.c.l.b16 %v3063
        %v3694 = vunpack.c.l.b16 %v3064
        %v3695 = vunpack.c.l.b16 %v3065
        %v3696 = vunpack.c.l.b16 %v3066
        %v3697 = vunpack.c.l.b16 %v3067
        %v3698 = vunpack.c.l.b16 %v3068
        %v3699 = vunpack.c.l.b16 %v3069
        %v3700 = vunpack.c.l.b16 %v3070
        %v3701 = vunpack.c.l.b16 %v3071
        %v3702 = vunpack.c.l.b16 %v3072
        %v3703 = vunpack.c.l.b16 %v3073
        %v3704 = vunpack.c.l.b16 %v3074
        %v3705 = vunpack.c.l.b16 %v3075
        %v3706 = vunpack.c.l.b16 %v3076
        %v3707 = vunpack.c.l.b16 %v3077
        %v3708 = vunpack.c.l.b16 %v3078
        %v3709 = vunpack.c.l.b16 %v3079
        %v3710 = vunpack.c.l.b16 %v3080
        %v3711 = vunpack.c.l.b16 %v3081
        %v3712 = vunpack.c.l.b16 %v3082
        %v3713 = vunpack.c.l.b16 %v3083
        %v3714 = vunpack.c.l.b16 %v3084
        %v3715 = vunpack.c.l.b16 %v3085
        %v3716 = vunpack.c.l.b16 %v3086
        %v3717 = vunpack.c.l.b16 %v3087
        %v3718 = vunpack.c.l.b16 %v3088
        %v3719 = vunpack.c.l.b16 %v3089
        %v3720 = vunpack.c.l.b16 %v3090
        %v3721 = vunpack.c.l.b16 %v3091
        %v3722 = vunpack.c.l.b16 %v3092
        %v3723 = vunpack.c.l.b16 %v3093
        %v3724 = vunpack.c.l.b16 %v3094
        %v3725 = vunpack.c.l.b16 %v3095
        %v3726 = vpack.c.b16 %v3663, %v3662
        %v3727 = vpack.c.b16 %v3665, %v3664
        %v3728 = vpack.c.b16 %v3667, %v3666
        %v3729 = vpack.c.b16 %v3669, %v3668
        %v3730 = vpack.c.b16 %v3671, %v3670
        %v3731 = vpack.c.b16 %v3673, %v3672
        %v3732 = vpack.c.b16 %v3675, %v3674
        %v3733 = vpack.c.b16 %v3677, %v3676
        %v3734 = vpack.c.b16 %v3679, %v3678
        %v3735 = vpack.c.b16 %v3681, %v3680
        %v3736 = vpack.c.b16 %v3683, %v3682
        %v3737 = vpack.c.b16 %v3685, %v3684
        %v3738 = vpack.c.b16 %v3687, %v3686
        %v3739 = vpack.c.b16 %v3689, %v3688
        %v3740 = vpack.c.b16 %v3691, %v3690
        %v3741 = vpack.c.b16 %v3693, %v3692
        %v3742 = vpack.c.b16 %v3695, %v3694
        %v3743 = vpack.c.b16 %v3697, %v3696
        %v3744 = vpack.c.b16 %v3699, %v3698
        %v3745 = vpack.c.b16 %v3701, %v3700
        %v3746 = vpack.c.b16 %v3703, %v3702
        %v3747 = vpack.c.b16 %v3705, %v3704
        %v3748 = vpack.c.b16 %v3707, %v3706
        %v3749 = vpack.c.b16 %v3709, %v3708
        %v3750 = vpack.c.b16 %v3711, %v3710
        %v3751 = vpack.c.b16 %v3713, %v3712
        %v3752 = vpack.c.b16 %v3715, %v3714
        %v3753 = vpack.c.b16 %v3717, %v3716
        %v3754 = vpack.c.b16 %v3719, %v3718
        %v3755 = vpack.c.b16 %v3721, %v3720
        %v3756 = vpack.c.b16 %v3723, %v3722
        %v3757 = vpack.c.b16 %v3725, %v3724
        %3790 = vmatprep.subr.bf16.mxu0 0
        %3791 = vmatpush1.bf16.msra.mxu0 %v3726
        %3792 = vmatprep.subr.bf16.mxu0 0
        %3793 = vmatpush1.bf16.msra.mxu0 %v3727
        %3794 = vmatprep.subr.bf16.mxu0 0
        %3795 = vmatpush1.bf16.msra.mxu0 %v3728
        %3796 = vmatprep.subr.bf16.mxu0 0
        %3797 = vmatpush1.bf16.msra.mxu0 %v3729
        %3798 = vmatprep.subr.bf16.mxu0 0
        %3799 = vmatpush1.bf16.msra.mxu0 %v3730
        %3800 = vmatprep.subr.bf16.mxu0 0
        %3801 = vmatpush1.bf16.msra.mxu0 %v3731
        %3802 = vmatprep.subr.bf16.mxu0 0
        %3803 = vmatpush1.bf16.msra.mxu0 %v3732
        %3804 = vmatprep.subr.bf16.mxu0 0
        %3805 = vmatpush1.bf16.msra.mxu0 %v3733
        %3806 = vmatprep.subr.bf16.mxu0 0
        %3807 = vmatpush1.bf16.msra.mxu0 %v3734
        %3808 = vmatprep.subr.bf16.mxu0 0
        %3809 = vmatpush1.bf16.msra.mxu0 %v3735
        %3810 = vmatprep.subr.bf16.mxu0 0
        %3811 = vmatpush1.bf16.msra.mxu0 %v3736
        %3812 = vmatprep.subr.bf16.mxu0 0
        %3813 = vmatpush1.bf16.msra.mxu0 %v3737
        %3814 = vmatprep.subr.bf16.mxu0 0
        %3815 = vmatpush1.bf16.msra.mxu0 %v3738
        %3816 = vmatprep.subr.bf16.mxu0 0
        %3817 = vmatpush1.bf16.msra.mxu0 %v3739
        %3818 = vmatprep.subr.bf16.mxu0 0
        %3819 = vmatpush1.bf16.msra.mxu0 %v3740
        %3820 = vmatprep.subr.bf16.mxu0 0
        %3821 = vmatpush1.bf16.msra.mxu0 %v3741
        %3822 = vmatprep.mubr.bf16.mxu0 %v3579
        %3823 = vmatmul.mubr.bf16.gmra.mrb[0].mxu0 %v3572
        %v3824 = vpop.f32.mrb[0].mxu0
        %v3825 = vadd.f32 %v3105, %v3824
        %v3826 = vpop.f32.mrb[0].mxu0
        %v3827 = vpop.f32.mrb[0].mxu0
        %v3828 = vpop.f32.mrb[0].mxu0
        %3829 = vdwg.mxu0
        %3830 = vmatprep.subr.bf16.mxu0 0
        %3831 = vmatpush1.bf16.msra.mxu0 %v3742
        %3832 = vmatprep.subr.bf16.mxu0 0
        %3833 = vmatpush1.bf16.msra.mxu0 %v3743
        %3834 = vmatprep.subr.bf16.mxu0 0
        %3835 = vmatpush1.bf16.msra.mxu0 %v3744
        %3836 = vmatprep.subr.bf16.mxu0 0
        %3837 = vmatpush1.bf16.msra.mxu0 %v3745
        %3838 = vmatprep.subr.bf16.mxu0 0
        %3839 = vmatpush1.bf16.msra.mxu0 %v3746
        %3840 = vmatprep.subr.bf16.mxu0 0
        %3841 = vmatpush1.bf16.msra.mxu0 %v3747
        %3842 = vmatprep.subr.bf16.mxu0 0
        %3843 = vmatpush1.bf16.msra.mxu0 %v3748
        %3844 = vmatprep.subr.bf16.mxu0 0
        %3845 = vmatpush1.bf16.msra.mxu0 %v3749
        %3846 = vmatprep.subr.bf16.mxu0 0
        %3847 = vmatpush1.bf16.msra.mxu0 %v3750
        %3848 = vmatprep.subr.bf16.mxu0 0
        %3849 = vmatpush1.bf16.msra.mxu0 %v3751
        %3850 = vmatprep.subr.bf16.mxu0 0
        %3851 = vmatpush1.bf16.msra.mxu0 %v3752
        %3852 = vmatprep.subr.bf16.mxu0 0
        %3853 = vmatpush1.bf16.msra.mxu0 %v3753
        %3854 = vmatprep.subr.bf16.mxu0 0
        %3855 = vmatpush1.bf16.msra.mxu0 %v3754
        %3856 = vmatprep.subr.bf16.mxu0 0
        %3857 = vmatpush1.bf16.msra.mxu0 %v3755
        %3858 = vmatprep.subr.bf16.mxu0 0
        %3859 = vmatpush1.bf16.msra.mxu0 %v3756
        %3860 = vmatprep.subr.bf16.mxu0 0
        %3861 = vmatpush1.bf16.msra.mxu0 %v3757
        %3862 = vmatprep.mubr.bf16.mxu0 %v3593
        %3863 = vmatmul.mubr.bf16.gmra.mrb[0].mxu0 %v3586
        %v3864 = vpop.f32.mrb[0].mxu0
        %v3865 = vadd.f32 %v3825, %v3864
        %v3866 = vpop.f32.mrb[0].mxu0
        %v3867 = vpop.f32.mrb[0].mxu0
        %v3868 = vpop.f32.mrb[0].mxu0
        %3869 = vdwg.mxu0
        %v3870 = vsub.f32 %v3865, 0.4
        %v3871 = vmax.f32 %v3870, 0.0
        %3872 = vst [vmem:[%s524 + $0x8] sm:$0x7f] %v3871
        %v3874 = vshrl.u32 %v3098, 16
        %v3876 = vshll.u32 %v3098, 16
        %v3878 = vrot.slane %v3876, 1
        %v3879 = vor.u32 %v3874, %v3878
        %v3881 = vshrl.u32 %v3099, 16
        %v3883 = vshll.u32 %v3099, 16
        %v3885 = vrot.slane %v3883, 1
        %v3886 = vor.u32 %v3881, %v3885
        %3889 = vmatprep.subr.bf16.mxu0 0
        %3890 = vmatpush1.bf16.msra.mxu0 %v3347
        %3891 = vmatprep.subr.bf16.mxu0 0
        %3892 = vmatpush1.bf16.msra.mxu0 %v3348
        %3893 = vmatprep.subr.bf16.mxu0 0
        %3894 = vmatpush1.bf16.msra.mxu0 %v3349
        %3895 = vmatprep.subr.bf16.mxu0 0
        %3896 = vmatpush1.bf16.msra.mxu0 %v3350
        %3897 = vmatprep.subr.bf16.mxu0 0
        %3898 = vmatpush1.bf16.msra.mxu0 %v3351
        %3899 = vmatprep.subr.bf16.mxu0 0
        %3900 = vmatpush1.bf16.msra.mxu0 %v3352
        %3901 = vmatprep.subr.bf16.mxu0 0
        %3902 = vmatpush1.bf16.msra.mxu0 %v3353
        %3903 = vmatprep.subr.bf16.mxu0 0
        %3904 = vmatpush1.bf16.msra.mxu0 %v3354
        %3905 = vmatprep.subr.bf16.mxu0 0
        %3906 = vmatpush1.bf16.msra.mxu0 %v3355
        %3907 = vmatprep.subr.bf16.mxu0 0
        %3908 = vmatpush1.bf16.msra.mxu0 %v3356
        %3909 = vmatprep.subr.bf16.mxu0 0
        %3910 = vmatpush1.bf16.msra.mxu0 %v3357
        %3911 = vmatprep.subr.bf16.mxu0 0
        %3912 = vmatpush1.bf16.msra.mxu0 %v3358
        %3913 = vmatprep.subr.bf16.mxu0 0
        %3914 = vmatpush1.bf16.msra.mxu0 %v3359
        %3915 = vmatprep.subr.bf16.mxu0 0
        %3916 = vmatpush1.bf16.msra.mxu0 %v3360
        %3917 = vmatprep.subr.bf16.mxu0 0
        %3918 = vmatpush1.bf16.msra.mxu0 %v3361
        %3919 = vmatprep.subr.bf16.mxu0 0
        %3920 = vmatpush1.bf16.msra.mxu0 %v3362
        %3921 = vmatprep.mubr.bf16.mxu0 %v3886
        %3922 = vmatmul.mubr.bf16.gmra.mrb[0].mxu0 %v3879
        %v3923 = vpop.f32.mrb[0].mxu0
        %v3924 = vadd.f32 %v3105, %v3923
        %v3925 = vpop.f32.mrb[0].mxu0
        %v3926 = vpop.f32.mrb[0].mxu0
        %v3927 = vpop.f32.mrb[0].mxu0
        %3928 = vdwg.mxu0
        %3929 = vmatprep.subr.bf16.mxu0 0
        %3930 = vmatpush1.bf16.msra.mxu0 %v3363
        %3931 = vmatprep.subr.bf16.mxu0 0
        %3932 = vmatpush1.bf16.msra.mxu0 %v3364
        %3933 = vmatprep.subr.bf16.mxu0 0
        %3934 = vmatpush1.bf16.msra.mxu0 %v3365
        %3935 = vmatprep.subr.bf16.mxu0 0
        %3936 = vmatpush1.bf16.msra.mxu0 %v3366
        %3937 = vmatprep.subr.bf16.mxu0 0
        %3938 = vmatpush1.bf16.msra.mxu0 %v3367
        %3939 = vmatprep.subr.bf16.mxu0 0
        %3940 = vmatpush1.bf16.msra.mxu0 %v3368
        %3941 = vmatprep.subr.bf16.mxu0 0
        %3942 = vmatpush1.bf16.msra.mxu0 %v3369
        %3943 = vmatprep.subr.bf16.mxu0 0
        %3944 = vmatpush1.bf16.msra.mxu0 %v3370
        %3945 = vmatprep.subr.bf16.mxu0 0
        %3946 = vmatpush1.bf16.msra.mxu0 %v3371
        %3947 = vmatprep.subr.bf16.mxu0 0
        %3948 = vmatpush1.bf16.msra.mxu0 %v3372
        %3949 = vmatprep.subr.bf16.mxu0 0
        %3950 = vmatpush1.bf16.msra.mxu0 %v3373
        %3951 = vmatprep.subr.bf16.mxu0 0
        %3952 = vmatpush1.bf16.msra.mxu0 %v3374
        %3953 = vmatprep.subr.bf16.mxu0 0
        %3954 = vmatpush1.bf16.msra.mxu0 %v3375
        %3955 = vmatprep.subr.bf16.mxu0 0
        %3956 = vmatpush1.bf16.msra.mxu0 %v3376
        %3957 = vmatprep.subr.bf16.mxu0 0
        %3958 = vmatpush1.bf16.msra.mxu0 %v3377
        %3959 = vmatprep.subr.bf16.mxu0 0
        %3960 = vmatpush1.bf16.msra.mxu0 %v3378
        %3961 = vmatprep.mubr.bf16.mxu0 %v3579
        %3962 = vmatmul.mubr.bf16.gmra.mrb[0].mxu0 %v3572
        %v3963 = vpop.f32.mrb[0].mxu0
        %v3964 = vadd.f32 %v3924, %v3963
        %v3965 = vpop.f32.mrb[0].mxu0
        %v3966 = vpop.f32.mrb[0].mxu0
        %v3967 = vpop.f32.mrb[0].mxu0
        %3968 = vdwg.mxu0
        %3969 = vmatprep.subr.bf16.mxu0 0
        %3970 = vmatpush1.bf16.msra.mxu0 %v3379
        %3971 = vmatprep.subr.bf16.mxu0 0
        %3972 = vmatpush1.bf16.msra.mxu0 %v3380
        %3973 = vmatprep.subr.bf16.mxu0 0
        %3974 = vmatpush1.bf16.msra.mxu0 %v3381
        %3975 = vmatprep.subr.bf16.mxu0 0
        %3976 = vmatpush1.bf16.msra.mxu0 %v3382
        %3977 = vmatprep.subr.bf16.mxu0 0
        %3978 = vmatpush1.bf16.msra.mxu0 %v3383
        %3979 = vmatprep.subr.bf16.mxu0 0
        %3980 = vmatpush1.bf16.msra.mxu0 %v3384
        %3981 = vmatprep.subr.bf16.mxu0 0
        %3982 = vmatpush1.bf16.msra.mxu0 %v3385
        %3983 = vmatprep.subr.bf16.mxu0 0
        %3984 = vmatpush1.bf16.msra.mxu0 %v3386
        %3985 = vmatprep.subr.bf16.mxu0 0
        %3986 = vmatpush1.bf16.msra.mxu0 %v3387
        %3987 = vmatprep.subr.bf16.mxu0 0
        %3988 = vmatpush1.bf16.msra.mxu0 %v3388
        %3989 = vmatprep.subr.bf16.mxu0 0
        %3990 = vmatpush1.bf16.msra.mxu0 %v3389
        %3991 = vmatprep.subr.bf16.mxu0 0
        %3992 = vmatpush1.bf16.msra.mxu0 %v3390
        %3993 = vmatprep.subr.bf16.mxu0 0
        %3994 = vmatpush1.bf16.msra.mxu0 %v3391
        %3995 = vmatprep.subr.bf16.mxu0 0
        %3996 = vmatpush1.bf16.msra.mxu0 %v3392
        %3997 = vmatprep.subr.bf16.mxu0 0
        %3998 = vmatpush1.bf16.msra.mxu0 %v3393
        %3999 = vmatprep.subr.bf16.mxu0 0
        %4000 = vmatpush1.bf16.msra.mxu0 %v3394
        %4001 = vmatprep.mubr.bf16.mxu0 %v3593
        %4002 = vmatmul.mubr.bf16.gmra.mrb[0].mxu0 %v3586
        %v4003 = vpop.f32.mrb[0].mxu0
        %v4004 = vadd.f32 %v3964, %v4003
        %v4005 = vpop.f32.mrb[0].mxu0
        %v4006 = vpop.f32.mrb[0].mxu0
        %v4007 = vpop.f32.mrb[0].mxu0
        %4008 = vdwg.mxu0
        %v4009 = vsub.f32 %v4004, 0.4
        %v4010 = vmax.f32 %v4009, 0.0
        %4011 = vst [vmem:[%s524 + $0xf] sm:$0x7f] %v4010
        %4012 = vmatprep.subr.bf16.mxu0 0
        %4013 = vmatpush1.bf16.msra.mxu0 %v3726
        %4014 = vmatprep.subr.bf16.mxu0 0
        %4015 = vmatpush1.bf16.msra.mxu0 %v3727
        %4016 = vmatprep.subr.bf16.mxu0 0
        %4017 = vmatpush1.bf16.msra.mxu0 %v3728
        %4018 = vmatprep.subr.bf16.mxu0 0
        %4019 = vmatpush1.bf16.msra.mxu0 %v3729
        %4020 = vmatprep.subr.bf16.mxu0 0
        %4021 = vmatpush1.bf16.msra.mxu0 %v3730
        %4022 = vmatprep.subr.bf16.mxu0 0
        %4023 = vmatpush1.bf16.msra.mxu0 %v3731
        %4024 = vmatprep.subr.bf16.mxu0 0
        %4025 = vmatpush1.bf16.msra.mxu0 %v3732
        %4026 = vmatprep.subr.bf16.mxu0 0
        %4027 = vmatpush1.bf16.msra.mxu0 %v3733
        %4028 = vmatprep.subr.bf16.mxu0 0
        %4029 = vmatpush1.bf16.msra.mxu0 %v3734
        %4030 = vmatprep.subr.bf16.mxu0 0
        %4031 = vmatpush1.bf16.msra.mxu0 %v3735
        %4032 = vmatprep.subr.bf16.mxu0 0
        %4033 = vmatpush1.bf16.msra.mxu0 %v3736
        %4034 = vmatprep.subr.bf16.mxu0 0
        %4035 = vmatpush1.bf16.msra.mxu0 %v3737
        %4036 = vmatprep.subr.bf16.mxu0 0
        %4037 = vmatpush1.bf16.msra.mxu0 %v3738
        %4038 = vmatprep.subr.bf16.mxu0 0
        %4039 = vmatpush1.bf16.msra.mxu0 %v3739
        %4040 = vmatprep.subr.bf16.mxu0 0
        %4041 = vmatpush1.bf16.msra.mxu0 %v3740
        %4042 = vmatprep.subr.bf16.mxu0 0
        %4043 = vmatpush1.bf16.msra.mxu0 %v3741
        %4044 = vmatprep.mubr.bf16.mxu0 %v3886
        %4045 = vmatmul.mubr.bf16.gmra.mrb[0].mxu0 %v3879
        %v4046 = vpop.f32.mrb[0].mxu0
        %v4047 = vadd.f32 %v3105, %v4046
        %v4048 = vpop.f32.mrb[0].mxu0
        %v4049 = vpop.f32.mrb[0].mxu0
        %v4050 = vpop.f32.mrb[0].mxu0
        %4051 = vdwg.mxu0
        %4052 = vmatprep.subr.bf16.mxu0 0
        %4053 = vmatpush1.bf16.msra.mxu0 %v3742
        %4054 = vmatprep.subr.bf16.mxu0 0
        %4055 = vmatpush1.bf16.msra.mxu0 %v3743
        %4056 = vmatprep.subr.bf16.mxu0 0
        %4057 = vmatpush1.bf16.msra.mxu0 %v3744
        %4058 = vmatprep.subr.bf16.mxu0 0
        %4059 = vmatpush1.bf16.msra.mxu0 %v3745
        %4060 = vmatprep.subr.bf16.mxu0 0
        %4061 = vmatpush1.bf16.msra.mxu0 %v3746
        %4062 = vmatprep.subr.bf16.mxu0 0
        %4063 = vmatpush1.bf16.msra.mxu0 %v3747
        %4064 = vmatprep.subr.bf16.mxu0 0
        %4065 = vmatpush1.bf16.msra.mxu0 %v3748
        %4066 = vmatprep.subr.bf16.mxu0 0
        %4067 = vmatpush1.bf16.msra.mxu0 %v3749
        %4068 = vmatprep.subr.bf16.mxu0 0
        %4069 = vmatpush1.bf16.msra.mxu0 %v3750
        %4070 = vmatprep.subr.bf16.mxu0 0
        %4071 = vmatpush1.bf16.msra.mxu0 %v3751
        %4072 = vmatprep.subr.bf16.mxu0 0
        %4073 = vmatpush1.bf16.msra.mxu0 %v3752
        %4074 = vmatprep.subr.bf16.mxu0 0
        %4075 = vmatpush1.bf16.msra.mxu0 %v3753
        %4076 = vmatprep.subr.bf16.mxu0 0
        %4077 = vmatpush1.bf16.msra.mxu0 %v3754
        %4078 = vmatprep.subr.bf16.mxu0 0
        %4079 = vmatpush1.bf16.msra.mxu0 %v3755
        %4080 = vmatprep.subr.bf16.mxu0 0
        %4081 = vmatpush1.bf16.msra.mxu0 %v3756
        %4082 = vmatprep.subr.bf16.mxu0 0
        %4083 = vmatpush1.bf16.msra.mxu0 %v3757
        %4084 = vmatprep.mubr.bf16.mxu0 %v3579
        %4085 = vmatmul.mubr.bf16.gmra.mrb[0].mxu0 %v3572
        %v4086 = vpop.f32.mrb[0].mxu0
        %v4087 = vadd.f32 %v4047, %v4086
        %v4088 = vpop.f32.mrb[0].mxu0
        %v4089 = vpop.f32.mrb[0].mxu0
        %v4090 = vpop.f32.mrb[0].mxu0
        %4091 = vdwg.mxu0
        %v4092 = vsub.f32 %v4087, 0.4
        %v4093 = vmax.f32 %v4092, 0.0
        %4094 = vst [vmem:[%s524 + $0x16] sm:$0x7f] %v4093
        %p4095 = scmp.lt.s32.totalorder %s28, 1
        %s4096 = scalar_select %p4095, %s28, 1
        %s4097 = smul.addr %s4096, 4
        %s4098 = smul.addr %s4097, 8
        %s4099 = scalar_lea.vmem %s11, %s4098
        // Predicated region
        $region105: #{model_forward.1} parent=63 // pred_check
          %p4100 = pneg %p282
        $region106: #{model_forward.1} parent=63 // pred_check_branch
          %4102 = sbr.rel (%p4100) target = $region108
        $region107: #{model_forward.1} parent=63 // pred_region
          _
        $region108: #{model_forward.1} parent=63 // pred_fallthru
          _
      $region64: #{model_forward.1} parent=5 // pred_fallthru
        _
      %p4103 = scmp.le.s32.totalorder 2, %s23
      // Predicated region
      $region109: #{model_forward.1} parent=5 // pred_check
        %p4104 = pneg %p4103
      $region110: #{model_forward.1} parent=5 // pred_check_branch
        %4106 = sbr.rel (%p4104) target = $region112
      $region111: #{model_forward.1} parent=5 // pred_region
        %s4107 = ssub.s32 %s23, 2
        // Predicated region
        $region113: #{model_forward.1} parent=111 // pred_check
          %p4108 = pneg %p288
        $region114: #{model_forward.1} parent=111 // pred_check_branch
          %4110 = sbr.rel (%p4108) target = $region116
        $region115: #{model_forward.1} parent=111 // pred_region
          %p4111 = scmp.lt.s32.totalorder %s29, 1
          %s4112 = scalar_select %p4111, %s29, 1
          %s4113 = smul.addr %s4112, 4
          %s4114 = smul.addr %s4113, 8
          %s4115 = scalar_lea.vmem %s11, %s4114
        $region116: #{model_forward.1} parent=111 // pred_fallthru
          _
      $region112: #{model_forward.1} parent=5 // pred_fallthru
        _
    $region6: #{model_forward.1} parent=1 // loop_footer
      %s27 = sadd.s32 1, %s23
    $region7: #{model_forward.1} parent=1 // loop_footer_branch
      %22 = sbr.rel target = $region3
    $region8: #{model_forward.1} parent=1 // loop_exit
      _
    %4116 = vsyncpa [#allocation6], 1
    %s4117 = scalar_lea.sflag [#allocation6], 1
    %4118 = vsyncpa %s4117, 1
    %4119 = vsyncpa [#allocation8], 1
    %4120 = vsyncpa [#allocation11], 1
    %4121 = vsyncpa [#allocation14], 1
    %4122 = vsyncpa [#allocation17], 1
    %4123 = vsyncpa [#allocation20], 1

</llo_original>
